<compile_context>
chip_gen: v5e
topology: v5e:2x2
jax: 0.10.0
libtpu: 0.0.40
codegen_flags: <defaults>
</compile_context>

<pallas_src>
import functools

import jax
import jax.numpy as jnp
import numpy as np
from jax.experimental import pallas as pl
from jax.experimental.pallas import tpu as pltpu

# Constants implied by the module (ANM6Easy: 6 action vars, 18 state vars).
NB_STATE_VAR = 18
NB_ACTION_VAR = 6
NB_DISCRETE_STEPS = 500
HIDDEN = 512
DPAD = 512          # NB_DISCRETE_STEPS padded to a multiple of 128 lanes
NEG_BIG = -1e30     # f32 bias for padded logits -> exp() == 0 under softmax


def _rf_discrete_kernel(x_ref, w1_ref, b1_ref, w2_ref, b2_ref, o_ref):
    # x_ref : (1, S)        f32
    # w1_ref: (S, H)        f32
    # b1_ref: (1, H)        f32
    # w2_ref: (H, A*DPAD)   bf16   (right-multiply layout, pad cols are 0)
    # b2_ref: (A, DPAD)     f32    (pad cols are NEG_BIG)
    # o_ref : (A, DPAD)     f32
    # lin1 + ReLU (tiny: 18x512).  bf16 inputs, f32 MXU accumulation.
    h = jnp.dot(x_ref[...].astype(jnp.bfloat16),
                w1_ref[...].astype(jnp.bfloat16),
                preferred_element_type=jnp.float32) + b1_ref[...]
    h = jnp.maximum(h, 0.0).astype(jnp.bfloat16)                      # (1, H)

    # lin2: one fused MXU pass over all 6 action heads.
    logits = jnp.dot(h, w2_ref[...], preferred_element_type=jnp.float32)  # (1, A*DPAD)

    # Stage the 6 heads onto separate sublanes of the output block (cheap,
    # static VMEM stores), then run ONE vectorized softmax over all rows.
    for a in range(NB_ACTION_VAR):
        o_ref[a:a + 1, :] = logits[:, a * DPAD:(a + 1) * DPAD]

    y = o_ref[...] + b2_ref[...]                                      # (A, DPAD) f32
    m = jnp.max(y, axis=-1, keepdims=True)                            # pad cols never win
    e = jnp.exp(y - m)                                                # pads -> exactly 0
    denom = jnp.sum(e, axis=-1, keepdims=True)
    o_ref[...] = e * pl.reciprocal(denom, approx=False)               # single full-block store


def prepare_params(w1, b1, w2, b2):
    """One-time re-layout of PyTorch-layout params into kernel layout.

    w1: (H, S), b1: (H,), w2: (A*D, H), b2: (A*D,).
    Returns (w1_t f32 (S, H), b1_row f32 (1, H),
             w2_slab bf16 (H, A*DPAD), b2_slab f32 (A, DPAD)).
    """
    S, H, A, D = NB_STATE_VAR, HIDDEN, NB_ACTION_VAR, NB_DISCRETE_STEPS
    w1_t = jnp.asarray(w1, jnp.float32).T                                    # (S, H)
    b1_row = jnp.asarray(b1, jnp.float32).reshape(1, H)                      # (1, H)
    w2_r = jnp.asarray(w2, jnp.float32).reshape(A, D, H).transpose(0, 2, 1)  # (A, H, D)
    w2_pad = jnp.pad(w2_r, ((0, 0), (0, 0), (0, DPAD - D)))                  # (A, H, DPAD)
    w2_slab = (w2_pad.transpose(1, 0, 2).reshape(H, A * DPAD)
               .astype(jnp.bfloat16))                                        # (H, A*DPAD)
    b2_slab = jnp.pad(jnp.asarray(b2, jnp.float32).reshape(A, D),
                      ((0, 0), (0, DPAD - D)), constant_values=NEG_BIG)      # (A, DPAD)
    return w1_t, b1_row, w2_slab, b2_slab


@functools.cache
def _vmem_pinning_supported() -> bool:
    """Probe once whether pallas_call inputs can be pinned to VMEM."""
    def probe_kernel(w_ref, o_ref):
        o_ref[...] = w_ref[...] + 1.0

    def probe(w):
        w = pltpu.with_memory_space_constraint(w, pltpu.MemorySpace.VMEM)
        return pl.pallas_call(
            probe_kernel,
            out_shape=jax.ShapeDtypeStruct((8, 128), jnp.float32),
            in_specs=[pl.BlockSpec(memory_space=pltpu.MemorySpace.VMEM)],
            out_specs=pl.BlockSpec(memory_space=pltpu.MemorySpace.VMEM),
        )(w)

    try:
        jax.block_until_ready(jax.jit(probe)(jnp.zeros((8, 128), jnp.float32)))
        return True
    except Exception:
        return False


def _pin_in_vmem(params):
    """Constrain the (static) weight slabs to live in VMEM within this program."""
    return tuple(pltpu.with_memory_space_constraint(p, pltpu.MemorySpace.VMEM)
                 for p in params)


def _forward_block(x, w1_t, b1_row, w2_slab, b2_slab):
    """Core forward: one grid-less pallas_call, all operands whole-in-VMEM."""
    x_row = x.reshape(1, NB_STATE_VAR).astype(jnp.float32)
    probs_pad = pl.pallas_call(
        _rf_discrete_kernel,
        out_shape=jax.ShapeDtypeStruct((NB_ACTION_VAR, DPAD), jnp.float32),
        in_specs=[pl.BlockSpec(memory_space=pltpu.MemorySpace.VMEM)] * 5,
        out_specs=pl.BlockSpec(memory_space=pltpu.MemorySpace.VMEM),
    )(x_row, w1_t, b1_row, w2_slab, b2_slab)
    # Drop the 500->512 lane padding inside the same jit (fused with consumer).
    return probs_pad[:, :NB_DISCRETE_STEPS]


@functools.partial(jax.jit, static_argnames=("pin_weights",))
def rf_discrete_forward(x, w1_t, b1_row, w2_slab, b2_slab, *, pin_weights=False):
    """x: (S,) f32; params from prepare_params(). Returns (A, D) f32 softmax rows."""
    if pin_weights:
        w1_t, b1_row, w2_slab, b2_slab = _pin_in_vmem((w1_t, b1_row, w2_slab, b2_slab))
    return _forward_block(x, w1_t, b1_row, w2_slab, b2_slab)


@functools.partial(jax.jit, static_argnames=("pin_weights",))
def rf_discrete_rollout(xs, w1_t, b1_row, w2_slab, b2_slab, *, pin_weights=False):
    """Run T forwards inside ONE XLA program (how a REINFORCE rollout should run).

    With pin_weights=True the static weight slabs are constrained to VMEM once,
    so the ~3 MiB bf16 W2 is streamed from HBM at most once for the whole
    rollout instead of once per env step.
    """
    params = (w1_t, b1_row, w2_slab, b2_slab)
    if pin_weights:
        params = _pin_in_vmem(params)

    def step(carry, x):
        return carry, _forward_block(x, *params)

    _, outs = jax.lax.scan(step, None, xs)
    return outs


def _init_linear(key, out_f, in_f):
    # Deterministic init mimicking nn.Linear default: U(-1/sqrt(in), 1/sqrt(in)).
    k_w, k_b = jax.random.split(key)
    bound = 1.0 / np.sqrt(in_f)
    w = jax.random.uniform(k_w, (out_f, in_f), jnp.float32, -bound, bound)
    b = jax.random.uniform(k_b, (out_f,), jnp.float32, -bound, bound)
    return w, b


def _reference(x, w1, b1, w2, b2):
    """Numpy reference mirroring the kernel's bf16 quantization of x/W1/h/W2."""
    def bf16_round(a):
        return np.asarray(jnp.asarray(a, jnp.float32).astype(jnp.bfloat16)
                          .astype(jnp.float32))

    x_q, w1_q, w2_q = bf16_round(x), bf16_round(w1), bf16_round(w2)
    b1_np = np.asarray(b1, np.float32)
    b2_np = np.asarray(b2, np.float32)
    h = np.maximum(x_q @ w1_q.T + b1_np, 0.0)
    h_q = bf16_round(h)
    y = (h_q @ w2_q.T + b2_np).reshape(NB_ACTION_VAR, NB_DISCRETE_STEPS)
    y = y - y.max(axis=-1, keepdims=True)
    e = np.exp(y)
    return e / e.sum(axis=-1, keepdims=True)


if __name__ == "__main__":
    key = jax.random.PRNGKey(0)
    k_x, k_l1, k_l2, k_roll = jax.random.split(key, 4)

    x = jax.random.normal(k_x, (NB_STATE_VAR,), jnp.float32)
    w1, b1 = _init_linear(k_l1, HIDDEN, NB_STATE_VAR)
    w2, b2 = _init_linear(k_l2, NB_ACTION_VAR * NB_DISCRETE_STEPS, HIDDEN)

    # One-time parameter re-layout (amortized across the whole rollout).
    params = jax.block_until_ready(prepare_params(w1, b1, w2, b2))

    # Best-effort VMEM residency for the static weights (graceful fallback).
    pin = _vmem_pinning_supported()
    try:
        out = jax.block_until_ready(rf_discrete_forward(x, *params, pin_weights=pin))
    except Exception:
        pin = False
        out = jax.block_until_ready(rf_discrete_forward(x, *params, pin_weights=False))

    ref = _reference(x, w1, b1, w2, b2)
    assert out.shape == (NB_ACTION_VAR, NB_DISCRETE_STEPS)
    np.testing.assert_allclose(np.asarray(out), ref, rtol=5e-3, atol=1e-6)
    # Each row is a probability distribution (f32 softmax, exact reciprocal).
    np.testing.assert_allclose(np.asarray(out).sum(-1),
                               np.ones(NB_ACTION_VAR), rtol=0, atol=1e-5)

    # Multi-step usage: several forwards inside one jitted program so the
    # weight slabs are streamed from HBM at most once for the whole rollout.
    xs = jax.random.normal(k_roll, (4, NB_STATE_VAR), jnp.float32)
    try:
        outs = jax.block_until_ready(rf_discrete_rollout(xs, *params, pin_weights=pin))
    except Exception:
        outs = jax.block_until_ready(rf_discrete_rollout(xs, *params, pin_weights=False))
    assert outs.shape == (4, NB_ACTION_VAR, NB_DISCRETE_STEPS)
    np.testing.assert_allclose(np.asarray(outs[0]),
                               _reference(xs[0], w1, b1, w2, b2),
                               rtol=5e-3, atol=1e-6)
    np.testing.assert_allclose(np.asarray(outs[-1]),
                               _reference(xs[-1], w1, b1, w2, b2),
                               rtol=5e-3, atol=1e-6)

    print("KERNEL_OK")
</pallas_src>

<mosaic_0001>
module attributes {stable_mosaic.version = 11 : i64} {
  func.func @probe_kernel(%arg0: memref<8x128xf32, #tpu.memory_space<vmem>>, %arg1: memref<8x128xf32, #tpu.memory_space<vmem>>) attributes {dimension_semantics = [], scalar_prefetch = 0 : i64, scratch_operands = 0 : i64, tpu.core_type = #tpu.core_type<tc>} {
    %c0 = arith.constant 0 : index
    %c0_0 = arith.constant 0 : index
    %0 = vector.load %arg0[%c0, %c0_0] : memref<8x128xf32, #tpu.memory_space<vmem>>, vector<8x128xf32>
    %cst = arith.constant 1.000000e+00 : f32
    %1 = vector.broadcast %cst : f32 to vector<8x128xf32>
    %2 = arith.addf %0, %1 : vector<8x128xf32>
    %c0_1 = arith.constant 0 : index
    %c0_2 = arith.constant 0 : index
    %3 = vector.load %arg1[%c0_1, %c0_2] : memref<8x128xf32, #tpu.memory_space<vmem>>, vector<8x128xf32>
    tpu.vector_store %arg1[%c0_1, %c0_2], %2 {strides = array<i32>} : memref<8x128xf32, #tpu.memory_space<vmem>>, vector<8x128xf32>,
    return
  }
}

module attributes {stable_mosaic.version = 11 : i64} {
  func.func @_rf_discrete_kernel(%arg0: memref<1x18xf32, #tpu.memory_space<vmem>>, %arg1: memref<18x512xf32, #tpu.memory_space<vmem>>, %arg2: memref<1x512xf32, #tpu.memory_space<vmem>>, %arg3: memref<512x3072xbf16, #tpu.memory_space<vmem>>, %arg4: memref<6x512xf32, #tpu.memory_space<vmem>>, %arg5: memref<6x512xf32, #tpu.memory_space<vmem>>) attributes {dimension_semantics = [], scalar_prefetch = 0 : i64, scratch_operands = 0 : i64, tpu.core_type = #tpu.core_type<tc>} {
    %c0 = arith.constant 0 : index
    %c0_0 = arith.constant 0 : index
    %0 = vector.load %arg0[%c0, %c0_0] : memref<1x18xf32, #tpu.memory_space<vmem>>, vector<1x18xf32>
    %1 = arith.truncf %0 : vector<1x18xf32> to vector<1x18xbf16>
    %c0_1 = arith.constant 0 : index
    %c0_2 = arith.constant 0 : index
    %2 = vector.load %arg1[%c0_1, %c0_2] : memref<18x512xf32, #tpu.memory_space<vmem>>, vector<18x512xf32>
    %3 = arith.truncf %2 : vector<18x512xf32> to vector<18x512xbf16>
    %cst = arith.constant dense<0.000000e+00> : vector<1x512xf32>
    %4 = tpu.matmul %1, %3, %cst {dimension_numbers = #tpu.dot_dimension_numbers<[1], [0], [0], [1], [0, 0, 1, 1], [], []>} : vector<1x18xbf16>, vector<18x512xbf16>, vector<1x512xf32> -> vector<1x512xf32>
    %c0_3 = arith.constant 0 : index
    %c0_4 = arith.constant 0 : index
    %5 = vector.load %arg2[%c0_3, %c0_4] : memref<1x512xf32, #tpu.memory_space<vmem>>, vector<1x512xf32>
    %6 = arith.addf %4, %5 : vector<1x512xf32>
    %cst_5 = arith.constant 0.000000e+00 : f32
    %7 = vector.broadcast %cst_5 : f32 to vector<1x512xf32>
    %8 = arith.maximumf %6, %7 : vector<1x512xf32>
    %9 = arith.truncf %8 : vector<1x512xf32> to vector<1x512xbf16>
    %c0_6 = arith.constant 0 : index
    %c0_7 = arith.constant 0 : index
    %10 = vector.load %arg3[%c0_6, %c0_7] : memref<512x3072xbf16, #tpu.memory_space<vmem>>, vector<512x3072xbf16>
    %cst_8 = arith.constant dense<0.000000e+00> : vector<1x3072xf32>
    %11 = tpu.matmul %9, %10, %cst_8 {dimension_numbers = #tpu.dot_dimension_numbers<[1], [0], [0], [1], [0, 0, 1, 1], [], []>} : vector<1x512xbf16>, vector<512x3072xbf16>, vector<1x3072xf32> -> vector<1x3072xf32>
    %12 = vector.extract_strided_slice %11 {offsets = [0, 0], sizes = [1, 512], strides = [1, 1]} : vector<1x3072xf32> to vector<1x512xf32>
    %c0_9 = arith.constant 0 : index
    %c0_10 = arith.constant 0 : index
    %13 = vector.load %arg5[%c0_9, %c0_10] : memref<6x512xf32, #tpu.memory_space<vmem>>, vector<1x512xf32>
    tpu.vector_store %arg5[%c0_9, %c0_10], %12 {strides = array<i32>} : memref<6x512xf32, #tpu.memory_space<vmem>>, vector<1x512xf32>,
    %14 = vector.extract_strided_slice %11 {offsets = [0, 512], sizes = [1, 512], strides = [1, 1]} : vector<1x3072xf32> to vector<1x512xf32>
    %c1 = arith.constant 1 : index
    %c0_11 = arith.constant 0 : index
    %15 = vector.load %arg5[%c1, %c0_11] : memref<6x512xf32, #tpu.memory_space<vmem>>, vector<1x512xf32>
    tpu.vector_store %arg5[%c1, %c0_11], %14 {strides = array<i32>} : memref<6x512xf32, #tpu.memory_space<vmem>>, vector<1x512xf32>,
    %16 = vector.extract_strided_slice %11 {offsets = [0, 1024], sizes = [1, 512], strides = [1, 1]} : vector<1x3072xf32> to vector<1x512xf32>
    %c2 = arith.constant 2 : index
    %c0_12 = arith.constant 0 : index
    %17 = vector.load %arg5[%c2, %c0_12] : memref<6x512xf32, #tpu.memory_space<vmem>>, vector<1x512xf32>
    tpu.vector_store %arg5[%c2, %c0_12], %16 {strides = array<i32>} : memref<6x512xf32, #tpu.memory_space<vmem>>, vector<1x512xf32>,
    %18 = vector.extract_strided_slice %11 {offsets = [0, 1536], sizes = [1, 512], strides = [1, 1]} : vector<1x3072xf32> to vector<1x512xf32>
    %c3 = arith.constant 3 : index
    %c0_13 = arith.constant 0 : index
    %19 = vector.load %arg5[%c3, %c0_13] : memref<6x512xf32, #tpu.memory_space<vmem>>, vector<1x512xf32>
    tpu.vector_store %arg5[%c3, %c0_13], %18 {strides = array<i32>} : memref<6x512xf32, #tpu.memory_space<vmem>>, vector<1x512xf32>,
    %20 = vector.extract_strided_slice %11 {offsets = [0, 2048], sizes = [1, 512], strides = [1, 1]} : vector<1x3072xf32> to vector<1x512xf32>
    %c4 = arith.constant 4 : index
    %c0_14 = arith.constant 0 : index
    %21 = vector.load %arg5[%c4, %c0_14] : memref<6x512xf32, #tpu.memory_space<vmem>>, vector<1x512xf32>
    tpu.vector_store %arg5[%c4, %c0_14], %20 {strides = array<i32>} : memref<6x512xf32, #tpu.memory_space<vmem>>, vector<1x512xf32>,
    %22 = vector.extract_strided_slice %11 {offsets = [0, 2560], sizes = [1, 512], strides = [1, 1]} : vector<1x3072xf32> to vector<1x512xf32>
    %c5 = arith.constant 5 : index
    %c0_15 = arith.constant 0 : index
    %23 = vector.load %arg5[%c5, %c0_15] : memref<6x512xf32, #tpu.memory_space<vmem>>, vector<1x512xf32>
    tpu.vector_store %arg5[%c5, %c0_15], %22 {strides = array<i32>} : memref<6x512xf32, #tpu.memory_space<vmem>>, vector<1x512xf32>,
    %c0_16 = arith.constant 0 : index
    %c0_17 = arith.constant 0 : index
    %24 = vector.load %arg5[%c0_16, %c0_17] : memref<6x512xf32, #tpu.memory_space<vmem>>, vector<6x512xf32>
    %c0_18 = arith.constant 0 : index
    %c0_19 = arith.constant 0 : index
    %25 = vector.load %arg4[%c0_18, %c0_19] : memref<6x512xf32, #tpu.memory_space<vmem>>, vector<6x512xf32>
    %26 = arith.addf %24, %25 : vector<6x512xf32>
    %cst_20 = arith.constant dense<0xFF800000> : vector<6xf32>
    %27 = vector.multi_reduction <maximumf>, %26, %cst_20 [1] : vector<6x512xf32> to vector<6xf32>
    %28 = vector.shape_cast %27 : vector<6xf32> to vector<6x1xf32>
    %29 = vector.broadcast %28 : vector<6x1xf32> to vector<6x512xf32>
    %30 = arith.subf %26, %29 : vector<6x512xf32>
    %31 = math.exp %30 : vector<6x512xf32>
    %cst_21 = arith.constant dense<0.000000e+00> : vector<6xf32>
    %32 = vector.multi_reduction <add>, %31, %cst_21 [1] : vector<6x512xf32> to vector<6xf32>
    %33 = vector.shape_cast %32 : vector<6xf32> to vector<6x1xf32>
    %34 = tpu.reciprocal %33 : vector<6x1xf32> -> vector<6x1xf32>
    %35 = vector.broadcast %34 : vector<6x1xf32> to vector<6x512xf32>
    %36 = arith.mulf %31, %35 : vector<6x512xf32>
    %c0_22 = arith.constant 0 : index
    %c0_23 = arith.constant 0 : index
    %37 = vector.load %arg5[%c0_22, %c0_23] : memref<6x512xf32, #tpu.memory_space<vmem>>, vector<6x512xf32>
    tpu.vector_store %arg5[%c0_22, %c0_23], %36 {strides = array<i32>} : memref<6x512xf32, #tpu.memory_space<vmem>>, vector<6x512xf32>,
    return
  }
}

</mosaic_0001>

<llo_original>
// kernel: probe.1
$region0: #{probe.1}
  #allocation0 [shape = 'u32[]', space=smem, size = 0x4, offset = 0x4, fixed_abs, tag = 'smem constant byte address 0x4 - core index']
  #allocation1 [shape = 'u32[72,128]{1,0:T(1,128)}', space=vmem, size = 0x9000, scoped, tag = 'internal scratch']
  %s0 = inlined_call_operand.vmem [shape: f32[8,128], index: 0, kind: input, shape index: {}]
  %s1 = inlined_call_operand.hbm [shape: f32[8,128], index: 1, kind: output, shape index: {}]
  %s2 = sld [smem:[#allocation0]]
  $region14: #{probe.1} parent=0
    _
  %s4 = ssub.s32 1, %s2
  %s5 = scalar_select 0, %s4, %s2
  $region1: #{probe.1} parent=0
    #allocation2 [shape = 'u8[4096]{0}', space=vmem, size = 0x1000, scoped, tag = 'output window, operand 0, single buffered']
    #allocation3 [shape = 's32[1]{0}', space=sflag, size = 0x4, scoped, tag = 'scoped memory for probe.1']
    %6 = vsyncpa [#allocation3], 0
    // Predicated region
    $region2: #{probe.1} parent=1 // pred_check
      _
    $region3: #{probe.1} parent=1 // pred_check_branch
      %8 = sbr.rel (0) target = $region5
    $region4: #{probe.1} parent=1 // pred_region
      _
    $region5: #{probe.1} parent=1 // pred_fallthru
      _
    %v9 = vld [vmem:[%s0] sm:$0xff]
    %v10 = vadd.f32 %v9, 1.0
    %11 = vst [vmem:[#allocation2] sm:$0xff] %v10
    // Predicated region
    $region6: #{probe.1} parent=1 // pred_check
      _
    $region7: #{probe.1} parent=1 // pred_check_branch
      %13 = sbr.rel (0) target = $region9
    $region8: #{probe.1} parent=1 // pred_region
      %15 = vsyncadd [#allocation3], 0
      %s17 = sshll.u32 [#allocation2], 4
      %s18 = int_to_ptr.vmem [resolvable:$true] %s17
      %s19 = sshll.u32 %s1, 4
      %s20 = int_to_ptr.hbm [resolvable:$true] %s19
      %22 = dma.vmem_to_hbm [thread:$0]  %s18, 128, %s20, [#allocation3]
    $region9: #{probe.1} parent=1 // pred_fallthru
      _
    // Predicated region
    $region10: #{probe.1} parent=1 // pred_check
      _
    $region11: #{probe.1} parent=1 // pred_check_branch
      %24 = sbr.rel (0) target = $region13
    $region12: #{probe.1} parent=1 // pred_region
      %26 = dma.done [#allocation3], 128
    $region13: #{probe.1} parent=1 // pred_fallthru
      _
    %27 = vsyncpa [#allocation3], 1

// kernel: rf_discrete_forward.1
$region0: #{rf_discrete_forward.1}
  #allocation0 [shape = 'u32[]', space=smem, size = 0x4, offset = 0x4, fixed_abs, tag = 'smem constant byte address 0x4 - core index']
  #allocation1 [shape = 'u32[72,128]{1,0:T(1,128)}', space=vmem, size = 0x9000, scoped, tag = 'internal scratch']
  %s0 = inlined_call_operand.hbm [shape: f32[1,18], index: 0, kind: input, shape index: {}]
  %s1 = inlined_call_operand.hbm [shape: f32[18,512], index: 1, kind: input, shape index: {}]
  %s2 = inlined_call_operand.hbm [shape: f32[1,512], index: 2, kind: input, shape index: {}]
  %s3 = inlined_call_operand.hbm [shape: bf16[512,3072], index: 3, kind: input, shape index: {}]
  %s4 = inlined_call_operand.hbm [shape: f32[6,512], index: 4, kind: input, shape index: {}]
  %s5 = inlined_call_operand.hbm [shape: f32[6,512], index: 5, kind: output, shape index: {}]
  %s6 = sld [smem:[#allocation0]]
  $region50: #{rf_discrete_forward.1} parent=0
    _
  %s8 = ssub.s32 1, %s6
  %s9 = scalar_select 0, %s8, %s6
  $region1: #{rf_discrete_forward.1} parent=0
    #allocation2 [shape = 'u8[512]{0}', space=vmem, size = 0x400, scoped, tag = 'input window, operand 0, single buffered']
    #allocation3 [shape = 's32[1]{0}', space=sflag, size = 0x4, scoped, tag = 'scoped memory for rf_discrete_forward.1']
    #allocation4 [shape = 's32[1]{0}', space=sflag, size = 0x4, scoped, tag = 'scoped memory for rf_discrete_forward.1']
    #allocation5 [shape = 'u8[49152]{0}', space=vmem, size = 0xc000, scoped, tag = 'input window, operand 1, single buffered']
    #allocation6 [shape = 's32[1]{0}', space=sflag, size = 0x4, scoped, tag = 'scoped memory for rf_discrete_forward.1']
    #allocation7 [shape = 'u8[2048]{0}', space=vmem, size = 0x800, scoped, tag = 'input window, operand 2, single buffered']
    #allocation8 [shape = 'u8[3145728]{0}', space=vmem, size = 0x300000, scoped, tag = 'input window, operand 3, single buffered']
    #allocation9 [shape = 's32[1]{0}', space=sflag, size = 0x4, scoped, tag = 'scoped memory for rf_discrete_forward.1']
    #allocation10 [shape = 'u8[16384]{0}', space=vmem, size = 0x4000, scoped, tag = 'input window, operand 4, single buffered']
    #allocation11 [shape = 'u8[16384]{0}', space=vmem, size = 0x4000, scoped, tag = 'output window, operand 0, single buffered']
    %10 = vsyncpa [#allocation3], 0
    %11 = vsyncpa [#allocation6], 0
    %12 = vsyncpa [#allocation9], 0
    %13 = vsyncpa [#allocation4], 0
    // Predicated region
    $region2: #{rf_discrete_forward.1} parent=1 // pred_check
      _
    $region3: #{rf_discrete_forward.1} parent=1 // pred_check_branch
      %15 = sbr.rel (0) target = $region5
    $region4: #{rf_discrete_forward.1} parent=1 // pred_region
      %17 = vsyncadd [#allocation3], 0
      %s19 = sshll.u32 %s0, 4
      %s20 = int_to_ptr.hbm [resolvable:$true] %s19
      %s21 = sshll.u32 [#allocation2], 4
      %s22 = int_to_ptr.vmem [resolvable:$true] %s21
      %24 = dma.hbm_to_vmem [thread:$0]  %s20, 16, %s22, [#allocation3]
    $region5: #{rf_discrete_forward.1} parent=1 // pred_fallthru
      _
    // Predicated region
    $region6: #{rf_discrete_forward.1} parent=1 // pred_check
      _
    $region7: #{rf_discrete_forward.1} parent=1 // pred_check_branch
      %26 = sbr.rel (0) target = $region9
    $region8: #{rf_discrete_forward.1} parent=1 // pred_region
      %28 = vsyncadd [#allocation6], 0
      %s29 = sshll.u32 %s1, 4
      %s30 = int_to_ptr.hbm [resolvable:$true] %s29
      %s31 = sshll.u32 [#allocation5], 4
      %s32 = int_to_ptr.vmem [resolvable:$true] %s31
      %37 = dma.hbm_to_vmem [thread:$0]  %s30, 1536, %s32, [#allocation6], 512, 512, 32
    $region9: #{rf_discrete_forward.1} parent=1 // pred_fallthru
      _
    // Predicated region
    $region10: #{rf_discrete_forward.1} parent=1 // pred_check
      _
    $region11: #{rf_discrete_forward.1} parent=1 // pred_check_branch
      %39 = sbr.rel (0) target = $region13
    $region12: #{rf_discrete_forward.1} parent=1 // pred_region
      %41 = vsyncadd [#allocation6], 0
      %s43 = sshll.u32 %s2, 4
      %s44 = int_to_ptr.hbm [resolvable:$true] %s43
      %s45 = sshll.u32 [#allocation7], 4
      %s46 = int_to_ptr.vmem [resolvable:$true] %s45
      %48 = dma.hbm_to_vmem [thread:$0]  %s44, 64, %s46, [#allocation6]
    $region13: #{rf_discrete_forward.1} parent=1 // pred_fallthru
      _
    // Predicated region
    $region14: #{rf_discrete_forward.1} parent=1 // pred_check
      _
    $region15: #{rf_discrete_forward.1} parent=1 // pred_check_branch
      %50 = sbr.rel (0) target = $region17
    $region16: #{rf_discrete_forward.1} parent=1 // pred_region
      %52 = vsyncadd [#allocation9], 0
      %s53 = sshll.u32 %s3, 4
      %s54 = int_to_ptr.hbm [resolvable:$true] %s53
      %s55 = sshll.u32 [#allocation8], 4
      %s56 = int_to_ptr.vmem [resolvable:$true] %s55
      %61 = dma.hbm_to_vmem [thread:$0]  %s54, 98304, %s56, [#allocation9], 1536, 1536, 96
    $region17: #{rf_discrete_forward.1} parent=1 // pred_fallthru
      _
    // Predicated region
    $region18: #{rf_discrete_forward.1} parent=1 // pred_check
      _
    $region19: #{rf_discrete_forward.1} parent=1 // pred_check_branch
      %63 = sbr.rel (0) target = $region21
    $region20: #{rf_discrete_forward.1} parent=1 // pred_region
      %65 = vsyncadd [#allocation9], 0
      %s67 = sshll.u32 %s4, 4
      %s68 = int_to_ptr.hbm [resolvable:$true] %s67
      %s69 = sshll.u32 [#allocation10], 4
      %s70 = int_to_ptr.vmem [resolvable:$true] %s69
      %72 = dma.hbm_to_vmem [thread:$0]  %s68, 512, %s70, [#allocation9]
    $region21: #{rf_discrete_forward.1} parent=1 // pred_fallthru
      _
    // Predicated region
    $region22: #{rf_discrete_forward.1} parent=1 // pred_check
      _
    $region23: #{rf_discrete_forward.1} parent=1 // pred_check_branch
      %74 = sbr.rel (0) target = $region25
    $region24: #{rf_discrete_forward.1} parent=1 // pred_region
      %76 = dma.done [#allocation3], 16
    $region25: #{rf_discrete_forward.1} parent=1 // pred_fallthru
      _
    // Predicated region
    $region26: #{rf_discrete_forward.1} parent=1 // pred_check
      _
    $region27: #{rf_discrete_forward.1} parent=1 // pred_check_branch
      %78 = sbr.rel (0) target = $region29
    $region28: #{rf_discrete_forward.1} parent=1 // pred_region
      %80 = dma.done [#allocation6], 1536
    $region29: #{rf_discrete_forward.1} parent=1 // pred_fallthru
      _
    // Predicated region
    $region30: #{rf_discrete_forward.1} parent=1 // pred_check
      _
    $region31: #{rf_discrete_forward.1} parent=1 // pred_check_branch
      %82 = sbr.rel (0) target = $region33
    $region32: #{rf_discrete_forward.1} parent=1 // pred_region
      %84 = dma.done [#allocation6], 64
    $region33: #{rf_discrete_forward.1} parent=1 // pred_fallthru
      _
    // Predicated region
    $region34: #{rf_discrete_forward.1} parent=1 // pred_check
      _
    $region35: #{rf_discrete_forward.1} parent=1 // pred_check_branch
      %86 = sbr.rel (0) target = $region37
    $region36: #{rf_discrete_forward.1} parent=1 // pred_region
      %88 = dma.done [#allocation9], 98304
    $region37: #{rf_discrete_forward.1} parent=1 // pred_fallthru
      _
    // Predicated region
    $region38: #{rf_discrete_forward.1} parent=1 // pred_check
      _
    $region39: #{rf_discrete_forward.1} parent=1 // pred_check_branch
      %90 = sbr.rel (0) target = $region41
    $region40: #{rf_discrete_forward.1} parent=1 // pred_region
      %92 = dma.done [#allocation9], 512
    $region41: #{rf_discrete_forward.1} parent=1 // pred_fallthru
      _
    %v94 = vld [vmem:[#allocation2] sm:$0x1]
    %v95 = vpack.c.bf16 %v94, %v94
    %v96 = vld [vmem:[#allocation5] sm:$0xff]
    %v97 = vld [vmem:[#allocation5 + $0x8] sm:$0xff]
    %v98 = vld [vmem:[#allocation5 + $0x10] sm:$0xff]
    %v99 = vld [vmem:[#allocation5 + $0x18] sm:$0xff]
    %v100 = vld [vmem:[#allocation5 + $0x20] sm:$0xff]
    %v101 = vld [vmem:[#allocation5 + $0x28] sm:$0xff]
    %v102 = vld [vmem:[#allocation5 + $0x30] sm:$0xff]
    %v103 = vld [vmem:[#allocation5 + $0x38] sm:$0xff]
    %v104 = vld [vmem:[#allocation5 + $0x40] sm:$0x3]
    %v105 = vld [vmem:[#allocation5 + $0x48] sm:$0x3]
    %v106 = vld [vmem:[#allocation5 + $0x50] sm:$0x3]
    %v107 = vld [vmem:[#allocation5 + $0x58] sm:$0x3]
    %v108 = vpack.c.bf16 %v100, %v96
    %v109 = vpack.c.bf16 %v101, %v97
    %v110 = vpack.c.bf16 %v102, %v98
    %v111 = vpack.c.bf16 %v103, %v99
    %v112 = vpack.c.bf16 %v104, %v104
    %v113 = vpack.c.bf16 %v105, %v105
    %v114 = vpack.c.bf16 %v106, %v106
    %v115 = vpack.c.bf16 %v107, %v107
    %v116 = vld [vmem:[#allocation7] sm:$0xf]
    %v118 = vperm.slane %v116, 0
    %v119 = vperm.slane %v116, 1
    %v120 = vperm.slane %v116, 2
    %v121 = vperm.slane %v116, 3
    %vm126 = vcmask 146432
    %v128 = vsel %vm126, %v95, 0
    %vm130 = vcmask 1040384
    %v132 = vsel %vm130, %v112, 0
    %v135 = vsel %vm130, %v113, 0
    %v138 = vsel %vm130, %v114, 0
    %v141 = vsel %vm130, %v115, 0
    %143 = vmatpush.bf16.msra.mxu0 0
    %144 = vmatpush.bf16.msra.mxu0 0
    %145 = vmatpush.bf16.msra.mxu0 0
    %146 = vmatpush.bf16.msra.mxu0 0
    %147 = vmatpush.bf16.msra.mxu0 0
    %148 = vmatpush.bf16.msra.mxu0 0
    %149 = vmatpush.bf16.msra.mxu0 %v132
    %150 = vmatpush.bf16.msra.mxu0 %v108
    %151 = vmatmul.bf16.gmra.mxu0 %v128
    %v152 = vpop.f32.mrf.mxu0
    %v153 = vadd.f32 %v118, %v152
    %v154 = vpop.f32.mrf.mxu0
    %155 = vdwg.mxu0
    %156 = vmatpush.bf16.msra.mxu0 0
    %157 = vmatpush.bf16.msra.mxu0 0
    %158 = vmatpush.bf16.msra.mxu0 0
    %159 = vmatpush.bf16.msra.mxu0 0
    %160 = vmatpush.bf16.msra.mxu0 0
    %161 = vmatpush.bf16.msra.mxu0 0
    %162 = vmatpush.bf16.msra.mxu0 %v135
    %163 = vmatpush.bf16.msra.mxu0 %v109
    %164 = vmatmul.bf16.gmra.mxu0 %v128
    %v165 = vpop.f32.mrf.mxu0
    %v166 = vadd.f32 %v119, %v165
    %v167 = vpop.f32.mrf.mxu0
    %168 = vdwg.mxu0
    %169 = vmatpush.bf16.msra.mxu0 0
    %170 = vmatpush.bf16.msra.mxu0 0
    %171 = vmatpush.bf16.msra.mxu0 0
    %172 = vmatpush.bf16.msra.mxu0 0
    %173 = vmatpush.bf16.msra.mxu0 0
    %174 = vmatpush.bf16.msra.mxu0 0
    %175 = vmatpush.bf16.msra.mxu0 %v138
    %176 = vmatpush.bf16.msra.mxu0 %v110
    %177 = vmatmul.bf16.gmra.mxu0 %v128
    %v178 = vpop.f32.mrf.mxu0
    %v179 = vadd.f32 %v120, %v178
    %v180 = vpop.f32.mrf.mxu0
    %181 = vdwg.mxu0
    %182 = vmatpush.bf16.msra.mxu0 0
    %183 = vmatpush.bf16.msra.mxu0 0
    %184 = vmatpush.bf16.msra.mxu0 0
    %185 = vmatpush.bf16.msra.mxu0 0
    %186 = vmatpush.bf16.msra.mxu0 0
    %187 = vmatpush.bf16.msra.mxu0 0
    %188 = vmatpush.bf16.msra.mxu0 %v141
    %189 = vmatpush.bf16.msra.mxu0 %v111
    %190 = vmatmul.bf16.gmra.mxu0 %v128
    %v191 = vpop.f32.mrf.mxu0
    %v192 = vadd.f32 %v121, %v191
    %v193 = vpop.f32.mrf.mxu0
    %194 = vdwg.mxu0
    %v195 = vmax.f32 %v153, 0.0
    %v196 = vmax.f32 %v166, 0.0
    %v197 = vmax.f32 %v179, 0.0
    %v198 = vmax.f32 %v192, 0.0
    %v199 = vpack.c.bf16 %v195, %v195
    %v200 = vpack.c.bf16 %v196, %v196
    %v201 = vpack.c.bf16 %v197, %v197
    %v202 = vpack.c.bf16 %v198, %v198
    %v203 = vld [vmem:[#allocation8] sm:$0xff]
    %v204 = vld [vmem:[#allocation8 + $0x8] sm:$0xff]
    %v205 = vld [vmem:[#allocation8 + $0x10] sm:$0xff]
    %v206 = vld [vmem:[#allocation8 + $0x18] sm:$0xff]
    %v207 = vld [vmem:[#allocation8 + $0x20] sm:$0xff]
    %v208 = vld [vmem:[#allocation8 + $0x28] sm:$0xff]
    %v209 = vld [vmem:[#allocation8 + $0x30] sm:$0xff]
    %v210 = vld [vmem:[#allocation8 + $0x38] sm:$0xff]
    %v211 = vld [vmem:[#allocation8 + $0x40] sm:$0xff]
    %v212 = vld [vmem:[#allocation8 + $0x48] sm:$0xff]
    %v213 = vld [vmem:[#allocation8 + $0x50] sm:$0xff]
    %v214 = vld [vmem:[#allocation8 + $0x58] sm:$0xff]
    %v215 = vld [vmem:[#allocation8 + $0x60] sm:$0xff]
    %v216 = vld [vmem:[#allocation8 + $0x68] sm:$0xff]
    %v217 = vld [vmem:[#allocation8 + $0x70] sm:$0xff]
    %v218 = vld [vmem:[#allocation8 + $0x78] sm:$0xff]
    %v219 = vld [vmem:[#allocation8 + $0x80] sm:$0xff]
    %v220 = vld [vmem:[#allocation8 + $0x88] sm:$0xff]
    %v221 = vld [vmem:[#allocation8 + $0x90] sm:$0xff]
    %v222 = vld [vmem:[#allocation8 + $0x98] sm:$0xff]
    %v223 = vld [vmem:[#allocation8 + $0xa0] sm:$0xff]
    %v224 = vld [vmem:[#allocation8 + $0xa8] sm:$0xff]
    %v225 = vld [vmem:[#allocation8 + $0xb0] sm:$0xff]
    %v226 = vld [vmem:[#allocation8 + $0xb8] sm:$0xff]
    %v227 = vld [vmem:[#allocation8 + $0xc0] sm:$0xff]
    %v228 = vld [vmem:[#allocation8 + $0xc8] sm:$0xff]
    %v229 = vld [vmem:[#allocation8 + $0xd0] sm:$0xff]
    %v230 = vld [vmem:[#allocation8 + $0xd8] sm:$0xff]
    %v231 = vld [vmem:[#allocation8 + $0xe0] sm:$0xff]
    %v232 = vld [vmem:[#allocation8 + $0xe8] sm:$0xff]
    %v233 = vld [vmem:[#allocation8 + $0xf0] sm:$0xff]
    %v234 = vld [vmem:[#allocation8 + $0xf8] sm:$0xff]
    %v235 = vld [vmem:[#allocation8 + $0x100] sm:$0xff]
    %v236 = vld [vmem:[#allocation8 + $0x108] sm:$0xff]
    %v237 = vld [vmem:[#allocation8 + $0x110] sm:$0xff]
    %v238 = vld [vmem:[#allocation8 + $0x118] sm:$0xff]
    %v239 = vld [vmem:[#allocation8 + $0x120] sm:$0xff]
    %v240 = vld [vmem:[#allocation8 + $0x128] sm:$0xff]
    %v241 = vld [vmem:[#allocation8 + $0x130] sm:$0xff]
    %v242 = vld [vmem:[#allocation8 + $0x138] sm:$0xff]
    %v243 = vld [vmem:[#allocation8 + $0x140] sm:$0xff]
    %v244 = vld [vmem:[#allocation8 + $0x148] sm:$0xff]
    %v245 = vld [vmem:[#allocation8 + $0x150] sm:$0xff]
    %v246 = vld [vmem:[#allocation8 + $0x158] sm:$0xff]
    %v247 = vld [vmem:[#allocation8 + $0x160] sm:$0xff]
    %v248 = vld [vmem:[#allocation8 + $0x168] sm:$0xff]
    %v249 = vld [vmem:[#allocation8 + $0x170] sm:$0xff]
    %v250 = vld [vmem:[#allocation8 + $0x178] sm:$0xff]
    %v251 = vld [vmem:[#allocation8 + $0x180] sm:$0xff]
    %v252 = vld [vmem:[#allocation8 + $0x188] sm:$0xff]
    %v253 = vld [vmem:[#allocation8 + $0x190] sm:$0xff]
    %v254 = vld [vmem:[#allocation8 + $0x198] sm:$0xff]
    %v255 = vld [vmem:[#allocation8 + $0x1a0] sm:$0xff]
    %v256 = vld [vmem:[#allocation8 + $0x1a8] sm:$0xff]
    %v257 = vld [vmem:[#allocation8 + $0x1b0] sm:$0xff]
    %v258 = vld [vmem:[#allocation8 + $0x1b8] sm:$0xff]
    %v259 = vld [vmem:[#allocation8 + $0x1c0] sm:$0xff]
    %v260 = vld [vmem:[#allocation8 + $0x1c8] sm:$0xff]
    %v261 = vld [vmem:[#allocation8 + $0x1d0] sm:$0xff]
    %v262 = vld [vmem:[#allocation8 + $0x1d8] sm:$0xff]
    %v263 = vld [vmem:[#allocation8 + $0x1e0] sm:$0xff]
    %v264 = vld [vmem:[#allocation8 + $0x1e8] sm:$0xff]
    %v265 = vld [vmem:[#allocation8 + $0x1f0] sm:$0xff]
    %v266 = vld [vmem:[#allocation8 + $0x1f8] sm:$0xff]
    %v267 = vld [vmem:[#allocation8 + $0x200] sm:$0xff]
    %v268 = vld [vmem:[#allocation8 + $0x208] sm:$0xff]
    %v269 = vld [vmem:[#allocation8 + $0x210] sm:$0xff]
    %v270 = vld [vmem:[#allocation8 + $0x218] sm:$0xff]
    %v271 = vld [vmem:[#allocation8 + $0x220] sm:$0xff]
    %v272 = vld [vmem:[#allocation8 + $0x228] sm:$0xff]
    %v273 = vld [vmem:[#allocation8 + $0x230] sm:$0xff]
    %v274 = vld [vmem:[#allocation8 + $0x238] sm:$0xff]
    %v275 = vld [vmem:[#allocation8 + $0x240] sm:$0xff]
    %v276 = vld [vmem:[#allocation8 + $0x248] sm:$0xff]
    %v277 = vld [vmem:[#allocation8 + $0x250] sm:$0xff]
    %v278 = vld [vmem:[#allocation8 + $0x258] sm:$0xff]
    %v279 = vld [vmem:[#allocation8 + $0x260] sm:$0xff]
    %v280 = vld [vmem:[#allocation8 + $0x268] sm:$0xff]
    %v281 = vld [vmem:[#allocation8 + $0x270] sm:$0xff]
    %v282 = vld [vmem:[#allocation8 + $0x278] sm:$0xff]
    %v283 = vld [vmem:[#allocation8 + $0x280] sm:$0xff]
    %v284 = vld [vmem:[#allocation8 + $0x288] sm:$0xff]
    %v285 = vld [vmem:[#allocation8 + $0x290] sm:$0xff]
    %v286 = vld [vmem:[#allocation8 + $0x298] sm:$0xff]
    %v287 = vld [vmem:[#allocation8 + $0x2a0] sm:$0xff]
    %v288 = vld [vmem:[#allocation8 + $0x2a8] sm:$0xff]
    %v289 = vld [vmem:[#allocation8 + $0x2b0] sm:$0xff]
    %v290 = vld [vmem:[#allocation8 + $0x2b8] sm:$0xff]
    %v291 = vld [vmem:[#allocation8 + $0x2c0] sm:$0xff]
    %v292 = vld [vmem:[#allocation8 + $0x2c8] sm:$0xff]
    %v293 = vld [vmem:[#allocation8 + $0x2d0] sm:$0xff]
    %v294 = vld [vmem:[#allocation8 + $0x2d8] sm:$0xff]
    %v295 = vld [vmem:[#allocation8 + $0x2e0] sm:$0xff]
    %v296 = vld [vmem:[#allocation8 + $0x2e8] sm:$0xff]
    %v297 = vld [vmem:[#allocation8 + $0x2f0] sm:$0xff]
    %v298 = vld [vmem:[#allocation8 + $0x2f8] sm:$0xff]
    %v299 = vld [vmem:[#allocation8 + $0x300] sm:$0xff]
    %v300 = vld [vmem:[#allocation8 + $0x308] sm:$0xff]
    %v301 = vld [vmem:[#allocation8 + $0x310] sm:$0xff]
    %v302 = vld [vmem:[#allocation8 + $0x318] sm:$0xff]
    %v303 = vld [vmem:[#allocation8 + $0x320] sm:$0xff]
    %v304 = vld [vmem:[#allocation8 + $0x328] sm:$0xff]
    %v305 = vld [vmem:[#allocation8 + $0x330] sm:$0xff]
    %v306 = vld [vmem:[#allocation8 + $0x338] sm:$0xff]
    %v307 = vld [vmem:[#allocation8 + $0x340] sm:$0xff]
    %v308 = vld [vmem:[#allocation8 + $0x348] sm:$0xff]
    %v309 = vld [vmem:[#allocation8 + $0x350] sm:$0xff]
    %v310 = vld [vmem:[#allocation8 + $0x358] sm:$0xff]
    %v311 = vld [vmem:[#allocation8 + $0x360] sm:$0xff]
    %v312 = vld [vmem:[#allocation8 + $0x368] sm:$0xff]
    %v313 = vld [vmem:[#allocation8 + $0x370] sm:$0xff]
    %v314 = vld [vmem:[#allocation8 + $0x378] sm:$0xff]
    %v315 = vld [vmem:[#allocation8 + $0x380] sm:$0xff]
    %v316 = vld [vmem:[#allocation8 + $0x388] sm:$0xff]
    %v317 = vld [vmem:[#allocation8 + $0x390] sm:$0xff]
    %v318 = vld [vmem:[#allocation8 + $0x398] sm:$0xff]
    %v319 = vld [vmem:[#allocation8 + $0x3a0] sm:$0xff]
    %v320 = vld [vmem:[#allocation8 + $0x3a8] sm:$0xff]
    %v321 = vld [vmem:[#allocation8 + $0x3b0] sm:$0xff]
    %v322 = vld [vmem:[#allocation8 + $0x3b8] sm:$0xff]
    %v323 = vld [vmem:[#allocation8 + $0x3c0] sm:$0xff]
    %v324 = vld [vmem:[#allocation8 + $0x3c8] sm:$0xff]
    %v325 = vld [vmem:[#allocation8 + $0x3d0] sm:$0xff]
    %v326 = vld [vmem:[#allocation8 + $0x3d8] sm:$0xff]
    %v327 = vld [vmem:[#allocation8 + $0x3e0] sm:$0xff]
    %v328 = vld [vmem:[#allocation8 + $0x3e8] sm:$0xff]
    %v329 = vld [vmem:[#allocation8 + $0x3f0] sm:$0xff]
    %v330 = vld [vmem:[#allocation8 + $0x3f8] sm:$0xff]
    %v331 = vld [vmem:[#allocation8 + $0x400] sm:$0xff]
    %v332 = vld [vmem:[#allocation8 + $0x408] sm:$0xff]
    %v333 = vld [vmem:[#allocation8 + $0x410] sm:$0xff]
    %v334 = vld [vmem:[#allocation8 + $0x418] sm:$0xff]
    %v335 = vld [vmem:[#allocation8 + $0x420] sm:$0xff]
    %v336 = vld [vmem:[#allocation8 + $0x428] sm:$0xff]
    %v337 = vld [vmem:[#allocation8 + $0x430] sm:$0xff]
    %v338 = vld [vmem:[#allocation8 + $0x438] sm:$0xff]
    %v339 = vld [vmem:[#allocation8 + $0x440] sm:$0xff]
    %v340 = vld [vmem:[#allocation8 + $0x448] sm:$0xff]
    %v341 = vld [vmem:[#allocation8 + $0x450] sm:$0xff]
    %v342 = vld [vmem:[#allocation8 + $0x458] sm:$0xff]
    %v343 = vld [vmem:[#allocation8 + $0x460] sm:$0xff]
    %v344 = vld [vmem:[#allocation8 + $0x468] sm:$0xff]
    %v345 = vld [vmem:[#allocation8 + $0x470] sm:$0xff]
    %v346 = vld [vmem:[#allocation8 + $0x478] sm:$0xff]
    %v347 = vld [vmem:[#allocation8 + $0x480] sm:$0xff]
    %v348 = vld [vmem:[#allocation8 + $0x488] sm:$0xff]
    %v349 = vld [vmem:[#allocation8 + $0x490] sm:$0xff]
    %v350 = vld [vmem:[#allocation8 + $0x498] sm:$0xff]
    %v351 = vld [vmem:[#allocation8 + $0x4a0] sm:$0xff]
    %v352 = vld [vmem:[#allocation8 + $0x4a8] sm:$0xff]
    %v353 = vld [vmem:[#allocation8 + $0x4b0] sm:$0xff]
    %v354 = vld [vmem:[#allocation8 + $0x4b8] sm:$0xff]
    %v355 = vld [vmem:[#allocation8 + $0x4c0] sm:$0xff]
    %v356 = vld [vmem:[#allocation8 + $0x4c8] sm:$0xff]
    %v357 = vld [vmem:[#allocation8 + $0x4d0] sm:$0xff]
    %v358 = vld [vmem:[#allocation8 + $0x4d8] sm:$0xff]
    %v359 = vld [vmem:[#allocation8 + $0x4e0] sm:$0xff]
    %v360 = vld [vmem:[#allocation8 + $0x4e8] sm:$0xff]
    %v361 = vld [vmem:[#allocation8 + $0x4f0] sm:$0xff]
    %v362 = vld [vmem:[#allocation8 + $0x4f8] sm:$0xff]
    %v363 = vld [vmem:[#allocation8 + $0x500] sm:$0xff]
    %v364 = vld [vmem:[#allocation8 + $0x508] sm:$0xff]
    %v365 = vld [vmem:[#allocation8 + $0x510] sm:$0xff]
    %v366 = vld [vmem:[#allocation8 + $0x518] sm:$0xff]
    %v367 = vld [vmem:[#allocation8 + $0x520] sm:$0xff]
    %v368 = vld [vmem:[#allocation8 + $0x528] sm:$0xff]
    %v369 = vld [vmem:[#allocation8 + $0x530] sm:$0xff]
    %v370 = vld [vmem:[#allocation8 + $0x538] sm:$0xff]
    %v371 = vld [vmem:[#allocation8 + $0x540] sm:$0xff]
    %v372 = vld [vmem:[#allocation8 + $0x548] sm:$0xff]
    %v373 = vld [vmem:[#allocation8 + $0x550] sm:$0xff]
    %v374 = vld [vmem:[#allocation8 + $0x558] sm:$0xff]
    %v375 = vld [vmem:[#allocation8 + $0x560] sm:$0xff]
    %v376 = vld [vmem:[#allocation8 + $0x568] sm:$0xff]
    %v377 = vld [vmem:[#allocation8 + $0x570] sm:$0xff]
    %v378 = vld [vmem:[#allocation8 + $0x578] sm:$0xff]
    %v379 = vld [vmem:[#allocation8 + $0x580] sm:$0xff]
    %v380 = vld [vmem:[#allocation8 + $0x588] sm:$0xff]
    %v381 = vld [vmem:[#allocation8 + $0x590] sm:$0xff]
    %v382 = vld [vmem:[#allocation8 + $0x598] sm:$0xff]
    %v383 = vld [vmem:[#allocation8 + $0x5a0] sm:$0xff]
    %v384 = vld [vmem:[#allocation8 + $0x5a8] sm:$0xff]
    %v385 = vld [vmem:[#allocation8 + $0x5b0] sm:$0xff]
    %v386 = vld [vmem:[#allocation8 + $0x5b8] sm:$0xff]
    %v387 = vld [vmem:[#allocation8 + $0x5c0] sm:$0xff]
    %v388 = vld [vmem:[#allocation8 + $0x5c8] sm:$0xff]
    %v389 = vld [vmem:[#allocation8 + $0x5d0] sm:$0xff]
    %v390 = vld [vmem:[#allocation8 + $0x5d8] sm:$0xff]
    %v391 = vld [vmem:[#allocation8 + $0x5e0] sm:$0xff]
    %v392 = vld [vmem:[#allocation8 + $0x5e8] sm:$0xff]
    %v393 = vld [vmem:[#allocation8 + $0x5f0] sm:$0xff]
    %v394 = vld [vmem:[#allocation8 + $0x5f8] sm:$0xff]
    %v395 = vld [vmem:[#allocation8 + $0x600] sm:$0xff]
    %v396 = vld [vmem:[#allocation8 + $0x608] sm:$0xff]
    %v397 = vld [vmem:[#allocation8 + $0x610] sm:$0xff]
    %v398 = vld [vmem:[#allocation8 + $0x618] sm:$0xff]
    %v399 = vld [vmem:[#allocation8 + $0x620] sm:$0xff]
    %v400 = vld [vmem:[#allocation8 + $0x628] sm:$0xff]
    %v401 = vld [vmem:[#allocation8 + $0x630] sm:$0xff]
    %v402 = vld [vmem:[#allocation8 + $0x638] sm:$0xff]
    %v403 = vld [vmem:[#allocation8 + $0x640] sm:$0xff]
    %v404 = vld [vmem:[#allocation8 + $0x648] sm:$0xff]
    %v405 = vld [vmem:[#allocation8 + $0x650] sm:$0xff]
    %v406 = vld [vmem:[#allocation8 + $0x658] sm:$0xff]
    %v407 = vld [vmem:[#allocation8 + $0x660] sm:$0xff]
    %v408 = vld [vmem:[#allocation8 + $0x668] sm:$0xff]
    %v409 = vld [vmem:[#allocation8 + $0x670] sm:$0xff]
    %v410 = vld [vmem:[#allocation8 + $0x678] sm:$0xff]
    %v411 = vld [vmem:[#allocation8 + $0x680] sm:$0xff]
    %v412 = vld [vmem:[#allocation8 + $0x688] sm:$0xff]
    %v413 = vld [vmem:[#allocation8 + $0x690] sm:$0xff]
    %v414 = vld [vmem:[#allocation8 + $0x698] sm:$0xff]
    %v415 = vld [vmem:[#allocation8 + $0x6a0] sm:$0xff]
    %v416 = vld [vmem:[#allocation8 + $0x6a8] sm:$0xff]
    %v417 = vld [vmem:[#allocation8 + $0x6b0] sm:$0xff]
    %v418 = vld [vmem:[#allocation8 + $0x6b8] sm:$0xff]
    %v419 = vld [vmem:[#allocation8 + $0x6c0] sm:$0xff]
    %v420 = vld [vmem:[#allocation8 + $0x6c8] sm:$0xff]
    %v421 = vld [vmem:[#allocation8 + $0x6d0] sm:$0xff]
    %v422 = vld [vmem:[#allocation8 + $0x6d8] sm:$0xff]
    %v423 = vld [vmem:[#allocation8 + $0x6e0] sm:$0xff]
    %v424 = vld [vmem:[#allocation8 + $0x6e8] sm:$0xff]
    %v425 = vld [vmem:[#allocation8 + $0x6f0] sm:$0xff]
    %v426 = vld [vmem:[#allocation8 + $0x6f8] sm:$0xff]
    %v427 = vld [vmem:[#allocation8 + $0x700] sm:$0xff]
    %v428 = vld [vmem:[#allocation8 + $0x708] sm:$0xff]
    %v429 = vld [vmem:[#allocation8 + $0x710] sm:$0xff]
    %v430 = vld [vmem:[#allocation8 + $0x718] sm:$0xff]
    %v431 = vld [vmem:[#allocation8 + $0x720] sm:$0xff]
    %v432 = vld [vmem:[#allocation8 + $0x728] sm:$0xff]
    %v433 = vld [vmem:[#allocation8 + $0x730] sm:$0xff]
    %v434 = vld [vmem:[#allocation8 + $0x738] sm:$0xff]
    %v435 = vld [vmem:[#allocation8 + $0x740] sm:$0xff]
    %v436 = vld [vmem:[#allocation8 + $0x748] sm:$0xff]
    %v437 = vld [vmem:[#allocation8 + $0x750] sm:$0xff]
    %v438 = vld [vmem:[#allocation8 + $0x758] sm:$0xff]
    %v439 = vld [vmem:[#allocation8 + $0x760] sm:$0xff]
    %v440 = vld [vmem:[#allocation8 + $0x768] sm:$0xff]
    %v441 = vld [vmem:[#allocation8 + $0x770] sm:$0xff]
    %v442 = vld [vmem:[#allocation8 + $0x778] sm:$0xff]
    %v443 = vld [vmem:[#allocation8 + $0x780] sm:$0xff]
    %v444 = vld [vmem:[#allocation8 + $0x788] sm:$0xff]
    %v445 = vld [vmem:[#allocation8 + $0x790] sm:$0xff]
    %v446 = vld [vmem:[#allocation8 + $0x798] sm:$0xff]
    %v447 = vld [vmem:[#allocation8 + $0x7a0] sm:$0xff]
    %v448 = vld [vmem:[#allocation8 + $0x7a8] sm:$0xff]
    %v449 = vld [vmem:[#allocation8 + $0x7b0] sm:$0xff]
    %v450 = vld [vmem:[#allocation8 + $0x7b8] sm:$0xff]
    %v451 = vld [vmem:[#allocation8 + $0x7c0] sm:$0xff]
    %v452 = vld [vmem:[#allocation8 + $0x7c8] sm:$0xff]
    %v453 = vld [vmem:[#allocation8 + $0x7d0] sm:$0xff]
    %v454 = vld [vmem:[#allocation8 + $0x7d8] sm:$0xff]
    %v455 = vld [vmem:[#allocation8 + $0x7e0] sm:$0xff]
    %v456 = vld [vmem:[#allocation8 + $0x7e8] sm:$0xff]
    %v457 = vld [vmem:[#allocation8 + $0x7f0] sm:$0xff]
    %v458 = vld [vmem:[#allocation8 + $0x7f8] sm:$0xff]
    %v459 = vld [vmem:[#allocation8 + $0x800] sm:$0xff]
    %v460 = vld [vmem:[#allocation8 + $0x808] sm:$0xff]
    %v461 = vld [vmem:[#allocation8 + $0x810] sm:$0xff]
    %v462 = vld [vmem:[#allocation8 + $0x818] sm:$0xff]
    %v463 = vld [vmem:[#allocation8 + $0x820] sm:$0xff]
    %v464 = vld [vmem:[#allocation8 + $0x828] sm:$0xff]
    %v465 = vld [vmem:[#allocation8 + $0x830] sm:$0xff]
    %v466 = vld [vmem:[#allocation8 + $0x838] sm:$0xff]
    %v467 = vld [vmem:[#allocation8 + $0x840] sm:$0xff]
    %v468 = vld [vmem:[#allocation8 + $0x848] sm:$0xff]
    %v469 = vld [vmem:[#allocation8 + $0x850] sm:$0xff]
    %v470 = vld [vmem:[#allocation8 + $0x858] sm:$0xff]
    %v471 = vld [vmem:[#allocation8 + $0x860] sm:$0xff]
    %v472 = vld [vmem:[#allocation8 + $0x868] sm:$0xff]
    %v473 = vld [vmem:[#allocation8 + $0x870] sm:$0xff]
    %v474 = vld [vmem:[#allocation8 + $0x878] sm:$0xff]
    %v475 = vld [vmem:[#allocation8 + $0x880] sm:$0xff]
    %v476 = vld [vmem:[#allocation8 + $0x888] sm:$0xff]
    %v477 = vld [vmem:[#allocation8 + $0x890] sm:$0xff]
    %v478 = vld [vmem:[#allocation8 + $0x898] sm:$0xff]
    %v479 = vld [vmem:[#allocation8 + $0x8a0] sm:$0xff]
    %v480 = vld [vmem:[#allocation8 + $0x8a8] sm:$0xff]
    %v481 = vld [vmem:[#allocation8 + $0x8b0] sm:$0xff]
    %v482 = vld [vmem:[#allocation8 + $0x8b8] sm:$0xff]
    %v483 = vld [vmem:[#allocation8 + $0x8c0] sm:$0xff]
    %v484 = vld [vmem:[#allocation8 + $0x8c8] sm:$0xff]
    %v485 = vld [vmem:[#allocation8 + $0x8d0] sm:$0xff]
    %v486 = vld [vmem:[#allocation8 + $0x8d8] sm:$0xff]
    %v487 = vld [vmem:[#allocation8 + $0x8e0] sm:$0xff]
    %v488 = vld [vmem:[#allocation8 + $0x8e8] sm:$0xff]
    %v489 = vld [vmem:[#allocation8 + $0x8f0] sm:$0xff]
    %v490 = vld [vmem:[#allocation8 + $0x8f8] sm:$0xff]
    %v491 = vld [vmem:[#allocation8 + $0x900] sm:$0xff]
    %v492 = vld [vmem:[#allocation8 + $0x908] sm:$0xff]
    %v493 = vld [vmem:[#allocation8 + $0x910] sm:$0xff]
    %v494 = vld [vmem:[#allocation8 + $0x918] sm:$0xff]
    %v495 = vld [vmem:[#allocation8 + $0x920] sm:$0xff]
    %v496 = vld [vmem:[#allocation8 + $0x928] sm:$0xff]
    %v497 = vld [vmem:[#allocation8 + $0x930] sm:$0xff]
    %v498 = vld [vmem:[#allocation8 + $0x938] sm:$0xff]
    %v499 = vld [vmem:[#allocation8 + $0x940] sm:$0xff]
    %v500 = vld [vmem:[#allocation8 + $0x948] sm:$0xff]
    %v501 = vld [vmem:[#allocation8 + $0x950] sm:$0xff]
    %v502 = vld [vmem:[#allocation8 + $0x958] sm:$0xff]
    %v503 = vld [vmem:[#allocation8 + $0x960] sm:$0xff]
    %v504 = vld [vmem:[#allocation8 + $0x968] sm:$0xff]
    %v505 = vld [vmem:[#allocation8 + $0x970] sm:$0xff]
    %v506 = vld [vmem:[#allocation8 + $0x978] sm:$0xff]
    %v507 = vld [vmem:[#allocation8 + $0x980] sm:$0xff]
    %v508 = vld [vmem:[#allocation8 + $0x988] sm:$0xff]
    %v509 = vld [vmem:[#allocation8 + $0x990] sm:$0xff]
    %v510 = vld [vmem:[#allocation8 + $0x998] sm:$0xff]
    %v511 = vld [vmem:[#allocation8 + $0x9a0] sm:$0xff]
    %v512 = vld [vmem:[#allocation8 + $0x9a8] sm:$0xff]
    %v513 = vld [vmem:[#allocation8 + $0x9b0] sm:$0xff]
    %v514 = vld [vmem:[#allocation8 + $0x9b8] sm:$0xff]
    %v515 = vld [vmem:[#allocation8 + $0x9c0] sm:$0xff]
    %v516 = vld [vmem:[#allocation8 + $0x9c8] sm:$0xff]
    %v517 = vld [vmem:[#allocation8 + $0x9d0] sm:$0xff]
    %v518 = vld [vmem:[#allocation8 + $0x9d8] sm:$0xff]
    %v519 = vld [vmem:[#allocation8 + $0x9e0] sm:$0xff]
    %v520 = vld [vmem:[#allocation8 + $0x9e8] sm:$0xff]
    %v521 = vld [vmem:[#allocation8 + $0x9f0] sm:$0xff]
    %v522 = vld [vmem:[#allocation8 + $0x9f8] sm:$0xff]
    %v523 = vld [vmem:[#allocation8 + $0xa00] sm:$0xff]
    %v524 = vld [vmem:[#allocation8 + $0xa08] sm:$0xff]
    %v525 = vld [vmem:[#allocation8 + $0xa10] sm:$0xff]
    %v526 = vld [vmem:[#allocation8 + $0xa18] sm:$0xff]
    %v527 = vld [vmem:[#allocation8 + $0xa20] sm:$0xff]
    %v528 = vld [vmem:[#allocation8 + $0xa28] sm:$0xff]
    %v529 = vld [vmem:[#allocation8 + $0xa30] sm:$0xff]
    %v530 = vld [vmem:[#allocation8 + $0xa38] sm:$0xff]
    %v531 = vld [vmem:[#allocation8 + $0xa40] sm:$0xff]
    %v532 = vld [vmem:[#allocation8 + $0xa48] sm:$0xff]
    %v533 = vld [vmem:[#allocation8 + $0xa50] sm:$0xff]
    %v534 = vld [vmem:[#allocation8 + $0xa58] sm:$0xff]
    %v535 = vld [vmem:[#allocation8 + $0xa60] sm:$0xff]
    %v536 = vld [vmem:[#allocation8 + $0xa68] sm:$0xff]
    %v537 = vld [vmem:[#allocation8 + $0xa70] sm:$0xff]
    %v538 = vld [vmem:[#allocation8 + $0xa78] sm:$0xff]
    %v539 = vld [vmem:[#allocation8 + $0xa80] sm:$0xff]
    %v540 = vld [vmem:[#allocation8 + $0xa88] sm:$0xff]
    %v541 = vld [vmem:[#allocation8 + $0xa90] sm:$0xff]
    %v542 = vld [vmem:[#allocation8 + $0xa98] sm:$0xff]
    %v543 = vld [vmem:[#allocation8 + $0xaa0] sm:$0xff]
    %v544 = vld [vmem:[#allocation8 + $0xaa8] sm:$0xff]
    %v545 = vld [vmem:[#allocation8 + $0xab0] sm:$0xff]
    %v546 = vld [vmem:[#allocation8 + $0xab8] sm:$0xff]
    %v547 = vld [vmem:[#allocation8 + $0xac0] sm:$0xff]
    %v548 = vld [vmem:[#allocation8 + $0xac8] sm:$0xff]
    %v549 = vld [vmem:[#allocation8 + $0xad0] sm:$0xff]
    %v550 = vld [vmem:[#allocation8 + $0xad8] sm:$0xff]
    %v551 = vld [vmem:[#allocation8 + $0xae0] sm:$0xff]
    %v552 = vld [vmem:[#allocation8 + $0xae8] sm:$0xff]
    %v553 = vld [vmem:[#allocation8 + $0xaf0] sm:$0xff]
    %v554 = vld [vmem:[#allocation8 + $0xaf8] sm:$0xff]
    %v555 = vld [vmem:[#allocation8 + $0xb00] sm:$0xff]
    %v556 = vld [vmem:[#allocation8 + $0xb08] sm:$0xff]
    %v557 = vld [vmem:[#allocation8 + $0xb10] sm:$0xff]
    %v558 = vld [vmem:[#allocation8 + $0xb18] sm:$0xff]
    %v559 = vld [vmem:[#allocation8 + $0xb20] sm:$0xff]
    %v560 = vld [vmem:[#allocation8 + $0xb28] sm:$0xff]
    %v561 = vld [vmem:[#allocation8 + $0xb30] sm:$0xff]
    %v562 = vld [vmem:[#allocation8 + $0xb38] sm:$0xff]
    %v563 = vld [vmem:[#allocation8 + $0xb40] sm:$0xff]
    %v564 = vld [vmem:[#allocation8 + $0xb48] sm:$0xff]
    %v565 = vld [vmem:[#allocation8 + $0xb50] sm:$0xff]
    %v566 = vld [vmem:[#allocation8 + $0xb58] sm:$0xff]
    %v567 = vld [vmem:[#allocation8 + $0xb60] sm:$0xff]
    %v568 = vld [vmem:[#allocation8 + $0xb68] sm:$0xff]
    %v569 = vld [vmem:[#allocation8 + $0xb70] sm:$0xff]
    %v570 = vld [vmem:[#allocation8 + $0xb78] sm:$0xff]
    %v571 = vld [vmem:[#allocation8 + $0xb80] sm:$0xff]
    %v572 = vld [vmem:[#allocation8 + $0xb88] sm:$0xff]
    %v573 = vld [vmem:[#allocation8 + $0xb90] sm:$0xff]
    %v574 = vld [vmem:[#allocation8 + $0xb98] sm:$0xff]
    %v575 = vld [vmem:[#allocation8 + $0xba0] sm:$0xff]
    %v576 = vld [vmem:[#allocation8 + $0xba8] sm:$0xff]
    %v577 = vld [vmem:[#allocation8 + $0xbb0] sm:$0xff]
    %v578 = vld [vmem:[#allocation8 + $0xbb8] sm:$0xff]
    %v579 = vld [vmem:[#allocation8 + $0xbc0] sm:$0xff]
    %v580 = vld [vmem:[#allocation8 + $0xbc8] sm:$0xff]
    %v581 = vld [vmem:[#allocation8 + $0xbd0] sm:$0xff]
    %v582 = vld [vmem:[#allocation8 + $0xbd8] sm:$0xff]
    %v583 = vld [vmem:[#allocation8 + $0xbe0] sm:$0xff]
    %v584 = vld [vmem:[#allocation8 + $0xbe8] sm:$0xff]
    %v585 = vld [vmem:[#allocation8 + $0xbf0] sm:$0xff]
    %v586 = vld [vmem:[#allocation8 + $0xbf8] sm:$0xff]
    %v587 = vld [vmem:[#allocation8 + $0xc00] sm:$0xff]
    %v588 = vld [vmem:[#allocation8 + $0xc08] sm:$0xff]
    %v589 = vld [vmem:[#allocation8 + $0xc10] sm:$0xff]
    %v590 = vld [vmem:[#allocation8 + $0xc18] sm:$0xff]
    %v591 = vld [vmem:[#allocation8 + $0xc20] sm:$0xff]
    %v592 = vld [vmem:[#allocation8 + $0xc28] sm:$0xff]
    %v593 = vld [vmem:[#allocation8 + $0xc30] sm:$0xff]
    %v594 = vld [vmem:[#allocation8 + $0xc38] sm:$0xff]
    %v595 = vld [vmem:[#allocation8 + $0xc40] sm:$0xff]
    %v596 = vld [vmem:[#allocation8 + $0xc48] sm:$0xff]
    %v597 = vld [vmem:[#allocation8 + $0xc50] sm:$0xff]
    %v598 = vld [vmem:[#allocation8 + $0xc58] sm:$0xff]
    %v599 = vld [vmem:[#allocation8 + $0xc60] sm:$0xff]
    %v600 = vld [vmem:[#allocation8 + $0xc68] sm:$0xff]
    %v601 = vld [vmem:[#allocation8 + $0xc70] sm:$0xff]
    %v602 = vld [vmem:[#allocation8 + $0xc78] sm:$0xff]
    %v603 = vld [vmem:[#allocation8 + $0xc80] sm:$0xff]
    %v604 = vld [vmem:[#allocation8 + $0xc88] sm:$0xff]
    %v605 = vld [vmem:[#allocation8 + $0xc90] sm:$0xff]
    %v606 = vld [vmem:[#allocation8 + $0xc98] sm:$0xff]
    %v607 = vld [vmem:[#allocation8 + $0xca0] sm:$0xff]
    %v608 = vld [vmem:[#allocation8 + $0xca8] sm:$0xff]
    %v609 = vld [vmem:[#allocation8 + $0xcb0] sm:$0xff]
    %v610 = vld [vmem:[#allocation8 + $0xcb8] sm:$0xff]
    %v611 = vld [vmem:[#allocation8 + $0xcc0] sm:$0xff]
    %v612 = vld [vmem:[#allocation8 + $0xcc8] sm:$0xff]
    %v613 = vld [vmem:[#allocation8 + $0xcd0] sm:$0xff]
    %v614 = vld [vmem:[#allocation8 + $0xcd8] sm:$0xff]
    %v615 = vld [vmem:[#allocation8 + $0xce0] sm:$0xff]
    %v616 = vld [vmem:[#allocation8 + $0xce8] sm:$0xff]
    %v617 = vld [vmem:[#allocation8 + $0xcf0] sm:$0xff]
    %v618 = vld [vmem:[#allocation8 + $0xcf8] sm:$0xff]
    %v619 = vld [vmem:[#allocation8 + $0xd00] sm:$0xff]
    %v620 = vld [vmem:[#allocation8 + $0xd08] sm:$0xff]
    %v621 = vld [vmem:[#allocation8 + $0xd10] sm:$0xff]
    %v622 = vld [vmem:[#allocation8 + $0xd18] sm:$0xff]
    %v623 = vld [vmem:[#allocation8 + $0xd20] sm:$0xff]
    %v624 = vld [vmem:[#allocation8 + $0xd28] sm:$0xff]
    %v625 = vld [vmem:[#allocation8 + $0xd30] sm:$0xff]
    %v626 = vld [vmem:[#allocation8 + $0xd38] sm:$0xff]
    %v627 = vld [vmem:[#allocation8 + $0xd40] sm:$0xff]
    %v628 = vld [vmem:[#allocation8 + $0xd48] sm:$0xff]
    %v629 = vld [vmem:[#allocation8 + $0xd50] sm:$0xff]
    %v630 = vld [vmem:[#allocation8 + $0xd58] sm:$0xff]
    %v631 = vld [vmem:[#allocation8 + $0xd60] sm:$0xff]
    %v632 = vld [vmem:[#allocation8 + $0xd68] sm:$0xff]
    %v633 = vld [vmem:[#allocation8 + $0xd70] sm:$0xff]
    %v634 = vld [vmem:[#allocation8 + $0xd78] sm:$0xff]
    %v635 = vld [vmem:[#allocation8 + $0xd80] sm:$0xff]
    %v636 = vld [vmem:[#allocation8 + $0xd88] sm:$0xff]
    %v637 = vld [vmem:[#allocation8 + $0xd90] sm:$0xff]
    %v638 = vld [vmem:[#allocation8 + $0xd98] sm:$0xff]
    %v639 = vld [vmem:[#allocation8 + $0xda0] sm:$0xff]
    %v640 = vld [vmem:[#allocation8 + $0xda8] sm:$0xff]
    %v641 = vld [vmem:[#allocation8 + $0xdb0] sm:$0xff]
    %v642 = vld [vmem:[#allocation8 + $0xdb8] sm:$0xff]
    %v643 = vld [vmem:[#allocation8 + $0xdc0] sm:$0xff]
    %v644 = vld [vmem:[#allocation8 + $0xdc8] sm:$0xff]
    %v645 = vld [vmem:[#allocation8 + $0xdd0] sm:$0xff]
    %v646 = vld [vmem:[#allocation8 + $0xdd8] sm:$0xff]
    %v647 = vld [vmem:[#allocation8 + $0xde0] sm:$0xff]
    %v648 = vld [vmem:[#allocation8 + $0xde8] sm:$0xff]
    %v649 = vld [vmem:[#allocation8 + $0xdf0] sm:$0xff]
    %v650 = vld [vmem:[#allocation8 + $0xdf8] sm:$0xff]
    %v651 = vld [vmem:[#allocation8 + $0xe00] sm:$0xff]
    %v652 = vld [vmem:[#allocation8 + $0xe08] sm:$0xff]
    %v653 = vld [vmem:[#allocation8 + $0xe10] sm:$0xff]
    %v654 = vld [vmem:[#allocation8 + $0xe18] sm:$0xff]
    %v655 = vld [vmem:[#allocation8 + $0xe20] sm:$0xff]
    %v656 = vld [vmem:[#allocation8 + $0xe28] sm:$0xff]
    %v657 = vld [vmem:[#allocation8 + $0xe30] sm:$0xff]
    %v658 = vld [vmem:[#allocation8 + $0xe38] sm:$0xff]
    %v659 = vld [vmem:[#allocation8 + $0xe40] sm:$0xff]
    %v660 = vld [vmem:[#allocation8 + $0xe48] sm:$0xff]
    %v661 = vld [vmem:[#allocation8 + $0xe50] sm:$0xff]
    %v662 = vld [vmem:[#allocation8 + $0xe58] sm:$0xff]
    %v663 = vld [vmem:[#allocation8 + $0xe60] sm:$0xff]
    %v664 = vld [vmem:[#allocation8 + $0xe68] sm:$0xff]
    %v665 = vld [vmem:[#allocation8 + $0xe70] sm:$0xff]
    %v666 = vld [vmem:[#allocation8 + $0xe78] sm:$0xff]
    %v667 = vld [vmem:[#allocation8 + $0xe80] sm:$0xff]
    %v668 = vld [vmem:[#allocation8 + $0xe88] sm:$0xff]
    %v669 = vld [vmem:[#allocation8 + $0xe90] sm:$0xff]
    %v670 = vld [vmem:[#allocation8 + $0xe98] sm:$0xff]
    %v671 = vld [vmem:[#allocation8 + $0xea0] sm:$0xff]
    %v672 = vld [vmem:[#allocation8 + $0xea8] sm:$0xff]
    %v673 = vld [vmem:[#allocation8 + $0xeb0] sm:$0xff]
    %v674 = vld [vmem:[#allocation8 + $0xeb8] sm:$0xff]
    %v675 = vld [vmem:[#allocation8 + $0xec0] sm:$0xff]
    %v676 = vld [vmem:[#allocation8 + $0xec8] sm:$0xff]
    %v677 = vld [vmem:[#allocation8 + $0xed0] sm:$0xff]
    %v678 = vld [vmem:[#allocation8 + $0xed8] sm:$0xff]
    %v679 = vld [vmem:[#allocation8 + $0xee0] sm:$0xff]
    %v680 = vld [vmem:[#allocation8 + $0xee8] sm:$0xff]
    %v681 = vld [vmem:[#allocation8 + $0xef0] sm:$0xff]
    %v682 = vld [vmem:[#allocation8 + $0xef8] sm:$0xff]
    %v683 = vld [vmem:[#allocation8 + $0xf00] sm:$0xff]
    %v684 = vld [vmem:[#allocation8 + $0xf08] sm:$0xff]
    %v685 = vld [vmem:[#allocation8 + $0xf10] sm:$0xff]
    %v686 = vld [vmem:[#allocation8 + $0xf18] sm:$0xff]
    %v687 = vld [vmem:[#allocation8 + $0xf20] sm:$0xff]
    %v688 = vld [vmem:[#allocation8 + $0xf28] sm:$0xff]
    %v689 = vld [vmem:[#allocation8 + $0xf30] sm:$0xff]
    %v690 = vld [vmem:[#allocation8 + $0xf38] sm:$0xff]
    %v691 = vld [vmem:[#allocation8 + $0xf40] sm:$0xff]
    %v692 = vld [vmem:[#allocation8 + $0xf48] sm:$0xff]
    %v693 = vld [vmem:[#allocation8 + $0xf50] sm:$0xff]
    %v694 = vld [vmem:[#allocation8 + $0xf58] sm:$0xff]
    %v695 = vld [vmem:[#allocation8 + $0xf60] sm:$0xff]
    %v696 = vld [vmem:[#allocation8 + $0xf68] sm:$0xff]
    %v697 = vld [vmem:[#allocation8 + $0xf70] sm:$0xff]
    %v698 = vld [vmem:[#allocation8 + $0xf78] sm:$0xff]
    %v699 = vld [vmem:[#allocation8 + $0xf80] sm:$0xff]
    %v700 = vld [vmem:[#allocation8 + $0xf88] sm:$0xff]
    %v701 = vld [vmem:[#allocation8 + $0xf90] sm:$0xff]
    %v702 = vld [vmem:[#allocation8 + $0xf98] sm:$0xff]
    %v703 = vld [vmem:[#allocation8 + $0xfa0] sm:$0xff]
    %v704 = vld [vmem:[#allocation8 + $0xfa8] sm:$0xff]
    %v705 = vld [vmem:[#allocation8 + $0xfb0] sm:$0xff]
    %v706 = vld [vmem:[#allocation8 + $0xfb8] sm:$0xff]
    %v707 = vld [vmem:[#allocation8 + $0xfc0] sm:$0xff]
    %v708 = vld [vmem:[#allocation8 + $0xfc8] sm:$0xff]
    %v709 = vld [vmem:[#allocation8 + $0xfd0] sm:$0xff]
    %v710 = vld [vmem:[#allocation8 + $0xfd8] sm:$0xff]
    %v711 = vld [vmem:[#allocation8 + $0xfe0] sm:$0xff]
    %v712 = vld [vmem:[#allocation8 + $0xfe8] sm:$0xff]
    %v713 = vld [vmem:[#allocation8 + $0xff0] sm:$0xff]
    %v714 = vld [vmem:[#allocation8 + $0xff8] sm:$0xff]
    %v715 = vld [vmem:[#allocation8 + $0x1000] sm:$0xff]
    %v716 = vld [vmem:[#allocation8 + $0x1008] sm:$0xff]
    %v717 = vld [vmem:[#allocation8 + $0x1010] sm:$0xff]
    %v718 = vld [vmem:[#allocation8 + $0x1018] sm:$0xff]
    %v719 = vld [vmem:[#allocation8 + $0x1020] sm:$0xff]
    %v720 = vld [vmem:[#allocation8 + $0x1028] sm:$0xff]
    %v721 = vld [vmem:[#allocation8 + $0x1030] sm:$0xff]
    %v722 = vld [vmem:[#allocation8 + $0x1038] sm:$0xff]
    %v723 = vld [vmem:[#allocation8 + $0x1040] sm:$0xff]
    %v724 = vld [vmem:[#allocation8 + $0x1048] sm:$0xff]
    %v725 = vld [vmem:[#allocation8 + $0x1050] sm:$0xff]
    %v726 = vld [vmem:[#allocation8 + $0x1058] sm:$0xff]
    %v727 = vld [vmem:[#allocation8 + $0x1060] sm:$0xff]
    %v728 = vld [vmem:[#allocation8 + $0x1068] sm:$0xff]
    %v729 = vld [vmem:[#allocation8 + $0x1070] sm:$0xff]
    %v730 = vld [vmem:[#allocation8 + $0x1078] sm:$0xff]
    %v731 = vld [vmem:[#allocation8 + $0x1080] sm:$0xff]
    %v732 = vld [vmem:[#allocation8 + $0x1088] sm:$0xff]
    %v733 = vld [vmem:[#allocation8 + $0x1090] sm:$0xff]
    %v734 = vld [vmem:[#allocation8 + $0x1098] sm:$0xff]
    %v735 = vld [vmem:[#allocation8 + $0x10a0] sm:$0xff]
    %v736 = vld [vmem:[#allocation8 + $0x10a8] sm:$0xff]
    %v737 = vld [vmem:[#allocation8 + $0x10b0] sm:$0xff]
    %v738 = vld [vmem:[#allocation8 + $0x10b8] sm:$0xff]
    %v739 = vld [vmem:[#allocation8 + $0x10c0] sm:$0xff]
    %v740 = vld [vmem:[#allocation8 + $0x10c8] sm:$0xff]
    %v741 = vld [vmem:[#allocation8 + $0x10d0] sm:$0xff]
    %v742 = vld [vmem:[#allocation8 + $0x10d8] sm:$0xff]
    %v743 = vld [vmem:[#allocation8 + $0x10e0] sm:$0xff]
    %v744 = vld [vmem:[#allocation8 + $0x10e8] sm:$0xff]
    %v745 = vld [vmem:[#allocation8 + $0x10f0] sm:$0xff]
    %v746 = vld [vmem:[#allocation8 + $0x10f8] sm:$0xff]
    %v747 = vld [vmem:[#allocation8 + $0x1100] sm:$0xff]
    %v748 = vld [vmem:[#allocation8 + $0x1108] sm:$0xff]
    %v749 = vld [vmem:[#allocation8 + $0x1110] sm:$0xff]
    %v750 = vld [vmem:[#allocation8 + $0x1118] sm:$0xff]
    %v751 = vld [vmem:[#allocation8 + $0x1120] sm:$0xff]
    %v752 = vld [vmem:[#allocation8 + $0x1128] sm:$0xff]
    %v753 = vld [vmem:[#allocation8 + $0x1130] sm:$0xff]
    %v754 = vld [vmem:[#allocation8 + $0x1138] sm:$0xff]
    %v755 = vld [vmem:[#allocation8 + $0x1140] sm:$0xff]
    %v756 = vld [vmem:[#allocation8 + $0x1148] sm:$0xff]
    %v757 = vld [vmem:[#allocation8 + $0x1150] sm:$0xff]
    %v758 = vld [vmem:[#allocation8 + $0x1158] sm:$0xff]
    %v759 = vld [vmem:[#allocation8 + $0x1160] sm:$0xff]
    %v760 = vld [vmem:[#allocation8 + $0x1168] sm:$0xff]
    %v761 = vld [vmem:[#allocation8 + $0x1170] sm:$0xff]
    %v762 = vld [vmem:[#allocation8 + $0x1178] sm:$0xff]
    %v763 = vld [vmem:[#allocation8 + $0x1180] sm:$0xff]
    %v764 = vld [vmem:[#allocation8 + $0x1188] sm:$0xff]
    %v765 = vld [vmem:[#allocation8 + $0x1190] sm:$0xff]
    %v766 = vld [vmem:[#allocation8 + $0x1198] sm:$0xff]
    %v767 = vld [vmem:[#allocation8 + $0x11a0] sm:$0xff]
    %v768 = vld [vmem:[#allocation8 + $0x11a8] sm:$0xff]
    %v769 = vld [vmem:[#allocation8 + $0x11b0] sm:$0xff]
    %v770 = vld [vmem:[#allocation8 + $0x11b8] sm:$0xff]
    %v771 = vld [vmem:[#allocation8 + $0x11c0] sm:$0xff]
    %v772 = vld [vmem:[#allocation8 + $0x11c8] sm:$0xff]
    %v773 = vld [vmem:[#allocation8 + $0x11d0] sm:$0xff]
    %v774 = vld [vmem:[#allocation8 + $0x11d8] sm:$0xff]
    %v775 = vld [vmem:[#allocation8 + $0x11e0] sm:$0xff]
    %v776 = vld [vmem:[#allocation8 + $0x11e8] sm:$0xff]
    %v777 = vld [vmem:[#allocation8 + $0x11f0] sm:$0xff]
    %v778 = vld [vmem:[#allocation8 + $0x11f8] sm:$0xff]
    %v779 = vld [vmem:[#allocation8 + $0x1200] sm:$0xff]
    %v780 = vld [vmem:[#allocation8 + $0x1208] sm:$0xff]
    %v781 = vld [vmem:[#allocation8 + $0x1210] sm:$0xff]
    %v782 = vld [vmem:[#allocation8 + $0x1218] sm:$0xff]
    %v783 = vld [vmem:[#allocation8 + $0x1220] sm:$0xff]
    %v784 = vld [vmem:[#allocation8 + $0x1228] sm:$0xff]
    %v785 = vld [vmem:[#allocation8 + $0x1230] sm:$0xff]
    %v786 = vld [vmem:[#allocation8 + $0x1238] sm:$0xff]
    %v787 = vld [vmem:[#allocation8 + $0x1240] sm:$0xff]
    %v788 = vld [vmem:[#allocation8 + $0x1248] sm:$0xff]
    %v789 = vld [vmem:[#allocation8 + $0x1250] sm:$0xff]
    %v790 = vld [vmem:[#allocation8 + $0x1258] sm:$0xff]
    %v791 = vld [vmem:[#allocation8 + $0x1260] sm:$0xff]
    %v792 = vld [vmem:[#allocation8 + $0x1268] sm:$0xff]
    %v793 = vld [vmem:[#allocation8 + $0x1270] sm:$0xff]
    %v794 = vld [vmem:[#allocation8 + $0x1278] sm:$0xff]
    %v795 = vld [vmem:[#allocation8 + $0x1280] sm:$0xff]
    %v796 = vld [vmem:[#allocation8 + $0x1288] sm:$0xff]
    %v797 = vld [vmem:[#allocation8 + $0x1290] sm:$0xff]
    %v798 = vld [vmem:[#allocation8 + $0x1298] sm:$0xff]
    %v799 = vld [vmem:[#allocation8 + $0x12a0] sm:$0xff]
    %v800 = vld [vmem:[#allocation8 + $0x12a8] sm:$0xff]
    %v801 = vld [vmem:[#allocation8 + $0x12b0] sm:$0xff]
    %v802 = vld [vmem:[#allocation8 + $0x12b8] sm:$0xff]
    %v803 = vld [vmem:[#allocation8 + $0x12c0] sm:$0xff]
    %v804 = vld [vmem:[#allocation8 + $0x12c8] sm:$0xff]
    %v805 = vld [vmem:[#allocation8 + $0x12d0] sm:$0xff]
    %v806 = vld [vmem:[#allocation8 + $0x12d8] sm:$0xff]
    %v807 = vld [vmem:[#allocation8 + $0x12e0] sm:$0xff]
    %v808 = vld [vmem:[#allocation8 + $0x12e8] sm:$0xff]
    %v809 = vld [vmem:[#allocation8 + $0x12f0] sm:$0xff]
    %v810 = vld [vmem:[#allocation8 + $0x12f8] sm:$0xff]
    %v811 = vld [vmem:[#allocation8 + $0x1300] sm:$0xff]
    %v812 = vld [vmem:[#allocation8 + $0x1308] sm:$0xff]
    %v813 = vld [vmem:[#allocation8 + $0x1310] sm:$0xff]
    %v814 = vld [vmem:[#allocation8 + $0x1318] sm:$0xff]
    %v815 = vld [vmem:[#allocation8 + $0x1320] sm:$0xff]
    %v816 = vld [vmem:[#allocation8 + $0x1328] sm:$0xff]
    %v817 = vld [vmem:[#allocation8 + $0x1330] sm:$0xff]
    %v818 = vld [vmem:[#allocation8 + $0x1338] sm:$0xff]
    %v819 = vld [vmem:[#allocation8 + $0x1340] sm:$0xff]
    %v820 = vld [vmem:[#allocation8 + $0x1348] sm:$0xff]
    %v821 = vld [vmem:[#allocation8 + $0x1350] sm:$0xff]
    %v822 = vld [vmem:[#allocation8 + $0x1358] sm:$0xff]
    %v823 = vld [vmem:[#allocation8 + $0x1360] sm:$0xff]
    %v824 = vld [vmem:[#allocation8 + $0x1368] sm:$0xff]
    %v825 = vld [vmem:[#allocation8 + $0x1370] sm:$0xff]
    %v826 = vld [vmem:[#allocation8 + $0x1378] sm:$0xff]
    %v827 = vld [vmem:[#allocation8 + $0x1380] sm:$0xff]
    %v828 = vld [vmem:[#allocation8 + $0x1388] sm:$0xff]
    %v829 = vld [vmem:[#allocation8 + $0x1390] sm:$0xff]
    %v830 = vld [vmem:[#allocation8 + $0x1398] sm:$0xff]
    %v831 = vld [vmem:[#allocation8 + $0x13a0] sm:$0xff]
    %v832 = vld [vmem:[#allocation8 + $0x13a8] sm:$0xff]
    %v833 = vld [vmem:[#allocation8 + $0x13b0] sm:$0xff]
    %v834 = vld [vmem:[#allocation8 + $0x13b8] sm:$0xff]
    %v835 = vld [vmem:[#allocation8 + $0x13c0] sm:$0xff]
    %v836 = vld [vmem:[#allocation8 + $0x13c8] sm:$0xff]
    %v837 = vld [vmem:[#allocation8 + $0x13d0] sm:$0xff]
    %v838 = vld [vmem:[#allocation8 + $0x13d8] sm:$0xff]
    %v839 = vld [vmem:[#allocation8 + $0x13e0] sm:$0xff]
    %v840 = vld [vmem:[#allocation8 + $0x13e8] sm:$0xff]
    %v841 = vld [vmem:[#allocation8 + $0x13f0] sm:$0xff]
    %v842 = vld [vmem:[#allocation8 + $0x13f8] sm:$0xff]
    %v843 = vld [vmem:[#allocation8 + $0x1400] sm:$0xff]
    %v844 = vld [vmem:[#allocation8 + $0x1408] sm:$0xff]
    %v845 = vld [vmem:[#allocation8 + $0x1410] sm:$0xff]
    %v846 = vld [vmem:[#allocation8 + $0x1418] sm:$0xff]
    %v847 = vld [vmem:[#allocation8 + $0x1420] sm:$0xff]
    %v848 = vld [vmem:[#allocation8 + $0x1428] sm:$0xff]
    %v849 = vld [vmem:[#allocation8 + $0x1430] sm:$0xff]
    %v850 = vld [vmem:[#allocation8 + $0x1438] sm:$0xff]
    %v851 = vld [vmem:[#allocation8 + $0x1440] sm:$0xff]
    %v852 = vld [vmem:[#allocation8 + $0x1448] sm:$0xff]
    %v853 = vld [vmem:[#allocation8 + $0x1450] sm:$0xff]
    %v854 = vld [vmem:[#allocation8 + $0x1458] sm:$0xff]
    %v855 = vld [vmem:[#allocation8 + $0x1460] sm:$0xff]
    %v856 = vld [vmem:[#allocation8 + $0x1468] sm:$0xff]
    %v857 = vld [vmem:[#allocation8 + $0x1470] sm:$0xff]
    %v858 = vld [vmem:[#allocation8 + $0x1478] sm:$0xff]
    %v859 = vld [vmem:[#allocation8 + $0x1480] sm:$0xff]
    %v860 = vld [vmem:[#allocation8 + $0x1488] sm:$0xff]
    %v861 = vld [vmem:[#allocation8 + $0x1490] sm:$0xff]
    %v862 = vld [vmem:[#allocation8 + $0x1498] sm:$0xff]
    %v863 = vld [vmem:[#allocation8 + $0x14a0] sm:$0xff]
    %v864 = vld [vmem:[#allocation8 + $0x14a8] sm:$0xff]
    %v865 = vld [vmem:[#allocation8 + $0x14b0] sm:$0xff]
    %v866 = vld [vmem:[#allocation8 + $0x14b8] sm:$0xff]
    %v867 = vld [vmem:[#allocation8 + $0x14c0] sm:$0xff]
    %v868 = vld [vmem:[#allocation8 + $0x14c8] sm:$0xff]
    %v869 = vld [vmem:[#allocation8 + $0x14d0] sm:$0xff]
    %v870 = vld [vmem:[#allocation8 + $0x14d8] sm:$0xff]
    %v871 = vld [vmem:[#allocation8 + $0x14e0] sm:$0xff]
    %v872 = vld [vmem:[#allocation8 + $0x14e8] sm:$0xff]
    %v873 = vld [vmem:[#allocation8 + $0x14f0] sm:$0xff]
    %v874 = vld [vmem:[#allocation8 + $0x14f8] sm:$0xff]
    %v875 = vld [vmem:[#allocation8 + $0x1500] sm:$0xff]
    %v876 = vld [vmem:[#allocation8 + $0x1508] sm:$0xff]
    %v877 = vld [vmem:[#allocation8 + $0x1510] sm:$0xff]
    %v878 = vld [vmem:[#allocation8 + $0x1518] sm:$0xff]
    %v879 = vld [vmem:[#allocation8 + $0x1520] sm:$0xff]
    %v880 = vld [vmem:[#allocation8 + $0x1528] sm:$0xff]
    %v881 = vld [vmem:[#allocation8 + $0x1530] sm:$0xff]
    %v882 = vld [vmem:[#allocation8 + $0x1538] sm:$0xff]
    %v883 = vld [vmem:[#allocation8 + $0x1540] sm:$0xff]
    %v884 = vld [vmem:[#allocation8 + $0x1548] sm:$0xff]
    %v885 = vld [vmem:[#allocation8 + $0x1550] sm:$0xff]
    %v886 = vld [vmem:[#allocation8 + $0x1558] sm:$0xff]
    %v887 = vld [vmem:[#allocation8 + $0x1560] sm:$0xff]
    %v888 = vld [vmem:[#allocation8 + $0x1568] sm:$0xff]
    %v889 = vld [vmem:[#allocation8 + $0x1570] sm:$0xff]
    %v890 = vld [vmem:[#allocation8 + $0x1578] sm:$0xff]
    %v891 = vld [vmem:[#allocation8 + $0x1580] sm:$0xff]
    %v892 = vld [vmem:[#allocation8 + $0x1588] sm:$0xff]
    %v893 = vld [vmem:[#allocation8 + $0x1590] sm:$0xff]
    %v894 = vld [vmem:[#allocation8 + $0x1598] sm:$0xff]
    %v895 = vld [vmem:[#allocation8 + $0x15a0] sm:$0xff]
    %v896 = vld [vmem:[#allocation8 + $0x15a8] sm:$0xff]
    %v897 = vld [vmem:[#allocation8 + $0x15b0] sm:$0xff]
    %v898 = vld [vmem:[#allocation8 + $0x15b8] sm:$0xff]
    %v899 = vld [vmem:[#allocation8 + $0x15c0] sm:$0xff]
    %v900 = vld [vmem:[#allocation8 + $0x15c8] sm:$0xff]
    %v901 = vld [vmem:[#allocation8 + $0x15d0] sm:$0xff]
    %v902 = vld [vmem:[#allocation8 + $0x15d8] sm:$0xff]
    %v903 = vld [vmem:[#allocation8 + $0x15e0] sm:$0xff]
    %v904 = vld [vmem:[#allocation8 + $0x15e8] sm:$0xff]
    %v905 = vld [vmem:[#allocation8 + $0x15f0] sm:$0xff]
    %v906 = vld [vmem:[#allocation8 + $0x15f8] sm:$0xff]
    %v907 = vld [vmem:[#allocation8 + $0x1600] sm:$0xff]
    %v908 = vld [vmem:[#allocation8 + $0x1608] sm:$0xff]
    %v909 = vld [vmem:[#allocation8 + $0x1610] sm:$0xff]
    %v910 = vld [vmem:[#allocation8 + $0x1618] sm:$0xff]
    %v911 = vld [vmem:[#allocation8 + $0x1620] sm:$0xff]
    %v912 = vld [vmem:[#allocation8 + $0x1628] sm:$0xff]
    %v913 = vld [vmem:[#allocation8 + $0x1630] sm:$0xff]
    %v914 = vld [vmem:[#allocation8 + $0x1638] sm:$0xff]
    %v915 = vld [vmem:[#allocation8 + $0x1640] sm:$0xff]
    %v916 = vld [vmem:[#allocation8 + $0x1648] sm:$0xff]
    %v917 = vld [vmem:[#allocation8 + $0x1650] sm:$0xff]
    %v918 = vld [vmem:[#allocation8 + $0x1658] sm:$0xff]
    %v919 = vld [vmem:[#allocation8 + $0x1660] sm:$0xff]
    %v920 = vld [vmem:[#allocation8 + $0x1668] sm:$0xff]
    %v921 = vld [vmem:[#allocation8 + $0x1670] sm:$0xff]
    %v922 = vld [vmem:[#allocation8 + $0x1678] sm:$0xff]
    %v923 = vld [vmem:[#allocation8 + $0x1680] sm:$0xff]
    %v924 = vld [vmem:[#allocation8 + $0x1688] sm:$0xff]
    %v925 = vld [vmem:[#allocation8 + $0x1690] sm:$0xff]
    %v926 = vld [vmem:[#allocation8 + $0x1698] sm:$0xff]
    %v927 = vld [vmem:[#allocation8 + $0x16a0] sm:$0xff]
    %v928 = vld [vmem:[#allocation8 + $0x16a8] sm:$0xff]
    %v929 = vld [vmem:[#allocation8 + $0x16b0] sm:$0xff]
    %v930 = vld [vmem:[#allocation8 + $0x16b8] sm:$0xff]
    %v931 = vld [vmem:[#allocation8 + $0x16c0] sm:$0xff]
    %v932 = vld [vmem:[#allocation8 + $0x16c8] sm:$0xff]
    %v933 = vld [vmem:[#allocation8 + $0x16d0] sm:$0xff]
    %v934 = vld [vmem:[#allocation8 + $0x16d8] sm:$0xff]
    %v935 = vld [vmem:[#allocation8 + $0x16e0] sm:$0xff]
    %v936 = vld [vmem:[#allocation8 + $0x16e8] sm:$0xff]
    %v937 = vld [vmem:[#allocation8 + $0x16f0] sm:$0xff]
    %v938 = vld [vmem:[#allocation8 + $0x16f8] sm:$0xff]
    %v939 = vld [vmem:[#allocation8 + $0x1700] sm:$0xff]
    %v940 = vld [vmem:[#allocation8 + $0x1708] sm:$0xff]
    %v941 = vld [vmem:[#allocation8 + $0x1710] sm:$0xff]
    %v942 = vld [vmem:[#allocation8 + $0x1718] sm:$0xff]
    %v943 = vld [vmem:[#allocation8 + $0x1720] sm:$0xff]
    %v944 = vld [vmem:[#allocation8 + $0x1728] sm:$0xff]
    %v945 = vld [vmem:[#allocation8 + $0x1730] sm:$0xff]
    %v946 = vld [vmem:[#allocation8 + $0x1738] sm:$0xff]
    %v947 = vld [vmem:[#allocation8 + $0x1740] sm:$0xff]
    %v948 = vld [vmem:[#allocation8 + $0x1748] sm:$0xff]
    %v949 = vld [vmem:[#allocation8 + $0x1750] sm:$0xff]
    %v950 = vld [vmem:[#allocation8 + $0x1758] sm:$0xff]
    %v951 = vld [vmem:[#allocation8 + $0x1760] sm:$0xff]
    %v952 = vld [vmem:[#allocation8 + $0x1768] sm:$0xff]
    %v953 = vld [vmem:[#allocation8 + $0x1770] sm:$0xff]
    %v954 = vld [vmem:[#allocation8 + $0x1778] sm:$0xff]
    %v955 = vld [vmem:[#allocation8 + $0x1780] sm:$0xff]
    %v956 = vld [vmem:[#allocation8 + $0x1788] sm:$0xff]
    %v957 = vld [vmem:[#allocation8 + $0x1790] sm:$0xff]
    %v958 = vld [vmem:[#allocation8 + $0x1798] sm:$0xff]
    %v959 = vld [vmem:[#allocation8 + $0x17a0] sm:$0xff]
    %v960 = vld [vmem:[#allocation8 + $0x17a8] sm:$0xff]
    %v961 = vld [vmem:[#allocation8 + $0x17b0] sm:$0xff]
    %v962 = vld [vmem:[#allocation8 + $0x17b8] sm:$0xff]
    %v963 = vld [vmem:[#allocation8 + $0x17c0] sm:$0xff]
    %v964 = vld [vmem:[#allocation8 + $0x17c8] sm:$0xff]
    %v965 = vld [vmem:[#allocation8 + $0x17d0] sm:$0xff]
    %v966 = vld [vmem:[#allocation8 + $0x17d8] sm:$0xff]
    %v967 = vld [vmem:[#allocation8 + $0x17e0] sm:$0xff]
    %v968 = vld [vmem:[#allocation8 + $0x17e8] sm:$0xff]
    %v969 = vld [vmem:[#allocation8 + $0x17f0] sm:$0xff]
    %v970 = vld [vmem:[#allocation8 + $0x17f8] sm:$0xff]
    %v1739 = vunpack.c.l.b16 %v203
    %v1740 = vunpack.c.h.b16 %v203
    %v1741 = vunpack.c.l.b16 %v204
    %v1742 = vunpack.c.h.b16 %v204
    %v1743 = vunpack.c.l.b16 %v205
    %v1744 = vunpack.c.h.b16 %v205
    %v1745 = vunpack.c.l.b16 %v206
    %v1746 = vunpack.c.h.b16 %v206
    %v1747 = vunpack.c.l.b16 %v207
    %v1748 = vunpack.c.h.b16 %v207
    %v1749 = vunpack.c.l.b16 %v208
    %v1750 = vunpack.c.h.b16 %v208
    %v1751 = vunpack.c.l.b16 %v209
    %v1752 = vunpack.c.h.b16 %v209
    %v1753 = vunpack.c.l.b16 %v210
    %v1754 = vunpack.c.h.b16 %v210
    %v1755 = vunpack.c.l.b16 %v211
    %v1756 = vunpack.c.h.b16 %v211
    %v1757 = vunpack.c.l.b16 %v212
    %v1758 = vunpack.c.h.b16 %v212
    %v1759 = vunpack.c.l.b16 %v213
    %v1760 = vunpack.c.h.b16 %v213
    %v1761 = vunpack.c.l.b16 %v214
    %v1762 = vunpack.c.h.b16 %v214
    %v1763 = vunpack.c.l.b16 %v215
    %v1764 = vunpack.c.h.b16 %v215
    %v1765 = vunpack.c.l.b16 %v216
    %v1766 = vunpack.c.h.b16 %v216
    %v1767 = vunpack.c.l.b16 %v217
    %v1768 = vunpack.c.h.b16 %v217
    %v1769 = vunpack.c.l.b16 %v218
    %v1770 = vunpack.c.h.b16 %v218
    %v1771 = vunpack.c.l.b16 %v219
    %v1772 = vunpack.c.h.b16 %v219
    %v1773 = vunpack.c.l.b16 %v220
    %v1774 = vunpack.c.h.b16 %v220
    %v1775 = vunpack.c.l.b16 %v221
    %v1776 = vunpack.c.h.b16 %v221
    %v1777 = vunpack.c.l.b16 %v222
    %v1778 = vunpack.c.h.b16 %v222
    %v1779 = vunpack.c.l.b16 %v223
    %v1780 = vunpack.c.h.b16 %v223
    %v1781 = vunpack.c.l.b16 %v224
    %v1782 = vunpack.c.h.b16 %v224
    %v1783 = vunpack.c.l.b16 %v225
    %v1784 = vunpack.c.h.b16 %v225
    %v1785 = vunpack.c.l.b16 %v226
    %v1786 = vunpack.c.h.b16 %v226
    %v1787 = vunpack.c.l.b16 %v227
    %v1788 = vunpack.c.h.b16 %v227
    %v1789 = vunpack.c.l.b16 %v228
    %v1790 = vunpack.c.h.b16 %v228
    %v1791 = vunpack.c.l.b16 %v229
    %v1792 = vunpack.c.h.b16 %v229
    %v1793 = vunpack.c.l.b16 %v230
    %v1794 = vunpack.c.h.b16 %v230
    %v1795 = vunpack.c.l.b16 %v231
    %v1796 = vunpack.c.h.b16 %v231
    %v1797 = vunpack.c.l.b16 %v232
    %v1798 = vunpack.c.h.b16 %v232
    %v1799 = vunpack.c.l.b16 %v233
    %v1800 = vunpack.c.h.b16 %v233
    %v1801 = vunpack.c.l.b16 %v234
    %v1802 = vunpack.c.h.b16 %v234
    %v1803 = vunpack.c.l.b16 %v235
    %v1804 = vunpack.c.h.b16 %v235
    %v1805 = vunpack.c.l.b16 %v236
    %v1806 = vunpack.c.h.b16 %v236
    %v1807 = vunpack.c.l.b16 %v237
    %v1808 = vunpack.c.h.b16 %v237
    %v1809 = vunpack.c.l.b16 %v238
    %v1810 = vunpack.c.h.b16 %v238
    %v1811 = vunpack.c.l.b16 %v239
    %v1812 = vunpack.c.h.b16 %v239
    %v1813 = vunpack.c.l.b16 %v240
    %v1814 = vunpack.c.h.b16 %v240
    %v1815 = vunpack.c.l.b16 %v241
    %v1816 = vunpack.c.h.b16 %v241
    %v1817 = vunpack.c.l.b16 %v242
    %v1818 = vunpack.c.h.b16 %v242
    %v1819 = vunpack.c.l.b16 %v243
    %v1820 = vunpack.c.h.b16 %v243
    %v1821 = vunpack.c.l.b16 %v244
    %v1822 = vunpack.c.h.b16 %v244
    %v1823 = vunpack.c.l.b16 %v245
    %v1824 = vunpack.c.h.b16 %v245
    %v1825 = vunpack.c.l.b16 %v246
    %v1826 = vunpack.c.h.b16 %v246
    %v1827 = vunpack.c.l.b16 %v247
    %v1828 = vunpack.c.h.b16 %v247
    %v1829 = vunpack.c.l.b16 %v248
    %v1830 = vunpack.c.h.b16 %v248
    %v1831 = vunpack.c.l.b16 %v249
    %v1832 = vunpack.c.h.b16 %v249
    %v1833 = vunpack.c.l.b16 %v250
    %v1834 = vunpack.c.h.b16 %v250
    %v1835 = vunpack.c.l.b16 %v251
    %v1836 = vunpack.c.h.b16 %v251
    %v1837 = vunpack.c.l.b16 %v252
    %v1838 = vunpack.c.h.b16 %v252
    %v1839 = vunpack.c.l.b16 %v253
    %v1840 = vunpack.c.h.b16 %v253
    %v1841 = vunpack.c.l.b16 %v254
    %v1842 = vunpack.c.h.b16 %v254
    %v1843 = vunpack.c.l.b16 %v255
    %v1844 = vunpack.c.h.b16 %v255
    %v1845 = vunpack.c.l.b16 %v256
    %v1846 = vunpack.c.h.b16 %v256
    %v1847 = vunpack.c.l.b16 %v257
    %v1848 = vunpack.c.h.b16 %v257
    %v1849 = vunpack.c.l.b16 %v258
    %v1850 = vunpack.c.h.b16 %v258
    %v1851 = vunpack.c.l.b16 %v259
    %v1852 = vunpack.c.h.b16 %v259
    %v1853 = vunpack.c.l.b16 %v260
    %v1854 = vunpack.c.h.b16 %v260
    %v1855 = vunpack.c.l.b16 %v261
    %v1856 = vunpack.c.h.b16 %v261
    %v1857 = vunpack.c.l.b16 %v262
    %v1858 = vunpack.c.h.b16 %v262
    %v1859 = vunpack.c.l.b16 %v263
    %v1860 = vunpack.c.h.b16 %v263
    %v1861 = vunpack.c.l.b16 %v264
    %v1862 = vunpack.c.h.b16 %v264
    %v1863 = vunpack.c.l.b16 %v265
    %v1864 = vunpack.c.h.b16 %v265
    %v1865 = vunpack.c.l.b16 %v266
    %v1866 = vunpack.c.h.b16 %v266
    %v1867 = vunpack.c.l.b16 %v267
    %v1868 = vunpack.c.h.b16 %v267
    %v1869 = vunpack.c.l.b16 %v268
    %v1870 = vunpack.c.h.b16 %v268
    %v1871 = vunpack.c.l.b16 %v269
    %v1872 = vunpack.c.h.b16 %v269
    %v1873 = vunpack.c.l.b16 %v270
    %v1874 = vunpack.c.h.b16 %v270
    %v1875 = vunpack.c.l.b16 %v271
    %v1876 = vunpack.c.h.b16 %v271
    %v1877 = vunpack.c.l.b16 %v272
    %v1878 = vunpack.c.h.b16 %v272
    %v1879 = vunpack.c.l.b16 %v273
    %v1880 = vunpack.c.h.b16 %v273
    %v1881 = vunpack.c.l.b16 %v274
    %v1882 = vunpack.c.h.b16 %v274
    %v1883 = vunpack.c.l.b16 %v275
    %v1884 = vunpack.c.h.b16 %v275
    %v1885 = vunpack.c.l.b16 %v276
    %v1886 = vunpack.c.h.b16 %v276
    %v1887 = vunpack.c.l.b16 %v277
    %v1888 = vunpack.c.h.b16 %v277
    %v1889 = vunpack.c.l.b16 %v278
    %v1890 = vunpack.c.h.b16 %v278
    %v1891 = vunpack.c.l.b16 %v279
    %v1892 = vunpack.c.h.b16 %v279
    %v1893 = vunpack.c.l.b16 %v280
    %v1894 = vunpack.c.h.b16 %v280
    %v1895 = vunpack.c.l.b16 %v281
    %v1896 = vunpack.c.h.b16 %v281
    %v1897 = vunpack.c.l.b16 %v282
    %v1898 = vunpack.c.h.b16 %v282
    %v1899 = vunpack.c.l.b16 %v283
    %v1900 = vunpack.c.h.b16 %v283
    %v1901 = vunpack.c.l.b16 %v284
    %v1902 = vunpack.c.h.b16 %v284
    %v1903 = vunpack.c.l.b16 %v285
    %v1904 = vunpack.c.h.b16 %v285
    %v1905 = vunpack.c.l.b16 %v286
    %v1906 = vunpack.c.h.b16 %v286
    %v1907 = vunpack.c.l.b16 %v287
    %v1908 = vunpack.c.h.b16 %v287
    %v1909 = vunpack.c.l.b16 %v288
    %v1910 = vunpack.c.h.b16 %v288
    %v1911 = vunpack.c.l.b16 %v289
    %v1912 = vunpack.c.h.b16 %v289
    %v1913 = vunpack.c.l.b16 %v290
    %v1914 = vunpack.c.h.b16 %v290
    %v1915 = vunpack.c.l.b16 %v291
    %v1916 = vunpack.c.h.b16 %v291
    %v1917 = vunpack.c.l.b16 %v292
    %v1918 = vunpack.c.h.b16 %v292
    %v1919 = vunpack.c.l.b16 %v293
    %v1920 = vunpack.c.h.b16 %v293
    %v1921 = vunpack.c.l.b16 %v294
    %v1922 = vunpack.c.h.b16 %v294
    %v1923 = vunpack.c.l.b16 %v295
    %v1924 = vunpack.c.h.b16 %v295
    %v1925 = vunpack.c.l.b16 %v296
    %v1926 = vunpack.c.h.b16 %v296
    %v1927 = vunpack.c.l.b16 %v297
    %v1928 = vunpack.c.h.b16 %v297
    %v1929 = vunpack.c.l.b16 %v298
    %v1930 = vunpack.c.h.b16 %v298
    %v1931 = vunpack.c.l.b16 %v299
    %v1932 = vunpack.c.h.b16 %v299
    %v1933 = vunpack.c.l.b16 %v300
    %v1934 = vunpack.c.h.b16 %v300
    %v1935 = vunpack.c.l.b16 %v301
    %v1936 = vunpack.c.h.b16 %v301
    %v1937 = vunpack.c.l.b16 %v302
    %v1938 = vunpack.c.h.b16 %v302
    %v1939 = vunpack.c.l.b16 %v303
    %v1940 = vunpack.c.h.b16 %v303
    %v1941 = vunpack.c.l.b16 %v304
    %v1942 = vunpack.c.h.b16 %v304
    %v1943 = vunpack.c.l.b16 %v305
    %v1944 = vunpack.c.h.b16 %v305
    %v1945 = vunpack.c.l.b16 %v306
    %v1946 = vunpack.c.h.b16 %v306
    %v1947 = vunpack.c.l.b16 %v307
    %v1948 = vunpack.c.h.b16 %v307
    %v1949 = vunpack.c.l.b16 %v308
    %v1950 = vunpack.c.h.b16 %v308
    %v1951 = vunpack.c.l.b16 %v309
    %v1952 = vunpack.c.h.b16 %v309
    %v1953 = vunpack.c.l.b16 %v310
    %v1954 = vunpack.c.h.b16 %v310
    %v1955 = vunpack.c.l.b16 %v311
    %v1956 = vunpack.c.h.b16 %v311
    %v1957 = vunpack.c.l.b16 %v312
    %v1958 = vunpack.c.h.b16 %v312
    %v1959 = vunpack.c.l.b16 %v313
    %v1960 = vunpack.c.h.b16 %v313
    %v1961 = vunpack.c.l.b16 %v314
    %v1962 = vunpack.c.h.b16 %v314
    %v1963 = vunpack.c.l.b16 %v315
    %v1964 = vunpack.c.h.b16 %v315
    %v1965 = vunpack.c.l.b16 %v316
    %v1966 = vunpack.c.h.b16 %v316
    %v1967 = vunpack.c.l.b16 %v317
    %v1968 = vunpack.c.h.b16 %v317
    %v1969 = vunpack.c.l.b16 %v318
    %v1970 = vunpack.c.h.b16 %v318
    %v1971 = vunpack.c.l.b16 %v319
    %v1972 = vunpack.c.h.b16 %v319
    %v1973 = vunpack.c.l.b16 %v320
    %v1974 = vunpack.c.h.b16 %v320
    %v1975 = vunpack.c.l.b16 %v321
    %v1976 = vunpack.c.h.b16 %v321
    %v1977 = vunpack.c.l.b16 %v322
    %v1978 = vunpack.c.h.b16 %v322
    %v1979 = vunpack.c.l.b16 %v323
    %v1980 = vunpack.c.h.b16 %v323
    %v1981 = vunpack.c.l.b16 %v324
    %v1982 = vunpack.c.h.b16 %v324
    %v1983 = vunpack.c.l.b16 %v325
    %v1984 = vunpack.c.h.b16 %v325
    %v1985 = vunpack.c.l.b16 %v326
    %v1986 = vunpack.c.h.b16 %v326
    %v1987 = vunpack.c.l.b16 %v327
    %v1988 = vunpack.c.h.b16 %v327
    %v1989 = vunpack.c.l.b16 %v328
    %v1990 = vunpack.c.h.b16 %v328
    %v1991 = vunpack.c.l.b16 %v329
    %v1992 = vunpack.c.h.b16 %v329
    %v1993 = vunpack.c.l.b16 %v330
    %v1994 = vunpack.c.h.b16 %v330
    %v1995 = vunpack.c.l.b16 %v331
    %v1996 = vunpack.c.h.b16 %v331
    %v1997 = vunpack.c.l.b16 %v332
    %v1998 = vunpack.c.h.b16 %v332
    %v1999 = vunpack.c.l.b16 %v333
    %v2000 = vunpack.c.h.b16 %v333
    %v2001 = vunpack.c.l.b16 %v334
    %v2002 = vunpack.c.h.b16 %v334
    %v2003 = vunpack.c.l.b16 %v335
    %v2004 = vunpack.c.h.b16 %v335
    %v2005 = vunpack.c.l.b16 %v336
    %v2006 = vunpack.c.h.b16 %v336
    %v2007 = vunpack.c.l.b16 %v337
    %v2008 = vunpack.c.h.b16 %v337
    %v2009 = vunpack.c.l.b16 %v338
    %v2010 = vunpack.c.h.b16 %v338
    %v2011 = vunpack.c.l.b16 %v339
    %v2012 = vunpack.c.h.b16 %v339
    %v2013 = vunpack.c.l.b16 %v340
    %v2014 = vunpack.c.h.b16 %v340
    %v2015 = vunpack.c.l.b16 %v341
    %v2016 = vunpack.c.h.b16 %v341
    %v2017 = vunpack.c.l.b16 %v342
    %v2018 = vunpack.c.h.b16 %v342
    %v2019 = vunpack.c.l.b16 %v343
    %v2020 = vunpack.c.h.b16 %v343
    %v2021 = vunpack.c.l.b16 %v344
    %v2022 = vunpack.c.h.b16 %v344
    %v2023 = vunpack.c.l.b16 %v345
    %v2024 = vunpack.c.h.b16 %v345
    %v2025 = vunpack.c.l.b16 %v346
    %v2026 = vunpack.c.h.b16 %v346
    %v2027 = vunpack.c.l.b16 %v347
    %v2028 = vunpack.c.h.b16 %v347
    %v2029 = vunpack.c.l.b16 %v348
    %v2030 = vunpack.c.h.b16 %v348
    %v2031 = vunpack.c.l.b16 %v349
    %v2032 = vunpack.c.h.b16 %v349
    %v2033 = vunpack.c.l.b16 %v350
    %v2034 = vunpack.c.h.b16 %v350
    %v2035 = vunpack.c.l.b16 %v351
    %v2036 = vunpack.c.h.b16 %v351
    %v2037 = vunpack.c.l.b16 %v352
    %v2038 = vunpack.c.h.b16 %v352
    %v2039 = vunpack.c.l.b16 %v353
    %v2040 = vunpack.c.h.b16 %v353
    %v2041 = vunpack.c.l.b16 %v354
    %v2042 = vunpack.c.h.b16 %v354
    %v2043 = vunpack.c.l.b16 %v355
    %v2044 = vunpack.c.h.b16 %v355
    %v2045 = vunpack.c.l.b16 %v356
    %v2046 = vunpack.c.h.b16 %v356
    %v2047 = vunpack.c.l.b16 %v357
    %v2048 = vunpack.c.h.b16 %v357
    %v2049 = vunpack.c.l.b16 %v358
    %v2050 = vunpack.c.h.b16 %v358
    %v2051 = vunpack.c.l.b16 %v359
    %v2052 = vunpack.c.h.b16 %v359
    %v2053 = vunpack.c.l.b16 %v360
    %v2054 = vunpack.c.h.b16 %v360
    %v2055 = vunpack.c.l.b16 %v361
    %v2056 = vunpack.c.h.b16 %v361
    %v2057 = vunpack.c.l.b16 %v362
    %v2058 = vunpack.c.h.b16 %v362
    %v2059 = vunpack.c.l.b16 %v363
    %v2060 = vunpack.c.h.b16 %v363
    %v2061 = vunpack.c.l.b16 %v364
    %v2062 = vunpack.c.h.b16 %v364
    %v2063 = vunpack.c.l.b16 %v365
    %v2064 = vunpack.c.h.b16 %v365
    %v2065 = vunpack.c.l.b16 %v366
    %v2066 = vunpack.c.h.b16 %v366
    %v2067 = vunpack.c.l.b16 %v367
    %v2068 = vunpack.c.h.b16 %v367
    %v2069 = vunpack.c.l.b16 %v368
    %v2070 = vunpack.c.h.b16 %v368
    %v2071 = vunpack.c.l.b16 %v369
    %v2072 = vunpack.c.h.b16 %v369
    %v2073 = vunpack.c.l.b16 %v370
    %v2074 = vunpack.c.h.b16 %v370
    %v2075 = vunpack.c.l.b16 %v371
    %v2076 = vunpack.c.h.b16 %v371
    %v2077 = vunpack.c.l.b16 %v372
    %v2078 = vunpack.c.h.b16 %v372
    %v2079 = vunpack.c.l.b16 %v373
    %v2080 = vunpack.c.h.b16 %v373
    %v2081 = vunpack.c.l.b16 %v374
    %v2082 = vunpack.c.h.b16 %v374
    %v2083 = vunpack.c.l.b16 %v375
    %v2084 = vunpack.c.h.b16 %v375
    %v2085 = vunpack.c.l.b16 %v376
    %v2086 = vunpack.c.h.b16 %v376
    %v2087 = vunpack.c.l.b16 %v377
    %v2088 = vunpack.c.h.b16 %v377
    %v2089 = vunpack.c.l.b16 %v378
    %v2090 = vunpack.c.h.b16 %v378
    %v2091 = vunpack.c.l.b16 %v379
    %v2092 = vunpack.c.h.b16 %v379
    %v2093 = vunpack.c.l.b16 %v380
    %v2094 = vunpack.c.h.b16 %v380
    %v2095 = vunpack.c.l.b16 %v381
    %v2096 = vunpack.c.h.b16 %v381
    %v2097 = vunpack.c.l.b16 %v382
    %v2098 = vunpack.c.h.b16 %v382
    %v2099 = vunpack.c.l.b16 %v383
    %v2100 = vunpack.c.h.b16 %v383
    %v2101 = vunpack.c.l.b16 %v384
    %v2102 = vunpack.c.h.b16 %v384
    %v2103 = vunpack.c.l.b16 %v385
    %v2104 = vunpack.c.h.b16 %v385
    %v2105 = vunpack.c.l.b16 %v386
    %v2106 = vunpack.c.h.b16 %v386
    %v2107 = vunpack.c.l.b16 %v387
    %v2108 = vunpack.c.h.b16 %v387
    %v2109 = vunpack.c.l.b16 %v388
    %v2110 = vunpack.c.h.b16 %v388
    %v2111 = vunpack.c.l.b16 %v389
    %v2112 = vunpack.c.h.b16 %v389
    %v2113 = vunpack.c.l.b16 %v390
    %v2114 = vunpack.c.h.b16 %v390
    %v2115 = vunpack.c.l.b16 %v391
    %v2116 = vunpack.c.h.b16 %v391
    %v2117 = vunpack.c.l.b16 %v392
    %v2118 = vunpack.c.h.b16 %v392
    %v2119 = vunpack.c.l.b16 %v393
    %v2120 = vunpack.c.h.b16 %v393
    %v2121 = vunpack.c.l.b16 %v394
    %v2122 = vunpack.c.h.b16 %v394
    %v2123 = vunpack.c.l.b16 %v395
    %v2124 = vunpack.c.h.b16 %v395
    %v2125 = vunpack.c.l.b16 %v396
    %v2126 = vunpack.c.h.b16 %v396
    %v2127 = vunpack.c.l.b16 %v397
    %v2128 = vunpack.c.h.b16 %v397
    %v2129 = vunpack.c.l.b16 %v398
    %v2130 = vunpack.c.h.b16 %v398
    %v2131 = vunpack.c.l.b16 %v399
    %v2132 = vunpack.c.h.b16 %v399
    %v2133 = vunpack.c.l.b16 %v400
    %v2134 = vunpack.c.h.b16 %v400
    %v2135 = vunpack.c.l.b16 %v401
    %v2136 = vunpack.c.h.b16 %v401
    %v2137 = vunpack.c.l.b16 %v402
    %v2138 = vunpack.c.h.b16 %v402
    %v2139 = vunpack.c.l.b16 %v403
    %v2140 = vunpack.c.h.b16 %v403
    %v2141 = vunpack.c.l.b16 %v404
    %v2142 = vunpack.c.h.b16 %v404
    %v2143 = vunpack.c.l.b16 %v405
    %v2144 = vunpack.c.h.b16 %v405
    %v2145 = vunpack.c.l.b16 %v406
    %v2146 = vunpack.c.h.b16 %v406
    %v2147 = vunpack.c.l.b16 %v407
    %v2148 = vunpack.c.h.b16 %v407
    %v2149 = vunpack.c.l.b16 %v408
    %v2150 = vunpack.c.h.b16 %v408
    %v2151 = vunpack.c.l.b16 %v409
    %v2152 = vunpack.c.h.b16 %v409
    %v2153 = vunpack.c.l.b16 %v410
    %v2154 = vunpack.c.h.b16 %v410
    %v2155 = vunpack.c.l.b16 %v411
    %v2156 = vunpack.c.h.b16 %v411
    %v2157 = vunpack.c.l.b16 %v412
    %v2158 = vunpack.c.h.b16 %v412
    %v2159 = vunpack.c.l.b16 %v413
    %v2160 = vunpack.c.h.b16 %v413
    %v2161 = vunpack.c.l.b16 %v414
    %v2162 = vunpack.c.h.b16 %v414
    %v2163 = vunpack.c.l.b16 %v415
    %v2164 = vunpack.c.h.b16 %v415
    %v2165 = vunpack.c.l.b16 %v416
    %v2166 = vunpack.c.h.b16 %v416
    %v2167 = vunpack.c.l.b16 %v417
    %v2168 = vunpack.c.h.b16 %v417
    %v2169 = vunpack.c.l.b16 %v418
    %v2170 = vunpack.c.h.b16 %v418
    %v2171 = vunpack.c.l.b16 %v419
    %v2172 = vunpack.c.h.b16 %v419
    %v2173 = vunpack.c.l.b16 %v420
    %v2174 = vunpack.c.h.b16 %v420
    %v2175 = vunpack.c.l.b16 %v421
    %v2176 = vunpack.c.h.b16 %v421
    %v2177 = vunpack.c.l.b16 %v422
    %v2178 = vunpack.c.h.b16 %v422
    %v2179 = vunpack.c.l.b16 %v423
    %v2180 = vunpack.c.h.b16 %v423
    %v2181 = vunpack.c.l.b16 %v424
    %v2182 = vunpack.c.h.b16 %v424
    %v2183 = vunpack.c.l.b16 %v425
    %v2184 = vunpack.c.h.b16 %v425
    %v2185 = vunpack.c.l.b16 %v426
    %v2186 = vunpack.c.h.b16 %v426
    %v2187 = vunpack.c.l.b16 %v427
    %v2188 = vunpack.c.h.b16 %v427
    %v2189 = vunpack.c.l.b16 %v428
    %v2190 = vunpack.c.h.b16 %v428
    %v2191 = vunpack.c.l.b16 %v429
    %v2192 = vunpack.c.h.b16 %v429
    %v2193 = vunpack.c.l.b16 %v430
    %v2194 = vunpack.c.h.b16 %v430
    %v2195 = vunpack.c.l.b16 %v431
    %v2196 = vunpack.c.h.b16 %v431
    %v2197 = vunpack.c.l.b16 %v432
    %v2198 = vunpack.c.h.b16 %v432
    %v2199 = vunpack.c.l.b16 %v433
    %v2200 = vunpack.c.h.b16 %v433
    %v2201 = vunpack.c.l.b16 %v434
    %v2202 = vunpack.c.h.b16 %v434
    %v2203 = vunpack.c.l.b16 %v435
    %v2204 = vunpack.c.h.b16 %v435
    %v2205 = vunpack.c.l.b16 %v436
    %v2206 = vunpack.c.h.b16 %v436
    %v2207 = vunpack.c.l.b16 %v437
    %v2208 = vunpack.c.h.b16 %v437
    %v2209 = vunpack.c.l.b16 %v438
    %v2210 = vunpack.c.h.b16 %v438
    %v2211 = vunpack.c.l.b16 %v439
    %v2212 = vunpack.c.h.b16 %v439
    %v2213 = vunpack.c.l.b16 %v440
    %v2214 = vunpack.c.h.b16 %v440
    %v2215 = vunpack.c.l.b16 %v441
    %v2216 = vunpack.c.h.b16 %v441
    %v2217 = vunpack.c.l.b16 %v442
    %v2218 = vunpack.c.h.b16 %v442
    %v2219 = vunpack.c.l.b16 %v443
    %v2220 = vunpack.c.h.b16 %v443
    %v2221 = vunpack.c.l.b16 %v444
    %v2222 = vunpack.c.h.b16 %v444
    %v2223 = vunpack.c.l.b16 %v445
    %v2224 = vunpack.c.h.b16 %v445
    %v2225 = vunpack.c.l.b16 %v446
    %v2226 = vunpack.c.h.b16 %v446
    %v2227 = vunpack.c.l.b16 %v447
    %v2228 = vunpack.c.h.b16 %v447
    %v2229 = vunpack.c.l.b16 %v448
    %v2230 = vunpack.c.h.b16 %v448
    %v2231 = vunpack.c.l.b16 %v449
    %v2232 = vunpack.c.h.b16 %v449
    %v2233 = vunpack.c.l.b16 %v450
    %v2234 = vunpack.c.h.b16 %v450
    %v2235 = vunpack.c.l.b16 %v451
    %v2236 = vunpack.c.h.b16 %v451
    %v2237 = vunpack.c.l.b16 %v452
    %v2238 = vunpack.c.h.b16 %v452
    %v2239 = vunpack.c.l.b16 %v453
    %v2240 = vunpack.c.h.b16 %v453
    %v2241 = vunpack.c.l.b16 %v454
    %v2242 = vunpack.c.h.b16 %v454
    %v2243 = vunpack.c.l.b16 %v455
    %v2244 = vunpack.c.h.b16 %v455
    %v2245 = vunpack.c.l.b16 %v456
    %v2246 = vunpack.c.h.b16 %v456
    %v2247 = vunpack.c.l.b16 %v457
    %v2248 = vunpack.c.h.b16 %v457
    %v2249 = vunpack.c.l.b16 %v458
    %v2250 = vunpack.c.h.b16 %v458
    %v2251 = vunpack.c.l.b16 %v459
    %v2252 = vunpack.c.h.b16 %v459
    %v2253 = vunpack.c.l.b16 %v460
    %v2254 = vunpack.c.h.b16 %v460
    %v2255 = vunpack.c.l.b16 %v461
    %v2256 = vunpack.c.h.b16 %v461
    %v2257 = vunpack.c.l.b16 %v462
    %v2258 = vunpack.c.h.b16 %v462
    %v2259 = vunpack.c.l.b16 %v463
    %v2260 = vunpack.c.h.b16 %v463
    %v2261 = vunpack.c.l.b16 %v464
    %v2262 = vunpack.c.h.b16 %v464
    %v2263 = vunpack.c.l.b16 %v465
    %v2264 = vunpack.c.h.b16 %v465
    %v2265 = vunpack.c.l.b16 %v466
    %v2266 = vunpack.c.h.b16 %v466
    %v2267 = vunpack.c.l.b16 %v467
    %v2268 = vunpack.c.h.b16 %v467
    %v2269 = vunpack.c.l.b16 %v468
    %v2270 = vunpack.c.h.b16 %v468
    %v2271 = vunpack.c.l.b16 %v469
    %v2272 = vunpack.c.h.b16 %v469
    %v2273 = vunpack.c.l.b16 %v470
    %v2274 = vunpack.c.h.b16 %v470
    %v2275 = vunpack.c.l.b16 %v471
    %v2276 = vunpack.c.h.b16 %v471
    %v2277 = vunpack.c.l.b16 %v472
    %v2278 = vunpack.c.h.b16 %v472
    %v2279 = vunpack.c.l.b16 %v473
    %v2280 = vunpack.c.h.b16 %v473
    %v2281 = vunpack.c.l.b16 %v474
    %v2282 = vunpack.c.h.b16 %v474
    %v2283 = vunpack.c.l.b16 %v475
    %v2284 = vunpack.c.h.b16 %v475
    %v2285 = vunpack.c.l.b16 %v476
    %v2286 = vunpack.c.h.b16 %v476
    %v2287 = vunpack.c.l.b16 %v477
    %v2288 = vunpack.c.h.b16 %v477
    %v2289 = vunpack.c.l.b16 %v478
    %v2290 = vunpack.c.h.b16 %v478
    %v2291 = vunpack.c.l.b16 %v479
    %v2292 = vunpack.c.h.b16 %v479
    %v2293 = vunpack.c.l.b16 %v480
    %v2294 = vunpack.c.h.b16 %v480
    %v2295 = vunpack.c.l.b16 %v481
    %v2296 = vunpack.c.h.b16 %v481
    %v2297 = vunpack.c.l.b16 %v482
    %v2298 = vunpack.c.h.b16 %v482
    %v2299 = vunpack.c.l.b16 %v483
    %v2300 = vunpack.c.h.b16 %v483
    %v2301 = vunpack.c.l.b16 %v484
    %v2302 = vunpack.c.h.b16 %v484
    %v2303 = vunpack.c.l.b16 %v485
    %v2304 = vunpack.c.h.b16 %v485
    %v2305 = vunpack.c.l.b16 %v486
    %v2306 = vunpack.c.h.b16 %v486
    %v2307 = vunpack.c.l.b16 %v487
    %v2308 = vunpack.c.h.b16 %v487
    %v2309 = vunpack.c.l.b16 %v488
    %v2310 = vunpack.c.h.b16 %v488
    %v2311 = vunpack.c.l.b16 %v489
    %v2312 = vunpack.c.h.b16 %v489
    %v2313 = vunpack.c.l.b16 %v490
    %v2314 = vunpack.c.h.b16 %v490
    %v2315 = vunpack.c.l.b16 %v491
    %v2316 = vunpack.c.h.b16 %v491
    %v2317 = vunpack.c.l.b16 %v492
    %v2318 = vunpack.c.h.b16 %v492
    %v2319 = vunpack.c.l.b16 %v493
    %v2320 = vunpack.c.h.b16 %v493
    %v2321 = vunpack.c.l.b16 %v494
    %v2322 = vunpack.c.h.b16 %v494
    %v2323 = vunpack.c.l.b16 %v495
    %v2324 = vunpack.c.h.b16 %v495
    %v2325 = vunpack.c.l.b16 %v496
    %v2326 = vunpack.c.h.b16 %v496
    %v2327 = vunpack.c.l.b16 %v497
    %v2328 = vunpack.c.h.b16 %v497
    %v2329 = vunpack.c.l.b16 %v498
    %v2330 = vunpack.c.h.b16 %v498
    %v2331 = vunpack.c.l.b16 %v499
    %v2332 = vunpack.c.h.b16 %v499
    %v2333 = vunpack.c.l.b16 %v500
    %v2334 = vunpack.c.h.b16 %v500
    %v2335 = vunpack.c.l.b16 %v501
    %v2336 = vunpack.c.h.b16 %v501
    %v2337 = vunpack.c.l.b16 %v502
    %v2338 = vunpack.c.h.b16 %v502
    %v2339 = vunpack.c.l.b16 %v503
    %v2340 = vunpack.c.h.b16 %v503
    %v2341 = vunpack.c.l.b16 %v504
    %v2342 = vunpack.c.h.b16 %v504
    %v2343 = vunpack.c.l.b16 %v505
    %v2344 = vunpack.c.h.b16 %v505
    %v2345 = vunpack.c.l.b16 %v506
    %v2346 = vunpack.c.h.b16 %v506
    %v2347 = vunpack.c.l.b16 %v507
    %v2348 = vunpack.c.h.b16 %v507
    %v2349 = vunpack.c.l.b16 %v508
    %v2350 = vunpack.c.h.b16 %v508
    %v2351 = vunpack.c.l.b16 %v509
    %v2352 = vunpack.c.h.b16 %v509
    %v2353 = vunpack.c.l.b16 %v510
    %v2354 = vunpack.c.h.b16 %v510
    %v2355 = vunpack.c.l.b16 %v511
    %v2356 = vunpack.c.h.b16 %v511
    %v2357 = vunpack.c.l.b16 %v512
    %v2358 = vunpack.c.h.b16 %v512
    %v2359 = vunpack.c.l.b16 %v513
    %v2360 = vunpack.c.h.b16 %v513
    %v2361 = vunpack.c.l.b16 %v514
    %v2362 = vunpack.c.h.b16 %v514
    %v2363 = vunpack.c.l.b16 %v515
    %v2364 = vunpack.c.h.b16 %v515
    %v2365 = vunpack.c.l.b16 %v516
    %v2366 = vunpack.c.h.b16 %v516
    %v2367 = vunpack.c.l.b16 %v517
    %v2368 = vunpack.c.h.b16 %v517
    %v2369 = vunpack.c.l.b16 %v518
    %v2370 = vunpack.c.h.b16 %v518
    %v2371 = vunpack.c.l.b16 %v519
    %v2372 = vunpack.c.h.b16 %v519
    %v2373 = vunpack.c.l.b16 %v520
    %v2374 = vunpack.c.h.b16 %v520
    %v2375 = vunpack.c.l.b16 %v521
    %v2376 = vunpack.c.h.b16 %v521
    %v2377 = vunpack.c.l.b16 %v522
    %v2378 = vunpack.c.h.b16 %v522
    %v2379 = vunpack.c.l.b16 %v523
    %v2380 = vunpack.c.h.b16 %v523
    %v2381 = vunpack.c.l.b16 %v524
    %v2382 = vunpack.c.h.b16 %v524
    %v2383 = vunpack.c.l.b16 %v525
    %v2384 = vunpack.c.h.b16 %v525
    %v2385 = vunpack.c.l.b16 %v526
    %v2386 = vunpack.c.h.b16 %v526
    %v2387 = vunpack.c.l.b16 %v527
    %v2388 = vunpack.c.h.b16 %v527
    %v2389 = vunpack.c.l.b16 %v528
    %v2390 = vunpack.c.h.b16 %v528
    %v2391 = vunpack.c.l.b16 %v529
    %v2392 = vunpack.c.h.b16 %v529
    %v2393 = vunpack.c.l.b16 %v530
    %v2394 = vunpack.c.h.b16 %v530
    %v2395 = vunpack.c.l.b16 %v531
    %v2396 = vunpack.c.h.b16 %v531
    %v2397 = vunpack.c.l.b16 %v532
    %v2398 = vunpack.c.h.b16 %v532
    %v2399 = vunpack.c.l.b16 %v533
    %v2400 = vunpack.c.h.b16 %v533
    %v2401 = vunpack.c.l.b16 %v534
    %v2402 = vunpack.c.h.b16 %v534
    %v2403 = vunpack.c.l.b16 %v535
    %v2404 = vunpack.c.h.b16 %v535
    %v2405 = vunpack.c.l.b16 %v536
    %v2406 = vunpack.c.h.b16 %v536
    %v2407 = vunpack.c.l.b16 %v537
    %v2408 = vunpack.c.h.b16 %v537
    %v2409 = vunpack.c.l.b16 %v538
    %v2410 = vunpack.c.h.b16 %v538
    %v2411 = vunpack.c.l.b16 %v539
    %v2412 = vunpack.c.h.b16 %v539
    %v2413 = vunpack.c.l.b16 %v540
    %v2414 = vunpack.c.h.b16 %v540
    %v2415 = vunpack.c.l.b16 %v541
    %v2416 = vunpack.c.h.b16 %v541
    %v2417 = vunpack.c.l.b16 %v542
    %v2418 = vunpack.c.h.b16 %v542
    %v2419 = vunpack.c.l.b16 %v543
    %v2420 = vunpack.c.h.b16 %v543
    %v2421 = vunpack.c.l.b16 %v544
    %v2422 = vunpack.c.h.b16 %v544
    %v2423 = vunpack.c.l.b16 %v545
    %v2424 = vunpack.c.h.b16 %v545
    %v2425 = vunpack.c.l.b16 %v546
    %v2426 = vunpack.c.h.b16 %v546
    %v2427 = vunpack.c.l.b16 %v547
    %v2428 = vunpack.c.h.b16 %v547
    %v2429 = vunpack.c.l.b16 %v548
    %v2430 = vunpack.c.h.b16 %v548
    %v2431 = vunpack.c.l.b16 %v549
    %v2432 = vunpack.c.h.b16 %v549
    %v2433 = vunpack.c.l.b16 %v550
    %v2434 = vunpack.c.h.b16 %v550
    %v2435 = vunpack.c.l.b16 %v551
    %v2436 = vunpack.c.h.b16 %v551
    %v2437 = vunpack.c.l.b16 %v552
    %v2438 = vunpack.c.h.b16 %v552
    %v2439 = vunpack.c.l.b16 %v553
    %v2440 = vunpack.c.h.b16 %v553
    %v2441 = vunpack.c.l.b16 %v554
    %v2442 = vunpack.c.h.b16 %v554
    %v2443 = vunpack.c.l.b16 %v555
    %v2444 = vunpack.c.h.b16 %v555
    %v2445 = vunpack.c.l.b16 %v556
    %v2446 = vunpack.c.h.b16 %v556
    %v2447 = vunpack.c.l.b16 %v557
    %v2448 = vunpack.c.h.b16 %v557
    %v2449 = vunpack.c.l.b16 %v558
    %v2450 = vunpack.c.h.b16 %v558
    %v2451 = vunpack.c.l.b16 %v559
    %v2452 = vunpack.c.h.b16 %v559
    %v2453 = vunpack.c.l.b16 %v560
    %v2454 = vunpack.c.h.b16 %v560
    %v2455 = vunpack.c.l.b16 %v561
    %v2456 = vunpack.c.h.b16 %v561
    %v2457 = vunpack.c.l.b16 %v562
    %v2458 = vunpack.c.h.b16 %v562
    %v2459 = vunpack.c.l.b16 %v563
    %v2460 = vunpack.c.h.b16 %v563
    %v2461 = vunpack.c.l.b16 %v564
    %v2462 = vunpack.c.h.b16 %v564
    %v2463 = vunpack.c.l.b16 %v565
    %v2464 = vunpack.c.h.b16 %v565
    %v2465 = vunpack.c.l.b16 %v566
    %v2466 = vunpack.c.h.b16 %v566
    %v2467 = vunpack.c.l.b16 %v567
    %v2468 = vunpack.c.h.b16 %v567
    %v2469 = vunpack.c.l.b16 %v568
    %v2470 = vunpack.c.h.b16 %v568
    %v2471 = vunpack.c.l.b16 %v569
    %v2472 = vunpack.c.h.b16 %v569
    %v2473 = vunpack.c.l.b16 %v570
    %v2474 = vunpack.c.h.b16 %v570
    %v2475 = vunpack.c.l.b16 %v571
    %v2476 = vunpack.c.h.b16 %v571
    %v2477 = vunpack.c.l.b16 %v572
    %v2478 = vunpack.c.h.b16 %v572
    %v2479 = vunpack.c.l.b16 %v573
    %v2480 = vunpack.c.h.b16 %v573
    %v2481 = vunpack.c.l.b16 %v574
    %v2482 = vunpack.c.h.b16 %v574
    %v2483 = vunpack.c.l.b16 %v575
    %v2484 = vunpack.c.h.b16 %v575
    %v2485 = vunpack.c.l.b16 %v576
    %v2486 = vunpack.c.h.b16 %v576
    %v2487 = vunpack.c.l.b16 %v577
    %v2488 = vunpack.c.h.b16 %v577
    %v2489 = vunpack.c.l.b16 %v578
    %v2490 = vunpack.c.h.b16 %v578
    %v2491 = vunpack.c.l.b16 %v579
    %v2492 = vunpack.c.h.b16 %v579
    %v2493 = vunpack.c.l.b16 %v580
    %v2494 = vunpack.c.h.b16 %v580
    %v2495 = vunpack.c.l.b16 %v581
    %v2496 = vunpack.c.h.b16 %v581
    %v2497 = vunpack.c.l.b16 %v582
    %v2498 = vunpack.c.h.b16 %v582
    %v2499 = vunpack.c.l.b16 %v583
    %v2500 = vunpack.c.h.b16 %v583
    %v2501 = vunpack.c.l.b16 %v584
    %v2502 = vunpack.c.h.b16 %v584
    %v2503 = vunpack.c.l.b16 %v585
    %v2504 = vunpack.c.h.b16 %v585
    %v2505 = vunpack.c.l.b16 %v586
    %v2506 = vunpack.c.h.b16 %v586
    %v2507 = vunpack.c.l.b16 %v587
    %v2508 = vunpack.c.h.b16 %v587
    %v2509 = vunpack.c.l.b16 %v588
    %v2510 = vunpack.c.h.b16 %v588
    %v2511 = vunpack.c.l.b16 %v589
    %v2512 = vunpack.c.h.b16 %v589
    %v2513 = vunpack.c.l.b16 %v590
    %v2514 = vunpack.c.h.b16 %v590
    %v2515 = vunpack.c.l.b16 %v591
    %v2516 = vunpack.c.h.b16 %v591
    %v2517 = vunpack.c.l.b16 %v592
    %v2518 = vunpack.c.h.b16 %v592
    %v2519 = vunpack.c.l.b16 %v593
    %v2520 = vunpack.c.h.b16 %v593
    %v2521 = vunpack.c.l.b16 %v594
    %v2522 = vunpack.c.h.b16 %v594
    %v2523 = vunpack.c.l.b16 %v595
    %v2524 = vunpack.c.h.b16 %v595
    %v2525 = vunpack.c.l.b16 %v596
    %v2526 = vunpack.c.h.b16 %v596
    %v2527 = vunpack.c.l.b16 %v597
    %v2528 = vunpack.c.h.b16 %v597
    %v2529 = vunpack.c.l.b16 %v598
    %v2530 = vunpack.c.h.b16 %v598
    %v2531 = vunpack.c.l.b16 %v599
    %v2532 = vunpack.c.h.b16 %v599
    %v2533 = vunpack.c.l.b16 %v600
    %v2534 = vunpack.c.h.b16 %v600
    %v2535 = vunpack.c.l.b16 %v601
    %v2536 = vunpack.c.h.b16 %v601
    %v2537 = vunpack.c.l.b16 %v602
    %v2538 = vunpack.c.h.b16 %v602
    %v2539 = vunpack.c.l.b16 %v603
    %v2540 = vunpack.c.h.b16 %v603
    %v2541 = vunpack.c.l.b16 %v604
    %v2542 = vunpack.c.h.b16 %v604
    %v2543 = vunpack.c.l.b16 %v605
    %v2544 = vunpack.c.h.b16 %v605
    %v2545 = vunpack.c.l.b16 %v606
    %v2546 = vunpack.c.h.b16 %v606
    %v2547 = vunpack.c.l.b16 %v607
    %v2548 = vunpack.c.h.b16 %v607
    %v2549 = vunpack.c.l.b16 %v608
    %v2550 = vunpack.c.h.b16 %v608
    %v2551 = vunpack.c.l.b16 %v609
    %v2552 = vunpack.c.h.b16 %v609
    %v2553 = vunpack.c.l.b16 %v610
    %v2554 = vunpack.c.h.b16 %v610
    %v2555 = vunpack.c.l.b16 %v611
    %v2556 = vunpack.c.h.b16 %v611
    %v2557 = vunpack.c.l.b16 %v612
    %v2558 = vunpack.c.h.b16 %v612
    %v2559 = vunpack.c.l.b16 %v613
    %v2560 = vunpack.c.h.b16 %v613
    %v2561 = vunpack.c.l.b16 %v614
    %v2562 = vunpack.c.h.b16 %v614
    %v2563 = vunpack.c.l.b16 %v615
    %v2564 = vunpack.c.h.b16 %v615
    %v2565 = vunpack.c.l.b16 %v616
    %v2566 = vunpack.c.h.b16 %v616
    %v2567 = vunpack.c.l.b16 %v617
    %v2568 = vunpack.c.h.b16 %v617
    %v2569 = vunpack.c.l.b16 %v618
    %v2570 = vunpack.c.h.b16 %v618
    %v2571 = vunpack.c.l.b16 %v619
    %v2572 = vunpack.c.h.b16 %v619
    %v2573 = vunpack.c.l.b16 %v620
    %v2574 = vunpack.c.h.b16 %v620
    %v2575 = vunpack.c.l.b16 %v621
    %v2576 = vunpack.c.h.b16 %v621
    %v2577 = vunpack.c.l.b16 %v622
    %v2578 = vunpack.c.h.b16 %v622
    %v2579 = vunpack.c.l.b16 %v623
    %v2580 = vunpack.c.h.b16 %v623
    %v2581 = vunpack.c.l.b16 %v624
    %v2582 = vunpack.c.h.b16 %v624
    %v2583 = vunpack.c.l.b16 %v625
    %v2584 = vunpack.c.h.b16 %v625
    %v2585 = vunpack.c.l.b16 %v626
    %v2586 = vunpack.c.h.b16 %v626
    %v2587 = vunpack.c.l.b16 %v627
    %v2588 = vunpack.c.h.b16 %v627
    %v2589 = vunpack.c.l.b16 %v628
    %v2590 = vunpack.c.h.b16 %v628
    %v2591 = vunpack.c.l.b16 %v629
    %v2592 = vunpack.c.h.b16 %v629
    %v2593 = vunpack.c.l.b16 %v630
    %v2594 = vunpack.c.h.b16 %v630
    %v2595 = vunpack.c.l.b16 %v631
    %v2596 = vunpack.c.h.b16 %v631
    %v2597 = vunpack.c.l.b16 %v632
    %v2598 = vunpack.c.h.b16 %v632
    %v2599 = vunpack.c.l.b16 %v633
    %v2600 = vunpack.c.h.b16 %v633
    %v2601 = vunpack.c.l.b16 %v634
    %v2602 = vunpack.c.h.b16 %v634
    %v2603 = vunpack.c.l.b16 %v635
    %v2604 = vunpack.c.h.b16 %v635
    %v2605 = vunpack.c.l.b16 %v636
    %v2606 = vunpack.c.h.b16 %v636
    %v2607 = vunpack.c.l.b16 %v637
    %v2608 = vunpack.c.h.b16 %v637
    %v2609 = vunpack.c.l.b16 %v638
    %v2610 = vunpack.c.h.b16 %v638
    %v2611 = vunpack.c.l.b16 %v639
    %v2612 = vunpack.c.h.b16 %v639
    %v2613 = vunpack.c.l.b16 %v640
    %v2614 = vunpack.c.h.b16 %v640
    %v2615 = vunpack.c.l.b16 %v641
    %v2616 = vunpack.c.h.b16 %v641
    %v2617 = vunpack.c.l.b16 %v642
    %v2618 = vunpack.c.h.b16 %v642
    %v2619 = vunpack.c.l.b16 %v643
    %v2620 = vunpack.c.h.b16 %v643
    %v2621 = vunpack.c.l.b16 %v644
    %v2622 = vunpack.c.h.b16 %v644
    %v2623 = vunpack.c.l.b16 %v645
    %v2624 = vunpack.c.h.b16 %v645
    %v2625 = vunpack.c.l.b16 %v646
    %v2626 = vunpack.c.h.b16 %v646
    %v2627 = vunpack.c.l.b16 %v647
    %v2628 = vunpack.c.h.b16 %v647
    %v2629 = vunpack.c.l.b16 %v648
    %v2630 = vunpack.c.h.b16 %v648
    %v2631 = vunpack.c.l.b16 %v649
    %v2632 = vunpack.c.h.b16 %v649
    %v2633 = vunpack.c.l.b16 %v650
    %v2634 = vunpack.c.h.b16 %v650
    %v2635 = vunpack.c.l.b16 %v651
    %v2636 = vunpack.c.h.b16 %v651
    %v2637 = vunpack.c.l.b16 %v652
    %v2638 = vunpack.c.h.b16 %v652
    %v2639 = vunpack.c.l.b16 %v653
    %v2640 = vunpack.c.h.b16 %v653
    %v2641 = vunpack.c.l.b16 %v654
    %v2642 = vunpack.c.h.b16 %v654
    %v2643 = vunpack.c.l.b16 %v655
    %v2644 = vunpack.c.h.b16 %v655
    %v2645 = vunpack.c.l.b16 %v656
    %v2646 = vunpack.c.h.b16 %v656
    %v2647 = vunpack.c.l.b16 %v657
    %v2648 = vunpack.c.h.b16 %v657
    %v2649 = vunpack.c.l.b16 %v658
    %v2650 = vunpack.c.h.b16 %v658
    %v2651 = vunpack.c.l.b16 %v659
    %v2652 = vunpack.c.h.b16 %v659
    %v2653 = vunpack.c.l.b16 %v660
    %v2654 = vunpack.c.h.b16 %v660
    %v2655 = vunpack.c.l.b16 %v661
    %v2656 = vunpack.c.h.b16 %v661
    %v2657 = vunpack.c.l.b16 %v662
    %v2658 = vunpack.c.h.b16 %v662
    %v2659 = vunpack.c.l.b16 %v663
    %v2660 = vunpack.c.h.b16 %v663
    %v2661 = vunpack.c.l.b16 %v664
    %v2662 = vunpack.c.h.b16 %v664
    %v2663 = vunpack.c.l.b16 %v665
    %v2664 = vunpack.c.h.b16 %v665
    %v2665 = vunpack.c.l.b16 %v666
    %v2666 = vunpack.c.h.b16 %v666
    %v2667 = vunpack.c.l.b16 %v667
    %v2668 = vunpack.c.h.b16 %v667
    %v2669 = vunpack.c.l.b16 %v668
    %v2670 = vunpack.c.h.b16 %v668
    %v2671 = vunpack.c.l.b16 %v669
    %v2672 = vunpack.c.h.b16 %v669
    %v2673 = vunpack.c.l.b16 %v670
    %v2674 = vunpack.c.h.b16 %v670
    %v2675 = vunpack.c.l.b16 %v671
    %v2676 = vunpack.c.h.b16 %v671
    %v2677 = vunpack.c.l.b16 %v672
    %v2678 = vunpack.c.h.b16 %v672
    %v2679 = vunpack.c.l.b16 %v673
    %v2680 = vunpack.c.h.b16 %v673
    %v2681 = vunpack.c.l.b16 %v674
    %v2682 = vunpack.c.h.b16 %v674
    %v2683 = vunpack.c.l.b16 %v675
    %v2684 = vunpack.c.h.b16 %v675
    %v2685 = vunpack.c.l.b16 %v676
    %v2686 = vunpack.c.h.b16 %v676
    %v2687 = vunpack.c.l.b16 %v677
    %v2688 = vunpack.c.h.b16 %v677
    %v2689 = vunpack.c.l.b16 %v678
    %v2690 = vunpack.c.h.b16 %v678
    %v2691 = vunpack.c.l.b16 %v679
    %v2692 = vunpack.c.h.b16 %v679
    %v2693 = vunpack.c.l.b16 %v680
    %v2694 = vunpack.c.h.b16 %v680
    %v2695 = vunpack.c.l.b16 %v681
    %v2696 = vunpack.c.h.b16 %v681
    %v2697 = vunpack.c.l.b16 %v682
    %v2698 = vunpack.c.h.b16 %v682
    %v2699 = vunpack.c.l.b16 %v683
    %v2700 = vunpack.c.h.b16 %v683
    %v2701 = vunpack.c.l.b16 %v684
    %v2702 = vunpack.c.h.b16 %v684
    %v2703 = vunpack.c.l.b16 %v685
    %v2704 = vunpack.c.h.b16 %v685
    %v2705 = vunpack.c.l.b16 %v686
    %v2706 = vunpack.c.h.b16 %v686
    %v2707 = vunpack.c.l.b16 %v687
    %v2708 = vunpack.c.h.b16 %v687
    %v2709 = vunpack.c.l.b16 %v688
    %v2710 = vunpack.c.h.b16 %v688
    %v2711 = vunpack.c.l.b16 %v689
    %v2712 = vunpack.c.h.b16 %v689
    %v2713 = vunpack.c.l.b16 %v690
    %v2714 = vunpack.c.h.b16 %v690
    %v2715 = vunpack.c.l.b16 %v691
    %v2716 = vunpack.c.h.b16 %v691
    %v2717 = vunpack.c.l.b16 %v692
    %v2718 = vunpack.c.h.b16 %v692
    %v2719 = vunpack.c.l.b16 %v693
    %v2720 = vunpack.c.h.b16 %v693
    %v2721 = vunpack.c.l.b16 %v694
    %v2722 = vunpack.c.h.b16 %v694
    %v2723 = vunpack.c.l.b16 %v695
    %v2724 = vunpack.c.h.b16 %v695
    %v2725 = vunpack.c.l.b16 %v696
    %v2726 = vunpack.c.h.b16 %v696
    %v2727 = vunpack.c.l.b16 %v697
    %v2728 = vunpack.c.h.b16 %v697
    %v2729 = vunpack.c.l.b16 %v698
    %v2730 = vunpack.c.h.b16 %v698
    %v2731 = vunpack.c.l.b16 %v699
    %v2732 = vunpack.c.h.b16 %v699
    %v2733 = vunpack.c.l.b16 %v700
    %v2734 = vunpack.c.h.b16 %v700
    %v2735 = vunpack.c.l.b16 %v701
    %v2736 = vunpack.c.h.b16 %v701
    %v2737 = vunpack.c.l.b16 %v702
    %v2738 = vunpack.c.h.b16 %v702
    %v2739 = vunpack.c.l.b16 %v703
    %v2740 = vunpack.c.h.b16 %v703
    %v2741 = vunpack.c.l.b16 %v704
    %v2742 = vunpack.c.h.b16 %v704
    %v2743 = vunpack.c.l.b16 %v705
    %v2744 = vunpack.c.h.b16 %v705
    %v2745 = vunpack.c.l.b16 %v706
    %v2746 = vunpack.c.h.b16 %v706
    %v2747 = vunpack.c.l.b16 %v707
    %v2748 = vunpack.c.h.b16 %v707
    %v2749 = vunpack.c.l.b16 %v708
    %v2750 = vunpack.c.h.b16 %v708
    %v2751 = vunpack.c.l.b16 %v709
    %v2752 = vunpack.c.h.b16 %v709
    %v2753 = vunpack.c.l.b16 %v710
    %v2754 = vunpack.c.h.b16 %v710
    %v2755 = vunpack.c.l.b16 %v711
    %v2756 = vunpack.c.h.b16 %v711
    %v2757 = vunpack.c.l.b16 %v712
    %v2758 = vunpack.c.h.b16 %v712
    %v2759 = vunpack.c.l.b16 %v713
    %v2760 = vunpack.c.h.b16 %v713
    %v2761 = vunpack.c.l.b16 %v714
    %v2762 = vunpack.c.h.b16 %v714
    %v2763 = vunpack.c.l.b16 %v715
    %v2764 = vunpack.c.h.b16 %v715
    %v2765 = vunpack.c.l.b16 %v716
    %v2766 = vunpack.c.h.b16 %v716
    %v2767 = vunpack.c.l.b16 %v717
    %v2768 = vunpack.c.h.b16 %v717
    %v2769 = vunpack.c.l.b16 %v718
    %v2770 = vunpack.c.h.b16 %v718
    %v2771 = vunpack.c.l.b16 %v719
    %v2772 = vunpack.c.h.b16 %v719
    %v2773 = vunpack.c.l.b16 %v720
    %v2774 = vunpack.c.h.b16 %v720
    %v2775 = vunpack.c.l.b16 %v721
    %v2776 = vunpack.c.h.b16 %v721
    %v2777 = vunpack.c.l.b16 %v722
    %v2778 = vunpack.c.h.b16 %v722
    %v2779 = vunpack.c.l.b16 %v723
    %v2780 = vunpack.c.h.b16 %v723
    %v2781 = vunpack.c.l.b16 %v724
    %v2782 = vunpack.c.h.b16 %v724
    %v2783 = vunpack.c.l.b16 %v725
    %v2784 = vunpack.c.h.b16 %v725
    %v2785 = vunpack.c.l.b16 %v726
    %v2786 = vunpack.c.h.b16 %v726
    %v2787 = vunpack.c.l.b16 %v727
    %v2788 = vunpack.c.h.b16 %v727
    %v2789 = vunpack.c.l.b16 %v728
    %v2790 = vunpack.c.h.b16 %v728
    %v2791 = vunpack.c.l.b16 %v729
    %v2792 = vunpack.c.h.b16 %v729
    %v2793 = vunpack.c.l.b16 %v730
    %v2794 = vunpack.c.h.b16 %v730
    %v2795 = vunpack.c.l.b16 %v731
    %v2796 = vunpack.c.h.b16 %v731
    %v2797 = vunpack.c.l.b16 %v732
    %v2798 = vunpack.c.h.b16 %v732
    %v2799 = vunpack.c.l.b16 %v733
    %v2800 = vunpack.c.h.b16 %v733
    %v2801 = vunpack.c.l.b16 %v734
    %v2802 = vunpack.c.h.b16 %v734
    %v2803 = vunpack.c.l.b16 %v735
    %v2804 = vunpack.c.h.b16 %v735
    %v2805 = vunpack.c.l.b16 %v736
    %v2806 = vunpack.c.h.b16 %v736
    %v2807 = vunpack.c.l.b16 %v737
    %v2808 = vunpack.c.h.b16 %v737
    %v2809 = vunpack.c.l.b16 %v738
    %v2810 = vunpack.c.h.b16 %v738
    %v2811 = vunpack.c.l.b16 %v739
    %v2812 = vunpack.c.h.b16 %v739
    %v2813 = vunpack.c.l.b16 %v740
    %v2814 = vunpack.c.h.b16 %v740
    %v2815 = vunpack.c.l.b16 %v741
    %v2816 = vunpack.c.h.b16 %v741
    %v2817 = vunpack.c.l.b16 %v742
    %v2818 = vunpack.c.h.b16 %v742
    %v2819 = vunpack.c.l.b16 %v743
    %v2820 = vunpack.c.h.b16 %v743
    %v2821 = vunpack.c.l.b16 %v744
    %v2822 = vunpack.c.h.b16 %v744
    %v2823 = vunpack.c.l.b16 %v745
    %v2824 = vunpack.c.h.b16 %v745
    %v2825 = vunpack.c.l.b16 %v746
    %v2826 = vunpack.c.h.b16 %v746
    %v2827 = vunpack.c.l.b16 %v747
    %v2828 = vunpack.c.h.b16 %v747
    %v2829 = vunpack.c.l.b16 %v748
    %v2830 = vunpack.c.h.b16 %v748
    %v2831 = vunpack.c.l.b16 %v749
    %v2832 = vunpack.c.h.b16 %v749
    %v2833 = vunpack.c.l.b16 %v750
    %v2834 = vunpack.c.h.b16 %v750
    %v2835 = vunpack.c.l.b16 %v751
    %v2836 = vunpack.c.h.b16 %v751
    %v2837 = vunpack.c.l.b16 %v752
    %v2838 = vunpack.c.h.b16 %v752
    %v2839 = vunpack.c.l.b16 %v753
    %v2840 = vunpack.c.h.b16 %v753
    %v2841 = vunpack.c.l.b16 %v754
    %v2842 = vunpack.c.h.b16 %v754
    %v2843 = vunpack.c.l.b16 %v755
    %v2844 = vunpack.c.h.b16 %v755
    %v2845 = vunpack.c.l.b16 %v756
    %v2846 = vunpack.c.h.b16 %v756
    %v2847 = vunpack.c.l.b16 %v757
    %v2848 = vunpack.c.h.b16 %v757
    %v2849 = vunpack.c.l.b16 %v758
    %v2850 = vunpack.c.h.b16 %v758
    %v2851 = vunpack.c.l.b16 %v759
    %v2852 = vunpack.c.h.b16 %v759
    %v2853 = vunpack.c.l.b16 %v760
    %v2854 = vunpack.c.h.b16 %v760
    %v2855 = vunpack.c.l.b16 %v761
    %v2856 = vunpack.c.h.b16 %v761
    %v2857 = vunpack.c.l.b16 %v762
    %v2858 = vunpack.c.h.b16 %v762
    %v2859 = vunpack.c.l.b16 %v763
    %v2860 = vunpack.c.h.b16 %v763
    %v2861 = vunpack.c.l.b16 %v764
    %v2862 = vunpack.c.h.b16 %v764
    %v2863 = vunpack.c.l.b16 %v765
    %v2864 = vunpack.c.h.b16 %v765
    %v2865 = vunpack.c.l.b16 %v766
    %v2866 = vunpack.c.h.b16 %v766
    %v2867 = vunpack.c.l.b16 %v767
    %v2868 = vunpack.c.h.b16 %v767
    %v2869 = vunpack.c.l.b16 %v768
    %v2870 = vunpack.c.h.b16 %v768
    %v2871 = vunpack.c.l.b16 %v769
    %v2872 = vunpack.c.h.b16 %v769
    %v2873 = vunpack.c.l.b16 %v770
    %v2874 = vunpack.c.h.b16 %v770
    %v2875 = vunpack.c.l.b16 %v771
    %v2876 = vunpack.c.h.b16 %v771
    %v2877 = vunpack.c.l.b16 %v772
    %v2878 = vunpack.c.h.b16 %v772
    %v2879 = vunpack.c.l.b16 %v773
    %v2880 = vunpack.c.h.b16 %v773
    %v2881 = vunpack.c.l.b16 %v774
    %v2882 = vunpack.c.h.b16 %v774
    %v2883 = vunpack.c.l.b16 %v775
    %v2884 = vunpack.c.h.b16 %v775
    %v2885 = vunpack.c.l.b16 %v776
    %v2886 = vunpack.c.h.b16 %v776
    %v2887 = vunpack.c.l.b16 %v777
    %v2888 = vunpack.c.h.b16 %v777
    %v2889 = vunpack.c.l.b16 %v778
    %v2890 = vunpack.c.h.b16 %v778
    %v2891 = vunpack.c.l.b16 %v779
    %v2892 = vunpack.c.h.b16 %v779
    %v2893 = vunpack.c.l.b16 %v780
    %v2894 = vunpack.c.h.b16 %v780
    %v2895 = vunpack.c.l.b16 %v781
    %v2896 = vunpack.c.h.b16 %v781
    %v2897 = vunpack.c.l.b16 %v782
    %v2898 = vunpack.c.h.b16 %v782
    %v2899 = vunpack.c.l.b16 %v783
    %v2900 = vunpack.c.h.b16 %v783
    %v2901 = vunpack.c.l.b16 %v784
    %v2902 = vunpack.c.h.b16 %v784
    %v2903 = vunpack.c.l.b16 %v785
    %v2904 = vunpack.c.h.b16 %v785
    %v2905 = vunpack.c.l.b16 %v786
    %v2906 = vunpack.c.h.b16 %v786
    %v2907 = vunpack.c.l.b16 %v787
    %v2908 = vunpack.c.h.b16 %v787
    %v2909 = vunpack.c.l.b16 %v788
    %v2910 = vunpack.c.h.b16 %v788
    %v2911 = vunpack.c.l.b16 %v789
    %v2912 = vunpack.c.h.b16 %v789
    %v2913 = vunpack.c.l.b16 %v790
    %v2914 = vunpack.c.h.b16 %v790
    %v2915 = vunpack.c.l.b16 %v791
    %v2916 = vunpack.c.h.b16 %v791
    %v2917 = vunpack.c.l.b16 %v792
    %v2918 = vunpack.c.h.b16 %v792
    %v2919 = vunpack.c.l.b16 %v793
    %v2920 = vunpack.c.h.b16 %v793
    %v2921 = vunpack.c.l.b16 %v794
    %v2922 = vunpack.c.h.b16 %v794
    %v2923 = vunpack.c.l.b16 %v795
    %v2924 = vunpack.c.h.b16 %v795
    %v2925 = vunpack.c.l.b16 %v796
    %v2926 = vunpack.c.h.b16 %v796
    %v2927 = vunpack.c.l.b16 %v797
    %v2928 = vunpack.c.h.b16 %v797
    %v2929 = vunpack.c.l.b16 %v798
    %v2930 = vunpack.c.h.b16 %v798
    %v2931 = vunpack.c.l.b16 %v799
    %v2932 = vunpack.c.h.b16 %v799
    %v2933 = vunpack.c.l.b16 %v800
    %v2934 = vunpack.c.h.b16 %v800
    %v2935 = vunpack.c.l.b16 %v801
    %v2936 = vunpack.c.h.b16 %v801
    %v2937 = vunpack.c.l.b16 %v802
    %v2938 = vunpack.c.h.b16 %v802
    %v2939 = vunpack.c.l.b16 %v803
    %v2940 = vunpack.c.h.b16 %v803
    %v2941 = vunpack.c.l.b16 %v804
    %v2942 = vunpack.c.h.b16 %v804
    %v2943 = vunpack.c.l.b16 %v805
    %v2944 = vunpack.c.h.b16 %v805
    %v2945 = vunpack.c.l.b16 %v806
    %v2946 = vunpack.c.h.b16 %v806
    %v2947 = vunpack.c.l.b16 %v807
    %v2948 = vunpack.c.h.b16 %v807
    %v2949 = vunpack.c.l.b16 %v808
    %v2950 = vunpack.c.h.b16 %v808
    %v2951 = vunpack.c.l.b16 %v809
    %v2952 = vunpack.c.h.b16 %v809
    %v2953 = vunpack.c.l.b16 %v810
    %v2954 = vunpack.c.h.b16 %v810
    %v2955 = vunpack.c.l.b16 %v811
    %v2956 = vunpack.c.h.b16 %v811
    %v2957 = vunpack.c.l.b16 %v812
    %v2958 = vunpack.c.h.b16 %v812
    %v2959 = vunpack.c.l.b16 %v813
    %v2960 = vunpack.c.h.b16 %v813
    %v2961 = vunpack.c.l.b16 %v814
    %v2962 = vunpack.c.h.b16 %v814
    %v2963 = vunpack.c.l.b16 %v815
    %v2964 = vunpack.c.h.b16 %v815
    %v2965 = vunpack.c.l.b16 %v816
    %v2966 = vunpack.c.h.b16 %v816
    %v2967 = vunpack.c.l.b16 %v817
    %v2968 = vunpack.c.h.b16 %v817
    %v2969 = vunpack.c.l.b16 %v818
    %v2970 = vunpack.c.h.b16 %v818
    %v2971 = vunpack.c.l.b16 %v819
    %v2972 = vunpack.c.h.b16 %v819
    %v2973 = vunpack.c.l.b16 %v820
    %v2974 = vunpack.c.h.b16 %v820
    %v2975 = vunpack.c.l.b16 %v821
    %v2976 = vunpack.c.h.b16 %v821
    %v2977 = vunpack.c.l.b16 %v822
    %v2978 = vunpack.c.h.b16 %v822
    %v2979 = vunpack.c.l.b16 %v823
    %v2980 = vunpack.c.h.b16 %v823
    %v2981 = vunpack.c.l.b16 %v824
    %v2982 = vunpack.c.h.b16 %v824
    %v2983 = vunpack.c.l.b16 %v825
    %v2984 = vunpack.c.h.b16 %v825
    %v2985 = vunpack.c.l.b16 %v826
    %v2986 = vunpack.c.h.b16 %v826
    %v2987 = vunpack.c.l.b16 %v827
    %v2988 = vunpack.c.h.b16 %v827
    %v2989 = vunpack.c.l.b16 %v828
    %v2990 = vunpack.c.h.b16 %v828
    %v2991 = vunpack.c.l.b16 %v829
    %v2992 = vunpack.c.h.b16 %v829
    %v2993 = vunpack.c.l.b16 %v830
    %v2994 = vunpack.c.h.b16 %v830
    %v2995 = vunpack.c.l.b16 %v831
    %v2996 = vunpack.c.h.b16 %v831
    %v2997 = vunpack.c.l.b16 %v832
    %v2998 = vunpack.c.h.b16 %v832
    %v2999 = vunpack.c.l.b16 %v833
    %v3000 = vunpack.c.h.b16 %v833
    %v3001 = vunpack.c.l.b16 %v834
    %v3002 = vunpack.c.h.b16 %v834
    %v3003 = vunpack.c.l.b16 %v835
    %v3004 = vunpack.c.h.b16 %v835
    %v3005 = vunpack.c.l.b16 %v836
    %v3006 = vunpack.c.h.b16 %v836
    %v3007 = vunpack.c.l.b16 %v837
    %v3008 = vunpack.c.h.b16 %v837
    %v3009 = vunpack.c.l.b16 %v838
    %v3010 = vunpack.c.h.b16 %v838
    %v3011 = vunpack.c.l.b16 %v839
    %v3012 = vunpack.c.h.b16 %v839
    %v3013 = vunpack.c.l.b16 %v840
    %v3014 = vunpack.c.h.b16 %v840
    %v3015 = vunpack.c.l.b16 %v841
    %v3016 = vunpack.c.h.b16 %v841
    %v3017 = vunpack.c.l.b16 %v842
    %v3018 = vunpack.c.h.b16 %v842
    %v3019 = vunpack.c.l.b16 %v843
    %v3020 = vunpack.c.h.b16 %v843
    %v3021 = vunpack.c.l.b16 %v844
    %v3022 = vunpack.c.h.b16 %v844
    %v3023 = vunpack.c.l.b16 %v845
    %v3024 = vunpack.c.h.b16 %v845
    %v3025 = vunpack.c.l.b16 %v846
    %v3026 = vunpack.c.h.b16 %v846
    %v3027 = vunpack.c.l.b16 %v847
    %v3028 = vunpack.c.h.b16 %v847
    %v3029 = vunpack.c.l.b16 %v848
    %v3030 = vunpack.c.h.b16 %v848
    %v3031 = vunpack.c.l.b16 %v849
    %v3032 = vunpack.c.h.b16 %v849
    %v3033 = vunpack.c.l.b16 %v850
    %v3034 = vunpack.c.h.b16 %v850
    %v3035 = vunpack.c.l.b16 %v851
    %v3036 = vunpack.c.h.b16 %v851
    %v3037 = vunpack.c.l.b16 %v852
    %v3038 = vunpack.c.h.b16 %v852
    %v3039 = vunpack.c.l.b16 %v853
    %v3040 = vunpack.c.h.b16 %v853
    %v3041 = vunpack.c.l.b16 %v854
    %v3042 = vunpack.c.h.b16 %v854
    %v3043 = vunpack.c.l.b16 %v855
    %v3044 = vunpack.c.h.b16 %v855
    %v3045 = vunpack.c.l.b16 %v856
    %v3046 = vunpack.c.h.b16 %v856
    %v3047 = vunpack.c.l.b16 %v857
    %v3048 = vunpack.c.h.b16 %v857
    %v3049 = vunpack.c.l.b16 %v858
    %v3050 = vunpack.c.h.b16 %v858
    %v3051 = vunpack.c.l.b16 %v859
    %v3052 = vunpack.c.h.b16 %v859
    %v3053 = vunpack.c.l.b16 %v860
    %v3054 = vunpack.c.h.b16 %v860
    %v3055 = vunpack.c.l.b16 %v861
    %v3056 = vunpack.c.h.b16 %v861
    %v3057 = vunpack.c.l.b16 %v862
    %v3058 = vunpack.c.h.b16 %v862
    %v3059 = vunpack.c.l.b16 %v863
    %v3060 = vunpack.c.h.b16 %v863
    %v3061 = vunpack.c.l.b16 %v864
    %v3062 = vunpack.c.h.b16 %v864
    %v3063 = vunpack.c.l.b16 %v865
    %v3064 = vunpack.c.h.b16 %v865
    %v3065 = vunpack.c.l.b16 %v866
    %v3066 = vunpack.c.h.b16 %v866
    %v3067 = vunpack.c.l.b16 %v867
    %v3068 = vunpack.c.h.b16 %v867
    %v3069 = vunpack.c.l.b16 %v868
    %v3070 = vunpack.c.h.b16 %v868
    %v3071 = vunpack.c.l.b16 %v869
    %v3072 = vunpack.c.h.b16 %v869
    %v3073 = vunpack.c.l.b16 %v870
    %v3074 = vunpack.c.h.b16 %v870
    %v3075 = vunpack.c.l.b16 %v871
    %v3076 = vunpack.c.h.b16 %v871
    %v3077 = vunpack.c.l.b16 %v872
    %v3078 = vunpack.c.h.b16 %v872
    %v3079 = vunpack.c.l.b16 %v873
    %v3080 = vunpack.c.h.b16 %v873
    %v3081 = vunpack.c.l.b16 %v874
    %v3082 = vunpack.c.h.b16 %v874
    %v3083 = vunpack.c.l.b16 %v875
    %v3084 = vunpack.c.h.b16 %v875
    %v3085 = vunpack.c.l.b16 %v876
    %v3086 = vunpack.c.h.b16 %v876
    %v3087 = vunpack.c.l.b16 %v877
    %v3088 = vunpack.c.h.b16 %v877
    %v3089 = vunpack.c.l.b16 %v878
    %v3090 = vunpack.c.h.b16 %v878
    %v3091 = vunpack.c.l.b16 %v879
    %v3092 = vunpack.c.h.b16 %v879
    %v3093 = vunpack.c.l.b16 %v880
    %v3094 = vunpack.c.h.b16 %v880
    %v3095 = vunpack.c.l.b16 %v881
    %v3096 = vunpack.c.h.b16 %v881
    %v3097 = vunpack.c.l.b16 %v882
    %v3098 = vunpack.c.h.b16 %v882
    %v3099 = vunpack.c.l.b16 %v883
    %v3100 = vunpack.c.h.b16 %v883
    %v3101 = vunpack.c.l.b16 %v884
    %v3102 = vunpack.c.h.b16 %v884
    %v3103 = vunpack.c.l.b16 %v885
    %v3104 = vunpack.c.h.b16 %v885
    %v3105 = vunpack.c.l.b16 %v886
    %v3106 = vunpack.c.h.b16 %v886
    %v3107 = vunpack.c.l.b16 %v887
    %v3108 = vunpack.c.h.b16 %v887
    %v3109 = vunpack.c.l.b16 %v888
    %v3110 = vunpack.c.h.b16 %v888
    %v3111 = vunpack.c.l.b16 %v889
    %v3112 = vunpack.c.h.b16 %v889
    %v3113 = vunpack.c.l.b16 %v890
    %v3114 = vunpack.c.h.b16 %v890
    %v3115 = vunpack.c.l.b16 %v891
    %v3116 = vunpack.c.h.b16 %v891
    %v3117 = vunpack.c.l.b16 %v892
    %v3118 = vunpack.c.h.b16 %v892
    %v3119 = vunpack.c.l.b16 %v893
    %v3120 = vunpack.c.h.b16 %v893
    %v3121 = vunpack.c.l.b16 %v894
    %v3122 = vunpack.c.h.b16 %v894
    %v3123 = vunpack.c.l.b16 %v895
    %v3124 = vunpack.c.h.b16 %v895
    %v3125 = vunpack.c.l.b16 %v896
    %v3126 = vunpack.c.h.b16 %v896
    %v3127 = vunpack.c.l.b16 %v897
    %v3128 = vunpack.c.h.b16 %v897
    %v3129 = vunpack.c.l.b16 %v898
    %v3130 = vunpack.c.h.b16 %v898
    %v3131 = vunpack.c.l.b16 %v899
    %v3132 = vunpack.c.h.b16 %v899
    %v3133 = vunpack.c.l.b16 %v900
    %v3134 = vunpack.c.h.b16 %v900
    %v3135 = vunpack.c.l.b16 %v901
    %v3136 = vunpack.c.h.b16 %v901
    %v3137 = vunpack.c.l.b16 %v902
    %v3138 = vunpack.c.h.b16 %v902
    %v3139 = vunpack.c.l.b16 %v903
    %v3140 = vunpack.c.h.b16 %v903
    %v3141 = vunpack.c.l.b16 %v904
    %v3142 = vunpack.c.h.b16 %v904
    %v3143 = vunpack.c.l.b16 %v905
    %v3144 = vunpack.c.h.b16 %v905
    %v3145 = vunpack.c.l.b16 %v906
    %v3146 = vunpack.c.h.b16 %v906
    %v3147 = vunpack.c.l.b16 %v907
    %v3148 = vunpack.c.h.b16 %v907
    %v3149 = vunpack.c.l.b16 %v908
    %v3150 = vunpack.c.h.b16 %v908
    %v3151 = vunpack.c.l.b16 %v909
    %v3152 = vunpack.c.h.b16 %v909
    %v3153 = vunpack.c.l.b16 %v910
    %v3154 = vunpack.c.h.b16 %v910
    %v3155 = vunpack.c.l.b16 %v911
    %v3156 = vunpack.c.h.b16 %v911
    %v3157 = vunpack.c.l.b16 %v912
    %v3158 = vunpack.c.h.b16 %v912
    %v3159 = vunpack.c.l.b16 %v913
    %v3160 = vunpack.c.h.b16 %v913
    %v3161 = vunpack.c.l.b16 %v914
    %v3162 = vunpack.c.h.b16 %v914
    %v3163 = vunpack.c.l.b16 %v915
    %v3164 = vunpack.c.h.b16 %v915
    %v3165 = vunpack.c.l.b16 %v916
    %v3166 = vunpack.c.h.b16 %v916
    %v3167 = vunpack.c.l.b16 %v917
    %v3168 = vunpack.c.h.b16 %v917
    %v3169 = vunpack.c.l.b16 %v918
    %v3170 = vunpack.c.h.b16 %v918
    %v3171 = vunpack.c.l.b16 %v919
    %v3172 = vunpack.c.h.b16 %v919
    %v3173 = vunpack.c.l.b16 %v920
    %v3174 = vunpack.c.h.b16 %v920
    %v3175 = vunpack.c.l.b16 %v921
    %v3176 = vunpack.c.h.b16 %v921
    %v3177 = vunpack.c.l.b16 %v922
    %v3178 = vunpack.c.h.b16 %v922
    %v3179 = vunpack.c.l.b16 %v923
    %v3180 = vunpack.c.h.b16 %v923
    %v3181 = vunpack.c.l.b16 %v924
    %v3182 = vunpack.c.h.b16 %v924
    %v3183 = vunpack.c.l.b16 %v925
    %v3184 = vunpack.c.h.b16 %v925
    %v3185 = vunpack.c.l.b16 %v926
    %v3186 = vunpack.c.h.b16 %v926
    %v3187 = vunpack.c.l.b16 %v927
    %v3188 = vunpack.c.h.b16 %v927
    %v3189 = vunpack.c.l.b16 %v928
    %v3190 = vunpack.c.h.b16 %v928
    %v3191 = vunpack.c.l.b16 %v929
    %v3192 = vunpack.c.h.b16 %v929
    %v3193 = vunpack.c.l.b16 %v930
    %v3194 = vunpack.c.h.b16 %v930
    %v3195 = vunpack.c.l.b16 %v931
    %v3196 = vunpack.c.h.b16 %v931
    %v3197 = vunpack.c.l.b16 %v932
    %v3198 = vunpack.c.h.b16 %v932
    %v3199 = vunpack.c.l.b16 %v933
    %v3200 = vunpack.c.h.b16 %v933
    %v3201 = vunpack.c.l.b16 %v934
    %v3202 = vunpack.c.h.b16 %v934
    %v3203 = vunpack.c.l.b16 %v935
    %v3204 = vunpack.c.h.b16 %v935
    %v3205 = vunpack.c.l.b16 %v936
    %v3206 = vunpack.c.h.b16 %v936
    %v3207 = vunpack.c.l.b16 %v937
    %v3208 = vunpack.c.h.b16 %v937
    %v3209 = vunpack.c.l.b16 %v938
    %v3210 = vunpack.c.h.b16 %v938
    %v3211 = vunpack.c.l.b16 %v939
    %v3212 = vunpack.c.h.b16 %v939
    %v3213 = vunpack.c.l.b16 %v940
    %v3214 = vunpack.c.h.b16 %v940
    %v3215 = vunpack.c.l.b16 %v941
    %v3216 = vunpack.c.h.b16 %v941
    %v3217 = vunpack.c.l.b16 %v942
    %v3218 = vunpack.c.h.b16 %v942
    %v3219 = vunpack.c.l.b16 %v943
    %v3220 = vunpack.c.h.b16 %v943
    %v3221 = vunpack.c.l.b16 %v944
    %v3222 = vunpack.c.h.b16 %v944
    %v3223 = vunpack.c.l.b16 %v945
    %v3224 = vunpack.c.h.b16 %v945
    %v3225 = vunpack.c.l.b16 %v946
    %v3226 = vunpack.c.h.b16 %v946
    %v3227 = vunpack.c.l.b16 %v947
    %v3228 = vunpack.c.h.b16 %v947
    %v3229 = vunpack.c.l.b16 %v948
    %v3230 = vunpack.c.h.b16 %v948
    %v3231 = vunpack.c.l.b16 %v949
    %v3232 = vunpack.c.h.b16 %v949
    %v3233 = vunpack.c.l.b16 %v950
    %v3234 = vunpack.c.h.b16 %v950
    %v3235 = vunpack.c.l.b16 %v951
    %v3236 = vunpack.c.h.b16 %v951
    %v3237 = vunpack.c.l.b16 %v952
    %v3238 = vunpack.c.h.b16 %v952
    %v3239 = vunpack.c.l.b16 %v953
    %v3240 = vunpack.c.h.b16 %v953
    %v3241 = vunpack.c.l.b16 %v954
    %v3242 = vunpack.c.h.b16 %v954
    %v3243 = vunpack.c.l.b16 %v955
    %v3244 = vunpack.c.h.b16 %v955
    %v3245 = vunpack.c.l.b16 %v956
    %v3246 = vunpack.c.h.b16 %v956
    %v3247 = vunpack.c.l.b16 %v957
    %v3248 = vunpack.c.h.b16 %v957
    %v3249 = vunpack.c.l.b16 %v958
    %v3250 = vunpack.c.h.b16 %v958
    %v3251 = vunpack.c.l.b16 %v959
    %v3252 = vunpack.c.h.b16 %v959
    %v3253 = vunpack.c.l.b16 %v960
    %v3254 = vunpack.c.h.b16 %v960
    %v3255 = vunpack.c.l.b16 %v961
    %v3256 = vunpack.c.h.b16 %v961
    %v3257 = vunpack.c.l.b16 %v962
    %v3258 = vunpack.c.h.b16 %v962
    %v3259 = vunpack.c.l.b16 %v963
    %v3260 = vunpack.c.h.b16 %v963
    %v3261 = vunpack.c.l.b16 %v964
    %v3262 = vunpack.c.h.b16 %v964
    %v3263 = vunpack.c.l.b16 %v965
    %v3264 = vunpack.c.h.b16 %v965
    %v3265 = vunpack.c.l.b16 %v966
    %v3266 = vunpack.c.h.b16 %v966
    %v3267 = vunpack.c.l.b16 %v967
    %v3268 = vunpack.c.h.b16 %v967
    %v3269 = vunpack.c.l.b16 %v968
    %v3270 = vunpack.c.h.b16 %v968
    %v3271 = vunpack.c.l.b16 %v969
    %v3272 = vunpack.c.h.b16 %v969
    %v3273 = vunpack.c.l.b16 %v970
    %v3274 = vunpack.c.h.b16 %v970
    %v3275 = vpack.c.b16 %v1763, %v1739
    %v3276 = vpack.c.b16 %v1764, %v1740
    %v3277 = vpack.c.b16 %v1765, %v1741
    %v3278 = vpack.c.b16 %v1766, %v1742
    %v3279 = vpack.c.b16 %v1767, %v1743
    %v3280 = vpack.c.b16 %v1768, %v1744
    %v3281 = vpack.c.b16 %v1769, %v1745
    %v3282 = vpack.c.b16 %v1770, %v1746
    %v3283 = vpack.c.b16 %v1771, %v1747
    %v3284 = vpack.c.b16 %v1772, %v1748
    %v3285 = vpack.c.b16 %v1773, %v1749
    %v3286 = vpack.c.b16 %v1774, %v1750
    %v3287 = vpack.c.b16 %v1775, %v1751
    %v3288 = vpack.c.b16 %v1776, %v1752
    %v3289 = vpack.c.b16 %v1777, %v1753
    %v3290 = vpack.c.b16 %v1778, %v1754
    %v3291 = vpack.c.b16 %v1779, %v1755
    %v3292 = vpack.c.b16 %v1780, %v1756
    %v3293 = vpack.c.b16 %v1781, %v1757
    %v3294 = vpack.c.b16 %v1782, %v1758
    %v3295 = vpack.c.b16 %v1783, %v1759
    %v3296 = vpack.c.b16 %v1784, %v1760
    %v3297 = vpack.c.b16 %v1785, %v1761
    %v3298 = vpack.c.b16 %v1786, %v1762
    %v3299 = vpack.c.b16 %v1811, %v1787
    %v3300 = vpack.c.b16 %v1812, %v1788
    %v3301 = vpack.c.b16 %v1813, %v1789
    %v3302 = vpack.c.b16 %v1814, %v1790
    %v3303 = vpack.c.b16 %v1815, %v1791
    %v3304 = vpack.c.b16 %v1816, %v1792
    %v3305 = vpack.c.b16 %v1817, %v1793
    %v3306 = vpack.c.b16 %v1818, %v1794
    %v3307 = vpack.c.b16 %v1819, %v1795
    %v3308 = vpack.c.b16 %v1820, %v1796
    %v3309 = vpack.c.b16 %v1821, %v1797
    %v3310 = vpack.c.b16 %v1822, %v1798
    %v3311 = vpack.c.b16 %v1823, %v1799
    %v3312 = vpack.c.b16 %v1824, %v1800
    %v3313 = vpack.c.b16 %v1825, %v1801
    %v3314 = vpack.c.b16 %v1826, %v1802
    %v3315 = vpack.c.b16 %v1827, %v1803
    %v3316 = vpack.c.b16 %v1828, %v1804
    %v3317 = vpack.c.b16 %v1829, %v1805
    %v3318 = vpack.c.b16 %v1830, %v1806
    %v3319 = vpack.c.b16 %v1831, %v1807
    %v3320 = vpack.c.b16 %v1832, %v1808
    %v3321 = vpack.c.b16 %v1833, %v1809
    %v3322 = vpack.c.b16 %v1834, %v1810
    %v3323 = vpack.c.b16 %v1859, %v1835
    %v3324 = vpack.c.b16 %v1860, %v1836
    %v3325 = vpack.c.b16 %v1861, %v1837
    %v3326 = vpack.c.b16 %v1862, %v1838
    %v3327 = vpack.c.b16 %v1863, %v1839
    %v3328 = vpack.c.b16 %v1864, %v1840
    %v3329 = vpack.c.b16 %v1865, %v1841
    %v3330 = vpack.c.b16 %v1866, %v1842
    %v3331 = vpack.c.b16 %v1867, %v1843
    %v3332 = vpack.c.b16 %v1868, %v1844
    %v3333 = vpack.c.b16 %v1869, %v1845
    %v3334 = vpack.c.b16 %v1870, %v1846
    %v3335 = vpack.c.b16 %v1871, %v1847
    %v3336 = vpack.c.b16 %v1872, %v1848
    %v3337 = vpack.c.b16 %v1873, %v1849
    %v3338 = vpack.c.b16 %v1874, %v1850
    %v3339 = vpack.c.b16 %v1875, %v1851
    %v3340 = vpack.c.b16 %v1876, %v1852
    %v3341 = vpack.c.b16 %v1877, %v1853
    %v3342 = vpack.c.b16 %v1878, %v1854
    %v3343 = vpack.c.b16 %v1879, %v1855
    %v3344 = vpack.c.b16 %v1880, %v1856
    %v3345 = vpack.c.b16 %v1881, %v1857
    %v3346 = vpack.c.b16 %v1882, %v1858
    %v3347 = vpack.c.b16 %v1907, %v1883
    %v3348 = vpack.c.b16 %v1908, %v1884
    %v3349 = vpack.c.b16 %v1909, %v1885
    %v3350 = vpack.c.b16 %v1910, %v1886
    %v3351 = vpack.c.b16 %v1911, %v1887
    %v3352 = vpack.c.b16 %v1912, %v1888
    %v3353 = vpack.c.b16 %v1913, %v1889
    %v3354 = vpack.c.b16 %v1914, %v1890
    %v3355 = vpack.c.b16 %v1915, %v1891
    %v3356 = vpack.c.b16 %v1916, %v1892
    %v3357 = vpack.c.b16 %v1917, %v1893
    %v3358 = vpack.c.b16 %v1918, %v1894
    %v3359 = vpack.c.b16 %v1919, %v1895
    %v3360 = vpack.c.b16 %v1920, %v1896
    %v3361 = vpack.c.b16 %v1921, %v1897
    %v3362 = vpack.c.b16 %v1922, %v1898
    %v3363 = vpack.c.b16 %v1923, %v1899
    %v3364 = vpack.c.b16 %v1924, %v1900
    %v3365 = vpack.c.b16 %v1925, %v1901
    %v3366 = vpack.c.b16 %v1926, %v1902
    %v3367 = vpack.c.b16 %v1927, %v1903
    %v3368 = vpack.c.b16 %v1928, %v1904
    %v3369 = vpack.c.b16 %v1929, %v1905
    %v3370 = vpack.c.b16 %v1930, %v1906
    %v3371 = vpack.c.b16 %v1955, %v1931
    %v3372 = vpack.c.b16 %v1956, %v1932
    %v3373 = vpack.c.b16 %v1957, %v1933
    %v3374 = vpack.c.b16 %v1958, %v1934
    %v3375 = vpack.c.b16 %v1959, %v1935
    %v3376 = vpack.c.b16 %v1960, %v1936
    %v3377 = vpack.c.b16 %v1961, %v1937
    %v3378 = vpack.c.b16 %v1962, %v1938
    %v3379 = vpack.c.b16 %v1963, %v1939
    %v3380 = vpack.c.b16 %v1964, %v1940
    %v3381 = vpack.c.b16 %v1965, %v1941
    %v3382 = vpack.c.b16 %v1966, %v1942
    %v3383 = vpack.c.b16 %v1967, %v1943
    %v3384 = vpack.c.b16 %v1968, %v1944
    %v3385 = vpack.c.b16 %v1969, %v1945
    %v3386 = vpack.c.b16 %v1970, %v1946
    %v3387 = vpack.c.b16 %v1971, %v1947
    %v3388 = vpack.c.b16 %v1972, %v1948
    %v3389 = vpack.c.b16 %v1973, %v1949
    %v3390 = vpack.c.b16 %v1974, %v1950
    %v3391 = vpack.c.b16 %v1975, %v1951
    %v3392 = vpack.c.b16 %v1976, %v1952
    %v3393 = vpack.c.b16 %v1977, %v1953
    %v3394 = vpack.c.b16 %v1978, %v1954
    %v3395 = vpack.c.b16 %v2003, %v1979
    %v3396 = vpack.c.b16 %v2004, %v1980
    %v3397 = vpack.c.b16 %v2005, %v1981
    %v3398 = vpack.c.b16 %v2006, %v1982
    %v3399 = vpack.c.b16 %v2007, %v1983
    %v3400 = vpack.c.b16 %v2008, %v1984
    %v3401 = vpack.c.b16 %v2009, %v1985
    %v3402 = vpack.c.b16 %v2010, %v1986
    %v3403 = vpack.c.b16 %v2011, %v1987
    %v3404 = vpack.c.b16 %v2012, %v1988
    %v3405 = vpack.c.b16 %v2013, %v1989
    %v3406 = vpack.c.b16 %v2014, %v1990
    %v3407 = vpack.c.b16 %v2015, %v1991
    %v3408 = vpack.c.b16 %v2016, %v1992
    %v3409 = vpack.c.b16 %v2017, %v1993
    %v3410 = vpack.c.b16 %v2018, %v1994
    %v3411 = vpack.c.b16 %v2019, %v1995
    %v3412 = vpack.c.b16 %v2020, %v1996
    %v3413 = vpack.c.b16 %v2021, %v1997
    %v3414 = vpack.c.b16 %v2022, %v1998
    %v3415 = vpack.c.b16 %v2023, %v1999
    %v3416 = vpack.c.b16 %v2024, %v2000
    %v3417 = vpack.c.b16 %v2025, %v2001
    %v3418 = vpack.c.b16 %v2026, %v2002
    %v3419 = vpack.c.b16 %v2051, %v2027
    %v3420 = vpack.c.b16 %v2052, %v2028
    %v3421 = vpack.c.b16 %v2053, %v2029
    %v3422 = vpack.c.b16 %v2054, %v2030
    %v3423 = vpack.c.b16 %v2055, %v2031
    %v3424 = vpack.c.b16 %v2056, %v2032
    %v3425 = vpack.c.b16 %v2057, %v2033
    %v3426 = vpack.c.b16 %v2058, %v2034
    %v3427 = vpack.c.b16 %v2059, %v2035
    %v3428 = vpack.c.b16 %v2060, %v2036
    %v3429 = vpack.c.b16 %v2061, %v2037
    %v3430 = vpack.c.b16 %v2062, %v2038
    %v3431 = vpack.c.b16 %v2063, %v2039
    %v3432 = vpack.c.b16 %v2064, %v2040
    %v3433 = vpack.c.b16 %v2065, %v2041
    %v3434 = vpack.c.b16 %v2066, %v2042
    %v3435 = vpack.c.b16 %v2067, %v2043
    %v3436 = vpack.c.b16 %v2068, %v2044
    %v3437 = vpack.c.b16 %v2069, %v2045
    %v3438 = vpack.c.b16 %v2070, %v2046
    %v3439 = vpack.c.b16 %v2071, %v2047
    %v3440 = vpack.c.b16 %v2072, %v2048
    %v3441 = vpack.c.b16 %v2073, %v2049
    %v3442 = vpack.c.b16 %v2074, %v2050
    %v3443 = vpack.c.b16 %v2099, %v2075
    %v3444 = vpack.c.b16 %v2100, %v2076
    %v3445 = vpack.c.b16 %v2101, %v2077
    %v3446 = vpack.c.b16 %v2102, %v2078
    %v3447 = vpack.c.b16 %v2103, %v2079
    %v3448 = vpack.c.b16 %v2104, %v2080
    %v3449 = vpack.c.b16 %v2105, %v2081
    %v3450 = vpack.c.b16 %v2106, %v2082
    %v3451 = vpack.c.b16 %v2107, %v2083
    %v3452 = vpack.c.b16 %v2108, %v2084
    %v3453 = vpack.c.b16 %v2109, %v2085
    %v3454 = vpack.c.b16 %v2110, %v2086
    %v3455 = vpack.c.b16 %v2111, %v2087
    %v3456 = vpack.c.b16 %v2112, %v2088
    %v3457 = vpack.c.b16 %v2113, %v2089
    %v3458 = vpack.c.b16 %v2114, %v2090
    %v3459 = vpack.c.b16 %v2115, %v2091
    %v3460 = vpack.c.b16 %v2116, %v2092
    %v3461 = vpack.c.b16 %v2117, %v2093
    %v3462 = vpack.c.b16 %v2118, %v2094
    %v3463 = vpack.c.b16 %v2119, %v2095
    %v3464 = vpack.c.b16 %v2120, %v2096
    %v3465 = vpack.c.b16 %v2121, %v2097
    %v3466 = vpack.c.b16 %v2122, %v2098
    %v3467 = vpack.c.b16 %v2147, %v2123
    %v3468 = vpack.c.b16 %v2148, %v2124
    %v3469 = vpack.c.b16 %v2149, %v2125
    %v3470 = vpack.c.b16 %v2150, %v2126
    %v3471 = vpack.c.b16 %v2151, %v2127
    %v3472 = vpack.c.b16 %v2152, %v2128
    %v3473 = vpack.c.b16 %v2153, %v2129
    %v3474 = vpack.c.b16 %v2154, %v2130
    %v3475 = vpack.c.b16 %v2155, %v2131
    %v3476 = vpack.c.b16 %v2156, %v2132
    %v3477 = vpack.c.b16 %v2157, %v2133
    %v3478 = vpack.c.b16 %v2158, %v2134
    %v3479 = vpack.c.b16 %v2159, %v2135
    %v3480 = vpack.c.b16 %v2160, %v2136
    %v3481 = vpack.c.b16 %v2161, %v2137
    %v3482 = vpack.c.b16 %v2162, %v2138
    %v3483 = vpack.c.b16 %v2163, %v2139
    %v3484 = vpack.c.b16 %v2164, %v2140
    %v3485 = vpack.c.b16 %v2165, %v2141
    %v3486 = vpack.c.b16 %v2166, %v2142
    %v3487 = vpack.c.b16 %v2167, %v2143
    %v3488 = vpack.c.b16 %v2168, %v2144
    %v3489 = vpack.c.b16 %v2169, %v2145
    %v3490 = vpack.c.b16 %v2170, %v2146
    %v3491 = vpack.c.b16 %v2195, %v2171
    %v3492 = vpack.c.b16 %v2196, %v2172
    %v3493 = vpack.c.b16 %v2197, %v2173
    %v3494 = vpack.c.b16 %v2198, %v2174
    %v3495 = vpack.c.b16 %v2199, %v2175
    %v3496 = vpack.c.b16 %v2200, %v2176
    %v3497 = vpack.c.b16 %v2201, %v2177
    %v3498 = vpack.c.b16 %v2202, %v2178
    %v3499 = vpack.c.b16 %v2203, %v2179
    %v3500 = vpack.c.b16 %v2204, %v2180
    %v3501 = vpack.c.b16 %v2205, %v2181
    %v3502 = vpack.c.b16 %v2206, %v2182
    %v3503 = vpack.c.b16 %v2207, %v2183
    %v3504 = vpack.c.b16 %v2208, %v2184
    %v3505 = vpack.c.b16 %v2209, %v2185
    %v3506 = vpack.c.b16 %v2210, %v2186
    %v3507 = vpack.c.b16 %v2211, %v2187
    %v3508 = vpack.c.b16 %v2212, %v2188
    %v3509 = vpack.c.b16 %v2213, %v2189
    %v3510 = vpack.c.b16 %v2214, %v2190
    %v3511 = vpack.c.b16 %v2215, %v2191
    %v3512 = vpack.c.b16 %v2216, %v2192
    %v3513 = vpack.c.b16 %v2217, %v2193
    %v3514 = vpack.c.b16 %v2218, %v2194
    %v3515 = vpack.c.b16 %v2243, %v2219
    %v3516 = vpack.c.b16 %v2244, %v2220
    %v3517 = vpack.c.b16 %v2245, %v2221
    %v3518 = vpack.c.b16 %v2246, %v2222
    %v3519 = vpack.c.b16 %v2247, %v2223
    %v3520 = vpack.c.b16 %v2248, %v2224
    %v3521 = vpack.c.b16 %v2249, %v2225
    %v3522 = vpack.c.b16 %v2250, %v2226
    %v3523 = vpack.c.b16 %v2251, %v2227
    %v3524 = vpack.c.b16 %v2252, %v2228
    %v3525 = vpack.c.b16 %v2253, %v2229
    %v3526 = vpack.c.b16 %v2254, %v2230
    %v3527 = vpack.c.b16 %v2255, %v2231
    %v3528 = vpack.c.b16 %v2256, %v2232
    %v3529 = vpack.c.b16 %v2257, %v2233
    %v3530 = vpack.c.b16 %v2258, %v2234
    %v3531 = vpack.c.b16 %v2259, %v2235
    %v3532 = vpack.c.b16 %v2260, %v2236
    %v3533 = vpack.c.b16 %v2261, %v2237
    %v3534 = vpack.c.b16 %v2262, %v2238
    %v3535 = vpack.c.b16 %v2263, %v2239
    %v3536 = vpack.c.b16 %v2264, %v2240
    %v3537 = vpack.c.b16 %v2265, %v2241
    %v3538 = vpack.c.b16 %v2266, %v2242
    %v3539 = vpack.c.b16 %v2291, %v2267
    %v3540 = vpack.c.b16 %v2292, %v2268
    %v3541 = vpack.c.b16 %v2293, %v2269
    %v3542 = vpack.c.b16 %v2294, %v2270
    %v3543 = vpack.c.b16 %v2295, %v2271
    %v3544 = vpack.c.b16 %v2296, %v2272
    %v3545 = vpack.c.b16 %v2297, %v2273
    %v3546 = vpack.c.b16 %v2298, %v2274
    %v3547 = vpack.c.b16 %v2299, %v2275
    %v3548 = vpack.c.b16 %v2300, %v2276
    %v3549 = vpack.c.b16 %v2301, %v2277
    %v3550 = vpack.c.b16 %v2302, %v2278
    %v3551 = vpack.c.b16 %v2303, %v2279
    %v3552 = vpack.c.b16 %v2304, %v2280
    %v3553 = vpack.c.b16 %v2305, %v2281
    %v3554 = vpack.c.b16 %v2306, %v2282
    %v3555 = vpack.c.b16 %v2307, %v2283
    %v3556 = vpack.c.b16 %v2308, %v2284
    %v3557 = vpack.c.b16 %v2309, %v2285
    %v3558 = vpack.c.b16 %v2310, %v2286
    %v3559 = vpack.c.b16 %v2311, %v2287
    %v3560 = vpack.c.b16 %v2312, %v2288
    %v3561 = vpack.c.b16 %v2313, %v2289
    %v3562 = vpack.c.b16 %v2314, %v2290
    %v3563 = vpack.c.b16 %v2339, %v2315
    %v3564 = vpack.c.b16 %v2340, %v2316
    %v3565 = vpack.c.b16 %v2341, %v2317
    %v3566 = vpack.c.b16 %v2342, %v2318
    %v3567 = vpack.c.b16 %v2343, %v2319
    %v3568 = vpack.c.b16 %v2344, %v2320
    %v3569 = vpack.c.b16 %v2345, %v2321
    %v3570 = vpack.c.b16 %v2346, %v2322
    %v3571 = vpack.c.b16 %v2347, %v2323
    %v3572 = vpack.c.b16 %v2348, %v2324
    %v3573 = vpack.c.b16 %v2349, %v2325
    %v3574 = vpack.c.b16 %v2350, %v2326
    %v3575 = vpack.c.b16 %v2351, %v2327
    %v3576 = vpack.c.b16 %v2352, %v2328
    %v3577 = vpack.c.b16 %v2353, %v2329
    %v3578 = vpack.c.b16 %v2354, %v2330
    %v3579 = vpack.c.b16 %v2355, %v2331
    %v3580 = vpack.c.b16 %v2356, %v2332
    %v3581 = vpack.c.b16 %v2357, %v2333
    %v3582 = vpack.c.b16 %v2358, %v2334
    %v3583 = vpack.c.b16 %v2359, %v2335
    %v3584 = vpack.c.b16 %v2360, %v2336
    %v3585 = vpack.c.b16 %v2361, %v2337
    %v3586 = vpack.c.b16 %v2362, %v2338
    %v3587 = vpack.c.b16 %v2387, %v2363
    %v3588 = vpack.c.b16 %v2388, %v2364
    %v3589 = vpack.c.b16 %v2389, %v2365
    %v3590 = vpack.c.b16 %v2390, %v2366
    %v3591 = vpack.c.b16 %v2391, %v2367
    %v3592 = vpack.c.b16 %v2392, %v2368
    %v3593 = vpack.c.b16 %v2393, %v2369
    %v3594 = vpack.c.b16 %v2394, %v2370
    %v3595 = vpack.c.b16 %v2395, %v2371
    %v3596 = vpack.c.b16 %v2396, %v2372
    %v3597 = vpack.c.b16 %v2397, %v2373
    %v3598 = vpack.c.b16 %v2398, %v2374
    %v3599 = vpack.c.b16 %v2399, %v2375
    %v3600 = vpack.c.b16 %v2400, %v2376
    %v3601 = vpack.c.b16 %v2401, %v2377
    %v3602 = vpack.c.b16 %v2402, %v2378
    %v3603 = vpack.c.b16 %v2403, %v2379
    %v3604 = vpack.c.b16 %v2404, %v2380
    %v3605 = vpack.c.b16 %v2405, %v2381
    %v3606 = vpack.c.b16 %v2406, %v2382
    %v3607 = vpack.c.b16 %v2407, %v2383
    %v3608 = vpack.c.b16 %v2408, %v2384
    %v3609 = vpack.c.b16 %v2409, %v2385
    %v3610 = vpack.c.b16 %v2410, %v2386
    %v3611 = vpack.c.b16 %v2435, %v2411
    %v3612 = vpack.c.b16 %v2436, %v2412
    %v3613 = vpack.c.b16 %v2437, %v2413
    %v3614 = vpack.c.b16 %v2438, %v2414
    %v3615 = vpack.c.b16 %v2439, %v2415
    %v3616 = vpack.c.b16 %v2440, %v2416
    %v3617 = vpack.c.b16 %v2441, %v2417
    %v3618 = vpack.c.b16 %v2442, %v2418
    %v3619 = vpack.c.b16 %v2443, %v2419
    %v3620 = vpack.c.b16 %v2444, %v2420
    %v3621 = vpack.c.b16 %v2445, %v2421
    %v3622 = vpack.c.b16 %v2446, %v2422
    %v3623 = vpack.c.b16 %v2447, %v2423
    %v3624 = vpack.c.b16 %v2448, %v2424
    %v3625 = vpack.c.b16 %v2449, %v2425
    %v3626 = vpack.c.b16 %v2450, %v2426
    %v3627 = vpack.c.b16 %v2451, %v2427
    %v3628 = vpack.c.b16 %v2452, %v2428
    %v3629 = vpack.c.b16 %v2453, %v2429
    %v3630 = vpack.c.b16 %v2454, %v2430
    %v3631 = vpack.c.b16 %v2455, %v2431
    %v3632 = vpack.c.b16 %v2456, %v2432
    %v3633 = vpack.c.b16 %v2457, %v2433
    %v3634 = vpack.c.b16 %v2458, %v2434
    %v3635 = vpack.c.b16 %v2483, %v2459
    %v3636 = vpack.c.b16 %v2484, %v2460
    %v3637 = vpack.c.b16 %v2485, %v2461
    %v3638 = vpack.c.b16 %v2486, %v2462
    %v3639 = vpack.c.b16 %v2487, %v2463
    %v3640 = vpack.c.b16 %v2488, %v2464
    %v3641 = vpack.c.b16 %v2489, %v2465
    %v3642 = vpack.c.b16 %v2490, %v2466
    %v3643 = vpack.c.b16 %v2491, %v2467
    %v3644 = vpack.c.b16 %v2492, %v2468
    %v3645 = vpack.c.b16 %v2493, %v2469
    %v3646 = vpack.c.b16 %v2494, %v2470
    %v3647 = vpack.c.b16 %v2495, %v2471
    %v3648 = vpack.c.b16 %v2496, %v2472
    %v3649 = vpack.c.b16 %v2497, %v2473
    %v3650 = vpack.c.b16 %v2498, %v2474
    %v3651 = vpack.c.b16 %v2499, %v2475
    %v3652 = vpack.c.b16 %v2500, %v2476
    %v3653 = vpack.c.b16 %v2501, %v2477
    %v3654 = vpack.c.b16 %v2502, %v2478
    %v3655 = vpack.c.b16 %v2503, %v2479
    %v3656 = vpack.c.b16 %v2504, %v2480
    %v3657 = vpack.c.b16 %v2505, %v2481
    %v3658 = vpack.c.b16 %v2506, %v2482
    %v3659 = vpack.c.b16 %v2531, %v2507
    %v3660 = vpack.c.b16 %v2532, %v2508
    %v3661 = vpack.c.b16 %v2533, %v2509
    %v3662 = vpack.c.b16 %v2534, %v2510
    %v3663 = vpack.c.b16 %v2535, %v2511
    %v3664 = vpack.c.b16 %v2536, %v2512
    %v3665 = vpack.c.b16 %v2537, %v2513
    %v3666 = vpack.c.b16 %v2538, %v2514
    %v3667 = vpack.c.b16 %v2539, %v2515
    %v3668 = vpack.c.b16 %v2540, %v2516
    %v3669 = vpack.c.b16 %v2541, %v2517
    %v3670 = vpack.c.b16 %v2542, %v2518
    %v3671 = vpack.c.b16 %v2543, %v2519
    %v3672 = vpack.c.b16 %v2544, %v2520
    %v3673 = vpack.c.b16 %v2545, %v2521
    %v3674 = vpack.c.b16 %v2546, %v2522
    %v3675 = vpack.c.b16 %v2547, %v2523
    %v3676 = vpack.c.b16 %v2548, %v2524
    %v3677 = vpack.c.b16 %v2549, %v2525
    %v3678 = vpack.c.b16 %v2550, %v2526
    %v3679 = vpack.c.b16 %v2551, %v2527
    %v3680 = vpack.c.b16 %v2552, %v2528
    %v3681 = vpack.c.b16 %v2553, %v2529
    %v3682 = vpack.c.b16 %v2554, %v2530
    %v3683 = vpack.c.b16 %v2579, %v2555
    %v3684 = vpack.c.b16 %v2580, %v2556
    %v3685 = vpack.c.b16 %v2581, %v2557
    %v3686 = vpack.c.b16 %v2582, %v2558
    %v3687 = vpack.c.b16 %v2583, %v2559
    %v3688 = vpack.c.b16 %v2584, %v2560
    %v3689 = vpack.c.b16 %v2585, %v2561
    %v3690 = vpack.c.b16 %v2586, %v2562
    %v3691 = vpack.c.b16 %v2587, %v2563
    %v3692 = vpack.c.b16 %v2588, %v2564
    %v3693 = vpack.c.b16 %v2589, %v2565
    %v3694 = vpack.c.b16 %v2590, %v2566
    %v3695 = vpack.c.b16 %v2591, %v2567
    %v3696 = vpack.c.b16 %v2592, %v2568
    %v3697 = vpack.c.b16 %v2593, %v2569
    %v3698 = vpack.c.b16 %v2594, %v2570
    %v3699 = vpack.c.b16 %v2595, %v2571
    %v3700 = vpack.c.b16 %v2596, %v2572
    %v3701 = vpack.c.b16 %v2597, %v2573
    %v3702 = vpack.c.b16 %v2598, %v2574
    %v3703 = vpack.c.b16 %v2599, %v2575
    %v3704 = vpack.c.b16 %v2600, %v2576
    %v3705 = vpack.c.b16 %v2601, %v2577
    %v3706 = vpack.c.b16 %v2602, %v2578
    %v3707 = vpack.c.b16 %v2627, %v2603
    %v3708 = vpack.c.b16 %v2628, %v2604
    %v3709 = vpack.c.b16 %v2629, %v2605
    %v3710 = vpack.c.b16 %v2630, %v2606
    %v3711 = vpack.c.b16 %v2631, %v2607
    %v3712 = vpack.c.b16 %v2632, %v2608
    %v3713 = vpack.c.b16 %v2633, %v2609
    %v3714 = vpack.c.b16 %v2634, %v2610
    %v3715 = vpack.c.b16 %v2635, %v2611
    %v3716 = vpack.c.b16 %v2636, %v2612
    %v3717 = vpack.c.b16 %v2637, %v2613
    %v3718 = vpack.c.b16 %v2638, %v2614
    %v3719 = vpack.c.b16 %v2639, %v2615
    %v3720 = vpack.c.b16 %v2640, %v2616
    %v3721 = vpack.c.b16 %v2641, %v2617
    %v3722 = vpack.c.b16 %v2642, %v2618
    %v3723 = vpack.c.b16 %v2643, %v2619
    %v3724 = vpack.c.b16 %v2644, %v2620
    %v3725 = vpack.c.b16 %v2645, %v2621
    %v3726 = vpack.c.b16 %v2646, %v2622
    %v3727 = vpack.c.b16 %v2647, %v2623
    %v3728 = vpack.c.b16 %v2648, %v2624
    %v3729 = vpack.c.b16 %v2649, %v2625
    %v3730 = vpack.c.b16 %v2650, %v2626
    %v3731 = vpack.c.b16 %v2675, %v2651
    %v3732 = vpack.c.b16 %v2676, %v2652
    %v3733 = vpack.c.b16 %v2677, %v2653
    %v3734 = vpack.c.b16 %v2678, %v2654
    %v3735 = vpack.c.b16 %v2679, %v2655
    %v3736 = vpack.c.b16 %v2680, %v2656
    %v3737 = vpack.c.b16 %v2681, %v2657
    %v3738 = vpack.c.b16 %v2682, %v2658
    %v3739 = vpack.c.b16 %v2683, %v2659
    %v3740 = vpack.c.b16 %v2684, %v2660
    %v3741 = vpack.c.b16 %v2685, %v2661
    %v3742 = vpack.c.b16 %v2686, %v2662
    %v3743 = vpack.c.b16 %v2687, %v2663
    %v3744 = vpack.c.b16 %v2688, %v2664
    %v3745 = vpack.c.b16 %v2689, %v2665
    %v3746 = vpack.c.b16 %v2690, %v2666
    %v3747 = vpack.c.b16 %v2691, %v2667
    %v3748 = vpack.c.b16 %v2692, %v2668
    %v3749 = vpack.c.b16 %v2693, %v2669
    %v3750 = vpack.c.b16 %v2694, %v2670
    %v3751 = vpack.c.b16 %v2695, %v2671
    %v3752 = vpack.c.b16 %v2696, %v2672
    %v3753 = vpack.c.b16 %v2697, %v2673
    %v3754 = vpack.c.b16 %v2698, %v2674
    %v3755 = vpack.c.b16 %v2723, %v2699
    %v3756 = vpack.c.b16 %v2724, %v2700
    %v3757 = vpack.c.b16 %v2725, %v2701
    %v3758 = vpack.c.b16 %v2726, %v2702
    %v3759 = vpack.c.b16 %v2727, %v2703
    %v3760 = vpack.c.b16 %v2728, %v2704
    %v3761 = vpack.c.b16 %v2729, %v2705
    %v3762 = vpack.c.b16 %v2730, %v2706
    %v3763 = vpack.c.b16 %v2731, %v2707
    %v3764 = vpack.c.b16 %v2732, %v2708
    %v3765 = vpack.c.b16 %v2733, %v2709
    %v3766 = vpack.c.b16 %v2734, %v2710
    %v3767 = vpack.c.b16 %v2735, %v2711
    %v3768 = vpack.c.b16 %v2736, %v2712
    %v3769 = vpack.c.b16 %v2737, %v2713
    %v3770 = vpack.c.b16 %v2738, %v2714
    %v3771 = vpack.c.b16 %v2739, %v2715
    %v3772 = vpack.c.b16 %v2740, %v2716
    %v3773 = vpack.c.b16 %v2741, %v2717
    %v3774 = vpack.c.b16 %v2742, %v2718
    %v3775 = vpack.c.b16 %v2743, %v2719
    %v3776 = vpack.c.b16 %v2744, %v2720
    %v3777 = vpack.c.b16 %v2745, %v2721
    %v3778 = vpack.c.b16 %v2746, %v2722
    %v3779 = vpack.c.b16 %v2771, %v2747
    %v3780 = vpack.c.b16 %v2772, %v2748
    %v3781 = vpack.c.b16 %v2773, %v2749
    %v3782 = vpack.c.b16 %v2774, %v2750
    %v3783 = vpack.c.b16 %v2775, %v2751
    %v3784 = vpack.c.b16 %v2776, %v2752
    %v3785 = vpack.c.b16 %v2777, %v2753
    %v3786 = vpack.c.b16 %v2778, %v2754
    %v3787 = vpack.c.b16 %v2779, %v2755
    %v3788 = vpack.c.b16 %v2780, %v2756
    %v3789 = vpack.c.b16 %v2781, %v2757
    %v3790 = vpack.c.b16 %v2782, %v2758
    %v3791 = vpack.c.b16 %v2783, %v2759
    %v3792 = vpack.c.b16 %v2784, %v2760
    %v3793 = vpack.c.b16 %v2785, %v2761
    %v3794 = vpack.c.b16 %v2786, %v2762
    %v3795 = vpack.c.b16 %v2787, %v2763
    %v3796 = vpack.c.b16 %v2788, %v2764
    %v3797 = vpack.c.b16 %v2789, %v2765
    %v3798 = vpack.c.b16 %v2790, %v2766
    %v3799 = vpack.c.b16 %v2791, %v2767
    %v3800 = vpack.c.b16 %v2792, %v2768
    %v3801 = vpack.c.b16 %v2793, %v2769
    %v3802 = vpack.c.b16 %v2794, %v2770
    %v3803 = vpack.c.b16 %v2819, %v2795
    %v3804 = vpack.c.b16 %v2820, %v2796
    %v3805 = vpack.c.b16 %v2821, %v2797
    %v3806 = vpack.c.b16 %v2822, %v2798
    %v3807 = vpack.c.b16 %v2823, %v2799
    %v3808 = vpack.c.b16 %v2824, %v2800
    %v3809 = vpack.c.b16 %v2825, %v2801
    %v3810 = vpack.c.b16 %v2826, %v2802
    %v3811 = vpack.c.b16 %v2827, %v2803
    %v3812 = vpack.c.b16 %v2828, %v2804
    %v3813 = vpack.c.b16 %v2829, %v2805
    %v3814 = vpack.c.b16 %v2830, %v2806
    %v3815 = vpack.c.b16 %v2831, %v2807
    %v3816 = vpack.c.b16 %v2832, %v2808
    %v3817 = vpack.c.b16 %v2833, %v2809
    %v3818 = vpack.c.b16 %v2834, %v2810
    %v3819 = vpack.c.b16 %v2835, %v2811
    %v3820 = vpack.c.b16 %v2836, %v2812
    %v3821 = vpack.c.b16 %v2837, %v2813
    %v3822 = vpack.c.b16 %v2838, %v2814
    %v3823 = vpack.c.b16 %v2839, %v2815
    %v3824 = vpack.c.b16 %v2840, %v2816
    %v3825 = vpack.c.b16 %v2841, %v2817
    %v3826 = vpack.c.b16 %v2842, %v2818
    %v3827 = vpack.c.b16 %v2867, %v2843
    %v3828 = vpack.c.b16 %v2868, %v2844
    %v3829 = vpack.c.b16 %v2869, %v2845
    %v3830 = vpack.c.b16 %v2870, %v2846
    %v3831 = vpack.c.b16 %v2871, %v2847
    %v3832 = vpack.c.b16 %v2872, %v2848
    %v3833 = vpack.c.b16 %v2873, %v2849
    %v3834 = vpack.c.b16 %v2874, %v2850
    %v3835 = vpack.c.b16 %v2875, %v2851
    %v3836 = vpack.c.b16 %v2876, %v2852
    %v3837 = vpack.c.b16 %v2877, %v2853
    %v3838 = vpack.c.b16 %v2878, %v2854
    %v3839 = vpack.c.b16 %v2879, %v2855
    %v3840 = vpack.c.b16 %v2880, %v2856
    %v3841 = vpack.c.b16 %v2881, %v2857
    %v3842 = vpack.c.b16 %v2882, %v2858
    %v3843 = vpack.c.b16 %v2883, %v2859
    %v3844 = vpack.c.b16 %v2884, %v2860
    %v3845 = vpack.c.b16 %v2885, %v2861
    %v3846 = vpack.c.b16 %v2886, %v2862
    %v3847 = vpack.c.b16 %v2887, %v2863
    %v3848 = vpack.c.b16 %v2888, %v2864
    %v3849 = vpack.c.b16 %v2889, %v2865
    %v3850 = vpack.c.b16 %v2890, %v2866
    %v3851 = vpack.c.b16 %v2915, %v2891
    %v3852 = vpack.c.b16 %v2916, %v2892
    %v3853 = vpack.c.b16 %v2917, %v2893
    %v3854 = vpack.c.b16 %v2918, %v2894
    %v3855 = vpack.c.b16 %v2919, %v2895
    %v3856 = vpack.c.b16 %v2920, %v2896
    %v3857 = vpack.c.b16 %v2921, %v2897
    %v3858 = vpack.c.b16 %v2922, %v2898
    %v3859 = vpack.c.b16 %v2923, %v2899
    %v3860 = vpack.c.b16 %v2924, %v2900
    %v3861 = vpack.c.b16 %v2925, %v2901
    %v3862 = vpack.c.b16 %v2926, %v2902
    %v3863 = vpack.c.b16 %v2927, %v2903
    %v3864 = vpack.c.b16 %v2928, %v2904
    %v3865 = vpack.c.b16 %v2929, %v2905
    %v3866 = vpack.c.b16 %v2930, %v2906
    %v3867 = vpack.c.b16 %v2931, %v2907
    %v3868 = vpack.c.b16 %v2932, %v2908
    %v3869 = vpack.c.b16 %v2933, %v2909
    %v3870 = vpack.c.b16 %v2934, %v2910
    %v3871 = vpack.c.b16 %v2935, %v2911
    %v3872 = vpack.c.b16 %v2936, %v2912
    %v3873 = vpack.c.b16 %v2937, %v2913
    %v3874 = vpack.c.b16 %v2938, %v2914
    %v3875 = vpack.c.b16 %v2963, %v2939
    %v3876 = vpack.c.b16 %v2964, %v2940
    %v3877 = vpack.c.b16 %v2965, %v2941
    %v3878 = vpack.c.b16 %v2966, %v2942
    %v3879 = vpack.c.b16 %v2967, %v2943
    %v3880 = vpack.c.b16 %v2968, %v2944
    %v3881 = vpack.c.b16 %v2969, %v2945
    %v3882 = vpack.c.b16 %v2970, %v2946
    %v3883 = vpack.c.b16 %v2971, %v2947
    %v3884 = vpack.c.b16 %v2972, %v2948
    %v3885 = vpack.c.b16 %v2973, %v2949
    %v3886 = vpack.c.b16 %v2974, %v2950
    %v3887 = vpack.c.b16 %v2975, %v2951
    %v3888 = vpack.c.b16 %v2976, %v2952
    %v3889 = vpack.c.b16 %v2977, %v2953
    %v3890 = vpack.c.b16 %v2978, %v2954
    %v3891 = vpack.c.b16 %v2979, %v2955
    %v3892 = vpack.c.b16 %v2980, %v2956
    %v3893 = vpack.c.b16 %v2981, %v2957
    %v3894 = vpack.c.b16 %v2982, %v2958
    %v3895 = vpack.c.b16 %v2983, %v2959
    %v3896 = vpack.c.b16 %v2984, %v2960
    %v3897 = vpack.c.b16 %v2985, %v2961
    %v3898 = vpack.c.b16 %v2986, %v2962
    %v3899 = vpack.c.b16 %v3011, %v2987
    %v3900 = vpack.c.b16 %v3012, %v2988
    %v3901 = vpack.c.b16 %v3013, %v2989
    %v3902 = vpack.c.b16 %v3014, %v2990
    %v3903 = vpack.c.b16 %v3015, %v2991
    %v3904 = vpack.c.b16 %v3016, %v2992
    %v3905 = vpack.c.b16 %v3017, %v2993
    %v3906 = vpack.c.b16 %v3018, %v2994
    %v3907 = vpack.c.b16 %v3019, %v2995
    %v3908 = vpack.c.b16 %v3020, %v2996
    %v3909 = vpack.c.b16 %v3021, %v2997
    %v3910 = vpack.c.b16 %v3022, %v2998
    %v3911 = vpack.c.b16 %v3023, %v2999
    %v3912 = vpack.c.b16 %v3024, %v3000
    %v3913 = vpack.c.b16 %v3025, %v3001
    %v3914 = vpack.c.b16 %v3026, %v3002
    %v3915 = vpack.c.b16 %v3027, %v3003
    %v3916 = vpack.c.b16 %v3028, %v3004
    %v3917 = vpack.c.b16 %v3029, %v3005
    %v3918 = vpack.c.b16 %v3030, %v3006
    %v3919 = vpack.c.b16 %v3031, %v3007
    %v3920 = vpack.c.b16 %v3032, %v3008
    %v3921 = vpack.c.b16 %v3033, %v3009
    %v3922 = vpack.c.b16 %v3034, %v3010
    %v3923 = vpack.c.b16 %v3059, %v3035
    %v3924 = vpack.c.b16 %v3060, %v3036
    %v3925 = vpack.c.b16 %v3061, %v3037
    %v3926 = vpack.c.b16 %v3062, %v3038
    %v3927 = vpack.c.b16 %v3063, %v3039
    %v3928 = vpack.c.b16 %v3064, %v3040
    %v3929 = vpack.c.b16 %v3065, %v3041
    %v3930 = vpack.c.b16 %v3066, %v3042
    %v3931 = vpack.c.b16 %v3067, %v3043
    %v3932 = vpack.c.b16 %v3068, %v3044
    %v3933 = vpack.c.b16 %v3069, %v3045
    %v3934 = vpack.c.b16 %v3070, %v3046
    %v3935 = vpack.c.b16 %v3071, %v3047
    %v3936 = vpack.c.b16 %v3072, %v3048
    %v3937 = vpack.c.b16 %v3073, %v3049
    %v3938 = vpack.c.b16 %v3074, %v3050
    %v3939 = vpack.c.b16 %v3075, %v3051
    %v3940 = vpack.c.b16 %v3076, %v3052
    %v3941 = vpack.c.b16 %v3077, %v3053
    %v3942 = vpack.c.b16 %v3078, %v3054
    %v3943 = vpack.c.b16 %v3079, %v3055
    %v3944 = vpack.c.b16 %v3080, %v3056
    %v3945 = vpack.c.b16 %v3081, %v3057
    %v3946 = vpack.c.b16 %v3082, %v3058
    %v3947 = vpack.c.b16 %v3107, %v3083
    %v3948 = vpack.c.b16 %v3108, %v3084
    %v3949 = vpack.c.b16 %v3109, %v3085
    %v3950 = vpack.c.b16 %v3110, %v3086
    %v3951 = vpack.c.b16 %v3111, %v3087
    %v3952 = vpack.c.b16 %v3112, %v3088
    %v3953 = vpack.c.b16 %v3113, %v3089
    %v3954 = vpack.c.b16 %v3114, %v3090
    %v3955 = vpack.c.b16 %v3115, %v3091
    %v3956 = vpack.c.b16 %v3116, %v3092
    %v3957 = vpack.c.b16 %v3117, %v3093
    %v3958 = vpack.c.b16 %v3118, %v3094
    %v3959 = vpack.c.b16 %v3119, %v3095
    %v3960 = vpack.c.b16 %v3120, %v3096
    %v3961 = vpack.c.b16 %v3121, %v3097
    %v3962 = vpack.c.b16 %v3122, %v3098
    %v3963 = vpack.c.b16 %v3123, %v3099
    %v3964 = vpack.c.b16 %v3124, %v3100
    %v3965 = vpack.c.b16 %v3125, %v3101
    %v3966 = vpack.c.b16 %v3126, %v3102
    %v3967 = vpack.c.b16 %v3127, %v3103
    %v3968 = vpack.c.b16 %v3128, %v3104
    %v3969 = vpack.c.b16 %v3129, %v3105
    %v3970 = vpack.c.b16 %v3130, %v3106
    %v3971 = vpack.c.b16 %v3155, %v3131
    %v3972 = vpack.c.b16 %v3156, %v3132
    %v3973 = vpack.c.b16 %v3157, %v3133
    %v3974 = vpack.c.b16 %v3158, %v3134
    %v3975 = vpack.c.b16 %v3159, %v3135
    %v3976 = vpack.c.b16 %v3160, %v3136
    %v3977 = vpack.c.b16 %v3161, %v3137
    %v3978 = vpack.c.b16 %v3162, %v3138
    %v3979 = vpack.c.b16 %v3163, %v3139
    %v3980 = vpack.c.b16 %v3164, %v3140
    %v3981 = vpack.c.b16 %v3165, %v3141
    %v3982 = vpack.c.b16 %v3166, %v3142
    %v3983 = vpack.c.b16 %v3167, %v3143
    %v3984 = vpack.c.b16 %v3168, %v3144
    %v3985 = vpack.c.b16 %v3169, %v3145
    %v3986 = vpack.c.b16 %v3170, %v3146
    %v3987 = vpack.c.b16 %v3171, %v3147
    %v3988 = vpack.c.b16 %v3172, %v3148
    %v3989 = vpack.c.b16 %v3173, %v3149
    %v3990 = vpack.c.b16 %v3174, %v3150
    %v3991 = vpack.c.b16 %v3175, %v3151
    %v3992 = vpack.c.b16 %v3176, %v3152
    %v3993 = vpack.c.b16 %v3177, %v3153
    %v3994 = vpack.c.b16 %v3178, %v3154
    %v3995 = vpack.c.b16 %v3203, %v3179
    %v3996 = vpack.c.b16 %v3204, %v3180
    %v3997 = vpack.c.b16 %v3205, %v3181
    %v3998 = vpack.c.b16 %v3206, %v3182
    %v3999 = vpack.c.b16 %v3207, %v3183
    %v4000 = vpack.c.b16 %v3208, %v3184
    %v4001 = vpack.c.b16 %v3209, %v3185
    %v4002 = vpack.c.b16 %v3210, %v3186
    %v4003 = vpack.c.b16 %v3211, %v3187
    %v4004 = vpack.c.b16 %v3212, %v3188
    %v4005 = vpack.c.b16 %v3213, %v3189
    %v4006 = vpack.c.b16 %v3214, %v3190
    %v4007 = vpack.c.b16 %v3215, %v3191
    %v4008 = vpack.c.b16 %v3216, %v3192
    %v4009 = vpack.c.b16 %v3217, %v3193
    %v4010 = vpack.c.b16 %v3218, %v3194
    %v4011 = vpack.c.b16 %v3219, %v3195
    %v4012 = vpack.c.b16 %v3220, %v3196
    %v4013 = vpack.c.b16 %v3221, %v3197
    %v4014 = vpack.c.b16 %v3222, %v3198
    %v4015 = vpack.c.b16 %v3223, %v3199
    %v4016 = vpack.c.b16 %v3224, %v3200
    %v4017 = vpack.c.b16 %v3225, %v3201
    %v4018 = vpack.c.b16 %v3226, %v3202
    %v4019 = vpack.c.b16 %v3251, %v3227
    %v4020 = vpack.c.b16 %v3252, %v3228
    %v4021 = vpack.c.b16 %v3253, %v3229
    %v4022 = vpack.c.b16 %v3254, %v3230
    %v4023 = vpack.c.b16 %v3255, %v3231
    %v4024 = vpack.c.b16 %v3256, %v3232
    %v4025 = vpack.c.b16 %v3257, %v3233
    %v4026 = vpack.c.b16 %v3258, %v3234
    %v4027 = vpack.c.b16 %v3259, %v3235
    %v4028 = vpack.c.b16 %v3260, %v3236
    %v4029 = vpack.c.b16 %v3261, %v3237
    %v4030 = vpack.c.b16 %v3262, %v3238
    %v4031 = vpack.c.b16 %v3263, %v3239
    %v4032 = vpack.c.b16 %v3264, %v3240
    %v4033 = vpack.c.b16 %v3265, %v3241
    %v4034 = vpack.c.b16 %v3266, %v3242
    %v4035 = vpack.c.b16 %v3267, %v3243
    %v4036 = vpack.c.b16 %v3268, %v3244
    %v4037 = vpack.c.b16 %v3269, %v3245
    %v4038 = vpack.c.b16 %v3270, %v3246
    %v4039 = vpack.c.b16 %v3271, %v3247
    %v4040 = vpack.c.b16 %v3272, %v3248
    %v4041 = vpack.c.b16 %v3273, %v3249
    %v4042 = vpack.c.b16 %v3274, %v3250
    %4811 = vmatpush.bf16.msra.mxu0 %v3443
    %4812 = vmatpush.bf16.msra.mxu0 %v3419
    %4813 = vmatpush.bf16.msra.mxu0 %v3395
    %4814 = vmatpush.bf16.msra.mxu0 %v3371
    %4815 = vmatpush.bf16.msra.mxu0 %v3347
    %4816 = vmatpush.bf16.msra.mxu0 %v3323
    %4817 = vmatpush.bf16.msra.mxu0 %v3299
    %4818 = vmatpush.bf16.msra.mxu0 %v3275
    %4819 = vmatmul.bf16.gmra.mxu0 %v199
    %v4820 = vpop.f32.mrf.mxu0
    %v4821 = vadd.f32 0.0, %v4820
    %v4822 = vpop.f32.mrf.mxu0
    %4823 = vdwg.mxu0
    %4824 = vmatpush.bf16.msra.mxu0 %v3635
    %4825 = vmatpush.bf16.msra.mxu0 %v3611
    %4826 = vmatpush.bf16.msra.mxu0 %v3587
    %4827 = vmatpush.bf16.msra.mxu0 %v3563
    %4828 = vmatpush.bf16.msra.mxu0 %v3539
    %4829 = vmatpush.bf16.msra.mxu0 %v3515
    %4830 = vmatpush.bf16.msra.mxu0 %v3491
    %4831 = vmatpush.bf16.msra.mxu0 %v3467
    %4832 = vmatmul.bf16.gmra.mxu0 %v200
    %v4833 = vpop.f32.mrf.mxu0
    %v4834 = vadd.f32 %v4821, %v4833
    %v4835 = vpop.f32.mrf.mxu0
    %4836 = vdwg.mxu0
    %4837 = vmatpush.bf16.msra.mxu0 %v3827
    %4838 = vmatpush.bf16.msra.mxu0 %v3803
    %4839 = vmatpush.bf16.msra.mxu0 %v3779
    %4840 = vmatpush.bf16.msra.mxu0 %v3755
    %4841 = vmatpush.bf16.msra.mxu0 %v3731
    %4842 = vmatpush.bf16.msra.mxu0 %v3707
    %4843 = vmatpush.bf16.msra.mxu0 %v3683
    %4844 = vmatpush.bf16.msra.mxu0 %v3659
    %4845 = vmatmul.bf16.gmra.mxu0 %v201
    %v4846 = vpop.f32.mrf.mxu0
    %v4847 = vadd.f32 %v4834, %v4846
    %v4848 = vpop.f32.mrf.mxu0
    %4849 = vdwg.mxu0
    %4850 = vmatpush.bf16.msra.mxu0 %v4019
    %4851 = vmatpush.bf16.msra.mxu0 %v3995
    %4852 = vmatpush.bf16.msra.mxu0 %v3971
    %4853 = vmatpush.bf16.msra.mxu0 %v3947
    %4854 = vmatpush.bf16.msra.mxu0 %v3923
    %4855 = vmatpush.bf16.msra.mxu0 %v3899
    %4856 = vmatpush.bf16.msra.mxu0 %v3875
    %4857 = vmatpush.bf16.msra.mxu0 %v3851
    %4858 = vmatmul.bf16.gmra.mxu0 %v202
    %v4859 = vpop.f32.mrf.mxu0
    %v4860 = vadd.f32 %v4847, %v4859
    %v4861 = vpop.f32.mrf.mxu0
    %4862 = vdwg.mxu0
    %4863 = vmatpush.bf16.msra.mxu0 %v3444
    %4864 = vmatpush.bf16.msra.mxu0 %v3420
    %4865 = vmatpush.bf16.msra.mxu0 %v3396
    %4866 = vmatpush.bf16.msra.mxu0 %v3372
    %4867 = vmatpush.bf16.msra.mxu0 %v3348
    %4868 = vmatpush.bf16.msra.mxu0 %v3324
    %4869 = vmatpush.bf16.msra.mxu0 %v3300
    %4870 = vmatpush.bf16.msra.mxu0 %v3276
    %4871 = vmatmul.bf16.gmra.mxu0 %v199
    %v4872 = vpop.f32.mrf.mxu0
    %v4873 = vadd.f32 0.0, %v4872
    %v4874 = vpop.f32.mrf.mxu0
    %4875 = vdwg.mxu0
    %4876 = vmatpush.bf16.msra.mxu0 %v3636
    %4877 = vmatpush.bf16.msra.mxu0 %v3612
    %4878 = vmatpush.bf16.msra.mxu0 %v3588
    %4879 = vmatpush.bf16.msra.mxu0 %v3564
    %4880 = vmatpush.bf16.msra.mxu0 %v3540
    %4881 = vmatpush.bf16.msra.mxu0 %v3516
    %4882 = vmatpush.bf16.msra.mxu0 %v3492
    %4883 = vmatpush.bf16.msra.mxu0 %v3468
    %4884 = vmatmul.bf16.gmra.mxu0 %v200
    %v4885 = vpop.f32.mrf.mxu0
    %v4886 = vadd.f32 %v4873, %v4885
    %v4887 = vpop.f32.mrf.mxu0
    %4888 = vdwg.mxu0
    %4889 = vmatpush.bf16.msra.mxu0 %v3828
    %4890 = vmatpush.bf16.msra.mxu0 %v3804
    %4891 = vmatpush.bf16.msra.mxu0 %v3780
    %4892 = vmatpush.bf16.msra.mxu0 %v3756
    %4893 = vmatpush.bf16.msra.mxu0 %v3732
    %4894 = vmatpush.bf16.msra.mxu0 %v3708
    %4895 = vmatpush.bf16.msra.mxu0 %v3684
    %4896 = vmatpush.bf16.msra.mxu0 %v3660
    %4897 = vmatmul.bf16.gmra.mxu0 %v201
    %v4898 = vpop.f32.mrf.mxu0
    %v4899 = vadd.f32 %v4886, %v4898
    %v4900 = vpop.f32.mrf.mxu0
    %4901 = vdwg.mxu0
    %4902 = vmatpush.bf16.msra.mxu0 %v4020
    %4903 = vmatpush.bf16.msra.mxu0 %v3996
    %4904 = vmatpush.bf16.msra.mxu0 %v3972
    %4905 = vmatpush.bf16.msra.mxu0 %v3948
    %4906 = vmatpush.bf16.msra.mxu0 %v3924
    %4907 = vmatpush.bf16.msra.mxu0 %v3900
    %4908 = vmatpush.bf16.msra.mxu0 %v3876
    %4909 = vmatpush.bf16.msra.mxu0 %v3852
    %4910 = vmatmul.bf16.gmra.mxu0 %v202
    %v4911 = vpop.f32.mrf.mxu0
    %v4912 = vadd.f32 %v4899, %v4911
    %v4913 = vpop.f32.mrf.mxu0
    %4914 = vdwg.mxu0
    %4915 = vmatpush.bf16.msra.mxu0 %v3445
    %4916 = vmatpush.bf16.msra.mxu0 %v3421
    %4917 = vmatpush.bf16.msra.mxu0 %v3397
    %4918 = vmatpush.bf16.msra.mxu0 %v3373
    %4919 = vmatpush.bf16.msra.mxu0 %v3349
    %4920 = vmatpush.bf16.msra.mxu0 %v3325
    %4921 = vmatpush.bf16.msra.mxu0 %v3301
    %4922 = vmatpush.bf16.msra.mxu0 %v3277
    %4923 = vmatmul.bf16.gmra.mxu0 %v199
    %v4924 = vpop.f32.mrf.mxu0
    %v4925 = vadd.f32 0.0, %v4924
    %v4926 = vpop.f32.mrf.mxu0
    %4927 = vdwg.mxu0
    %4928 = vmatpush.bf16.msra.mxu0 %v3637
    %4929 = vmatpush.bf16.msra.mxu0 %v3613
    %4930 = vmatpush.bf16.msra.mxu0 %v3589
    %4931 = vmatpush.bf16.msra.mxu0 %v3565
    %4932 = vmatpush.bf16.msra.mxu0 %v3541
    %4933 = vmatpush.bf16.msra.mxu0 %v3517
    %4934 = vmatpush.bf16.msra.mxu0 %v3493
    %4935 = vmatpush.bf16.msra.mxu0 %v3469
    %4936 = vmatmul.bf16.gmra.mxu0 %v200
    %v4937 = vpop.f32.mrf.mxu0
    %v4938 = vadd.f32 %v4925, %v4937
    %v4939 = vpop.f32.mrf.mxu0
    %4940 = vdwg.mxu0
    %4941 = vmatpush.bf16.msra.mxu0 %v3829
    %4942 = vmatpush.bf16.msra.mxu0 %v3805
    %4943 = vmatpush.bf16.msra.mxu0 %v3781
    %4944 = vmatpush.bf16.msra.mxu0 %v3757
    %4945 = vmatpush.bf16.msra.mxu0 %v3733
    %4946 = vmatpush.bf16.msra.mxu0 %v3709
    %4947 = vmatpush.bf16.msra.mxu0 %v3685
    %4948 = vmatpush.bf16.msra.mxu0 %v3661
    %4949 = vmatmul.bf16.gmra.mxu0 %v201
    %v4950 = vpop.f32.mrf.mxu0
    %v4951 = vadd.f32 %v4938, %v4950
    %v4952 = vpop.f32.mrf.mxu0
    %4953 = vdwg.mxu0
    %4954 = vmatpush.bf16.msra.mxu0 %v4021
    %4955 = vmatpush.bf16.msra.mxu0 %v3997
    %4956 = vmatpush.bf16.msra.mxu0 %v3973
    %4957 = vmatpush.bf16.msra.mxu0 %v3949
    %4958 = vmatpush.bf16.msra.mxu0 %v3925
    %4959 = vmatpush.bf16.msra.mxu0 %v3901
    %4960 = vmatpush.bf16.msra.mxu0 %v3877
    %4961 = vmatpush.bf16.msra.mxu0 %v3853
    %4962 = vmatmul.bf16.gmra.mxu0 %v202
    %v4963 = vpop.f32.mrf.mxu0
    %v4964 = vadd.f32 %v4951, %v4963
    %v4965 = vpop.f32.mrf.mxu0
    %4966 = vdwg.mxu0
    %4967 = vmatpush.bf16.msra.mxu0 %v3446
    %4968 = vmatpush.bf16.msra.mxu0 %v3422
    %4969 = vmatpush.bf16.msra.mxu0 %v3398
    %4970 = vmatpush.bf16.msra.mxu0 %v3374
    %4971 = vmatpush.bf16.msra.mxu0 %v3350
    %4972 = vmatpush.bf16.msra.mxu0 %v3326
    %4973 = vmatpush.bf16.msra.mxu0 %v3302
    %4974 = vmatpush.bf16.msra.mxu0 %v3278
    %4975 = vmatmul.bf16.gmra.mxu0 %v199
    %v4976 = vpop.f32.mrf.mxu0
    %v4977 = vadd.f32 0.0, %v4976
    %v4978 = vpop.f32.mrf.mxu0
    %4979 = vdwg.mxu0
    %4980 = vmatpush.bf16.msra.mxu0 %v3638
    %4981 = vmatpush.bf16.msra.mxu0 %v3614
    %4982 = vmatpush.bf16.msra.mxu0 %v3590
    %4983 = vmatpush.bf16.msra.mxu0 %v3566
    %4984 = vmatpush.bf16.msra.mxu0 %v3542
    %4985 = vmatpush.bf16.msra.mxu0 %v3518
    %4986 = vmatpush.bf16.msra.mxu0 %v3494
    %4987 = vmatpush.bf16.msra.mxu0 %v3470
    %4988 = vmatmul.bf16.gmra.mxu0 %v200
    %v4989 = vpop.f32.mrf.mxu0
    %v4990 = vadd.f32 %v4977, %v4989
    %v4991 = vpop.f32.mrf.mxu0
    %4992 = vdwg.mxu0
    %4993 = vmatpush.bf16.msra.mxu0 %v3830
    %4994 = vmatpush.bf16.msra.mxu0 %v3806
    %4995 = vmatpush.bf16.msra.mxu0 %v3782
    %4996 = vmatpush.bf16.msra.mxu0 %v3758
    %4997 = vmatpush.bf16.msra.mxu0 %v3734
    %4998 = vmatpush.bf16.msra.mxu0 %v3710
    %4999 = vmatpush.bf16.msra.mxu0 %v3686
    %5000 = vmatpush.bf16.msra.mxu0 %v3662
    %5001 = vmatmul.bf16.gmra.mxu0 %v201
    %v5002 = vpop.f32.mrf.mxu0
    %v5003 = vadd.f32 %v4990, %v5002
    %v5004 = vpop.f32.mrf.mxu0
    %5005 = vdwg.mxu0
    %5006 = vmatpush.bf16.msra.mxu0 %v4022
    %5007 = vmatpush.bf16.msra.mxu0 %v3998
    %5008 = vmatpush.bf16.msra.mxu0 %v3974
    %5009 = vmatpush.bf16.msra.mxu0 %v3950
    %5010 = vmatpush.bf16.msra.mxu0 %v3926
    %5011 = vmatpush.bf16.msra.mxu0 %v3902
    %5012 = vmatpush.bf16.msra.mxu0 %v3878
    %5013 = vmatpush.bf16.msra.mxu0 %v3854
    %5014 = vmatmul.bf16.gmra.mxu0 %v202
    %v5015 = vpop.f32.mrf.mxu0
    %v5016 = vadd.f32 %v5003, %v5015
    %v5017 = vpop.f32.mrf.mxu0
    %5018 = vdwg.mxu0
    %5019 = vmatpush.bf16.msra.mxu0 %v3447
    %5020 = vmatpush.bf16.msra.mxu0 %v3423
    %5021 = vmatpush.bf16.msra.mxu0 %v3399
    %5022 = vmatpush.bf16.msra.mxu0 %v3375
    %5023 = vmatpush.bf16.msra.mxu0 %v3351
    %5024 = vmatpush.bf16.msra.mxu0 %v3327
    %5025 = vmatpush.bf16.msra.mxu0 %v3303
    %5026 = vmatpush.bf16.msra.mxu0 %v3279
    %5027 = vmatmul.bf16.gmra.mxu0 %v199
    %v5028 = vpop.f32.mrf.mxu0
    %v5029 = vadd.f32 0.0, %v5028
    %v5030 = vpop.f32.mrf.mxu0
    %5031 = vdwg.mxu0
    %5032 = vmatpush.bf16.msra.mxu0 %v3639
    %5033 = vmatpush.bf16.msra.mxu0 %v3615
    %5034 = vmatpush.bf16.msra.mxu0 %v3591
    %5035 = vmatpush.bf16.msra.mxu0 %v3567
    %5036 = vmatpush.bf16.msra.mxu0 %v3543
    %5037 = vmatpush.bf16.msra.mxu0 %v3519
    %5038 = vmatpush.bf16.msra.mxu0 %v3495
    %5039 = vmatpush.bf16.msra.mxu0 %v3471
    %5040 = vmatmul.bf16.gmra.mxu0 %v200
    %v5041 = vpop.f32.mrf.mxu0
    %v5042 = vadd.f32 %v5029, %v5041
    %v5043 = vpop.f32.mrf.mxu0
    %5044 = vdwg.mxu0
    %5045 = vmatpush.bf16.msra.mxu0 %v3831
    %5046 = vmatpush.bf16.msra.mxu0 %v3807
    %5047 = vmatpush.bf16.msra.mxu0 %v3783
    %5048 = vmatpush.bf16.msra.mxu0 %v3759
    %5049 = vmatpush.bf16.msra.mxu0 %v3735
    %5050 = vmatpush.bf16.msra.mxu0 %v3711
    %5051 = vmatpush.bf16.msra.mxu0 %v3687
    %5052 = vmatpush.bf16.msra.mxu0 %v3663
    %5053 = vmatmul.bf16.gmra.mxu0 %v201
    %v5054 = vpop.f32.mrf.mxu0
    %v5055 = vadd.f32 %v5042, %v5054
    %v5056 = vpop.f32.mrf.mxu0
    %5057 = vdwg.mxu0
    %5058 = vmatpush.bf16.msra.mxu0 %v4023
    %5059 = vmatpush.bf16.msra.mxu0 %v3999
    %5060 = vmatpush.bf16.msra.mxu0 %v3975
    %5061 = vmatpush.bf16.msra.mxu0 %v3951
    %5062 = vmatpush.bf16.msra.mxu0 %v3927
    %5063 = vmatpush.bf16.msra.mxu0 %v3903
    %5064 = vmatpush.bf16.msra.mxu0 %v3879
    %5065 = vmatpush.bf16.msra.mxu0 %v3855
    %5066 = vmatmul.bf16.gmra.mxu0 %v202
    %v5067 = vpop.f32.mrf.mxu0
    %v5068 = vadd.f32 %v5055, %v5067
    %v5069 = vpop.f32.mrf.mxu0
    %5070 = vdwg.mxu0
    %5071 = vmatpush.bf16.msra.mxu0 %v3448
    %5072 = vmatpush.bf16.msra.mxu0 %v3424
    %5073 = vmatpush.bf16.msra.mxu0 %v3400
    %5074 = vmatpush.bf16.msra.mxu0 %v3376
    %5075 = vmatpush.bf16.msra.mxu0 %v3352
    %5076 = vmatpush.bf16.msra.mxu0 %v3328
    %5077 = vmatpush.bf16.msra.mxu0 %v3304
    %5078 = vmatpush.bf16.msra.mxu0 %v3280
    %5079 = vmatmul.bf16.gmra.mxu0 %v199
    %v5080 = vpop.f32.mrf.mxu0
    %v5081 = vadd.f32 0.0, %v5080
    %v5082 = vpop.f32.mrf.mxu0
    %5083 = vdwg.mxu0
    %5084 = vmatpush.bf16.msra.mxu0 %v3640
    %5085 = vmatpush.bf16.msra.mxu0 %v3616
    %5086 = vmatpush.bf16.msra.mxu0 %v3592
    %5087 = vmatpush.bf16.msra.mxu0 %v3568
    %5088 = vmatpush.bf16.msra.mxu0 %v3544
    %5089 = vmatpush.bf16.msra.mxu0 %v3520
    %5090 = vmatpush.bf16.msra.mxu0 %v3496
    %5091 = vmatpush.bf16.msra.mxu0 %v3472
    %5092 = vmatmul.bf16.gmra.mxu0 %v200
    %v5093 = vpop.f32.mrf.mxu0
    %v5094 = vadd.f32 %v5081, %v5093
    %v5095 = vpop.f32.mrf.mxu0
    %5096 = vdwg.mxu0
    %5097 = vmatpush.bf16.msra.mxu0 %v3832
    %5098 = vmatpush.bf16.msra.mxu0 %v3808
    %5099 = vmatpush.bf16.msra.mxu0 %v3784
    %5100 = vmatpush.bf16.msra.mxu0 %v3760
    %5101 = vmatpush.bf16.msra.mxu0 %v3736
    %5102 = vmatpush.bf16.msra.mxu0 %v3712
    %5103 = vmatpush.bf16.msra.mxu0 %v3688
    %5104 = vmatpush.bf16.msra.mxu0 %v3664
    %5105 = vmatmul.bf16.gmra.mxu0 %v201
    %v5106 = vpop.f32.mrf.mxu0
    %v5107 = vadd.f32 %v5094, %v5106
    %v5108 = vpop.f32.mrf.mxu0
    %5109 = vdwg.mxu0
    %5110 = vmatpush.bf16.msra.mxu0 %v4024
    %5111 = vmatpush.bf16.msra.mxu0 %v4000
    %5112 = vmatpush.bf16.msra.mxu0 %v3976
    %5113 = vmatpush.bf16.msra.mxu0 %v3952
    %5114 = vmatpush.bf16.msra.mxu0 %v3928
    %5115 = vmatpush.bf16.msra.mxu0 %v3904
    %5116 = vmatpush.bf16.msra.mxu0 %v3880
    %5117 = vmatpush.bf16.msra.mxu0 %v3856
    %5118 = vmatmul.bf16.gmra.mxu0 %v202
    %v5119 = vpop.f32.mrf.mxu0
    %v5120 = vadd.f32 %v5107, %v5119
    %v5121 = vpop.f32.mrf.mxu0
    %5122 = vdwg.mxu0
    %5123 = vmatpush.bf16.msra.mxu0 %v3449
    %5124 = vmatpush.bf16.msra.mxu0 %v3425
    %5125 = vmatpush.bf16.msra.mxu0 %v3401
    %5126 = vmatpush.bf16.msra.mxu0 %v3377
    %5127 = vmatpush.bf16.msra.mxu0 %v3353
    %5128 = vmatpush.bf16.msra.mxu0 %v3329
    %5129 = vmatpush.bf16.msra.mxu0 %v3305
    %5130 = vmatpush.bf16.msra.mxu0 %v3281
    %5131 = vmatmul.bf16.gmra.mxu0 %v199
    %v5132 = vpop.f32.mrf.mxu0
    %v5133 = vadd.f32 0.0, %v5132
    %v5134 = vpop.f32.mrf.mxu0
    %5135 = vdwg.mxu0
    %5136 = vmatpush.bf16.msra.mxu0 %v3641
    %5137 = vmatpush.bf16.msra.mxu0 %v3617
    %5138 = vmatpush.bf16.msra.mxu0 %v3593
    %5139 = vmatpush.bf16.msra.mxu0 %v3569
    %5140 = vmatpush.bf16.msra.mxu0 %v3545
    %5141 = vmatpush.bf16.msra.mxu0 %v3521
    %5142 = vmatpush.bf16.msra.mxu0 %v3497
    %5143 = vmatpush.bf16.msra.mxu0 %v3473
    %5144 = vmatmul.bf16.gmra.mxu0 %v200
    %v5145 = vpop.f32.mrf.mxu0
    %v5146 = vadd.f32 %v5133, %v5145
    %v5147 = vpop.f32.mrf.mxu0
    %5148 = vdwg.mxu0
    %5149 = vmatpush.bf16.msra.mxu0 %v3833
    %5150 = vmatpush.bf16.msra.mxu0 %v3809
    %5151 = vmatpush.bf16.msra.mxu0 %v3785
    %5152 = vmatpush.bf16.msra.mxu0 %v3761
    %5153 = vmatpush.bf16.msra.mxu0 %v3737
    %5154 = vmatpush.bf16.msra.mxu0 %v3713
    %5155 = vmatpush.bf16.msra.mxu0 %v3689
    %5156 = vmatpush.bf16.msra.mxu0 %v3665
    %5157 = vmatmul.bf16.gmra.mxu0 %v201
    %v5158 = vpop.f32.mrf.mxu0
    %v5159 = vadd.f32 %v5146, %v5158
    %v5160 = vpop.f32.mrf.mxu0
    %5161 = vdwg.mxu0
    %5162 = vmatpush.bf16.msra.mxu0 %v4025
    %5163 = vmatpush.bf16.msra.mxu0 %v4001
    %5164 = vmatpush.bf16.msra.mxu0 %v3977
    %5165 = vmatpush.bf16.msra.mxu0 %v3953
    %5166 = vmatpush.bf16.msra.mxu0 %v3929
    %5167 = vmatpush.bf16.msra.mxu0 %v3905
    %5168 = vmatpush.bf16.msra.mxu0 %v3881
    %5169 = vmatpush.bf16.msra.mxu0 %v3857
    %5170 = vmatmul.bf16.gmra.mxu0 %v202
    %v5171 = vpop.f32.mrf.mxu0
    %v5172 = vadd.f32 %v5159, %v5171
    %v5173 = vpop.f32.mrf.mxu0
    %5174 = vdwg.mxu0
    %5175 = vmatpush.bf16.msra.mxu0 %v3450
    %5176 = vmatpush.bf16.msra.mxu0 %v3426
    %5177 = vmatpush.bf16.msra.mxu0 %v3402
    %5178 = vmatpush.bf16.msra.mxu0 %v3378
    %5179 = vmatpush.bf16.msra.mxu0 %v3354
    %5180 = vmatpush.bf16.msra.mxu0 %v3330
    %5181 = vmatpush.bf16.msra.mxu0 %v3306
    %5182 = vmatpush.bf16.msra.mxu0 %v3282
    %5183 = vmatmul.bf16.gmra.mxu0 %v199
    %v5184 = vpop.f32.mrf.mxu0
    %v5185 = vadd.f32 0.0, %v5184
    %v5186 = vpop.f32.mrf.mxu0
    %5187 = vdwg.mxu0
    %5188 = vmatpush.bf16.msra.mxu0 %v3642
    %5189 = vmatpush.bf16.msra.mxu0 %v3618
    %5190 = vmatpush.bf16.msra.mxu0 %v3594
    %5191 = vmatpush.bf16.msra.mxu0 %v3570
    %5192 = vmatpush.bf16.msra.mxu0 %v3546
    %5193 = vmatpush.bf16.msra.mxu0 %v3522
    %5194 = vmatpush.bf16.msra.mxu0 %v3498
    %5195 = vmatpush.bf16.msra.mxu0 %v3474
    %5196 = vmatmul.bf16.gmra.mxu0 %v200
    %v5197 = vpop.f32.mrf.mxu0
    %v5198 = vadd.f32 %v5185, %v5197
    %v5199 = vpop.f32.mrf.mxu0
    %5200 = vdwg.mxu0
    %5201 = vmatpush.bf16.msra.mxu0 %v3834
    %5202 = vmatpush.bf16.msra.mxu0 %v3810
    %5203 = vmatpush.bf16.msra.mxu0 %v3786
    %5204 = vmatpush.bf16.msra.mxu0 %v3762
    %5205 = vmatpush.bf16.msra.mxu0 %v3738
    %5206 = vmatpush.bf16.msra.mxu0 %v3714
    %5207 = vmatpush.bf16.msra.mxu0 %v3690
    %5208 = vmatpush.bf16.msra.mxu0 %v3666
    %5209 = vmatmul.bf16.gmra.mxu0 %v201
    %v5210 = vpop.f32.mrf.mxu0
    %v5211 = vadd.f32 %v5198, %v5210
    %v5212 = vpop.f32.mrf.mxu0
    %5213 = vdwg.mxu0
    %5214 = vmatpush.bf16.msra.mxu0 %v4026
    %5215 = vmatpush.bf16.msra.mxu0 %v4002
    %5216 = vmatpush.bf16.msra.mxu0 %v3978
    %5217 = vmatpush.bf16.msra.mxu0 %v3954
    %5218 = vmatpush.bf16.msra.mxu0 %v3930
    %5219 = vmatpush.bf16.msra.mxu0 %v3906
    %5220 = vmatpush.bf16.msra.mxu0 %v3882
    %5221 = vmatpush.bf16.msra.mxu0 %v3858
    %5222 = vmatmul.bf16.gmra.mxu0 %v202
    %v5223 = vpop.f32.mrf.mxu0
    %v5224 = vadd.f32 %v5211, %v5223
    %v5225 = vpop.f32.mrf.mxu0
    %5226 = vdwg.mxu0
    %5227 = vmatpush.bf16.msra.mxu0 %v3451
    %5228 = vmatpush.bf16.msra.mxu0 %v3427
    %5229 = vmatpush.bf16.msra.mxu0 %v3403
    %5230 = vmatpush.bf16.msra.mxu0 %v3379
    %5231 = vmatpush.bf16.msra.mxu0 %v3355
    %5232 = vmatpush.bf16.msra.mxu0 %v3331
    %5233 = vmatpush.bf16.msra.mxu0 %v3307
    %5234 = vmatpush.bf16.msra.mxu0 %v3283
    %5235 = vmatmul.bf16.gmra.mxu0 %v199
    %v5236 = vpop.f32.mrf.mxu0
    %v5237 = vadd.f32 0.0, %v5236
    %v5238 = vpop.f32.mrf.mxu0
    %5239 = vdwg.mxu0
    %5240 = vmatpush.bf16.msra.mxu0 %v3643
    %5241 = vmatpush.bf16.msra.mxu0 %v3619
    %5242 = vmatpush.bf16.msra.mxu0 %v3595
    %5243 = vmatpush.bf16.msra.mxu0 %v3571
    %5244 = vmatpush.bf16.msra.mxu0 %v3547
    %5245 = vmatpush.bf16.msra.mxu0 %v3523
    %5246 = vmatpush.bf16.msra.mxu0 %v3499
    %5247 = vmatpush.bf16.msra.mxu0 %v3475
    %5248 = vmatmul.bf16.gmra.mxu0 %v200
    %v5249 = vpop.f32.mrf.mxu0
    %v5250 = vadd.f32 %v5237, %v5249
    %v5251 = vpop.f32.mrf.mxu0
    %5252 = vdwg.mxu0
    %5253 = vmatpush.bf16.msra.mxu0 %v3835
    %5254 = vmatpush.bf16.msra.mxu0 %v3811
    %5255 = vmatpush.bf16.msra.mxu0 %v3787
    %5256 = vmatpush.bf16.msra.mxu0 %v3763
    %5257 = vmatpush.bf16.msra.mxu0 %v3739
    %5258 = vmatpush.bf16.msra.mxu0 %v3715
    %5259 = vmatpush.bf16.msra.mxu0 %v3691
    %5260 = vmatpush.bf16.msra.mxu0 %v3667
    %5261 = vmatmul.bf16.gmra.mxu0 %v201
    %v5262 = vpop.f32.mrf.mxu0
    %v5263 = vadd.f32 %v5250, %v5262
    %v5264 = vpop.f32.mrf.mxu0
    %5265 = vdwg.mxu0
    %5266 = vmatpush.bf16.msra.mxu0 %v4027
    %5267 = vmatpush.bf16.msra.mxu0 %v4003
    %5268 = vmatpush.bf16.msra.mxu0 %v3979
    %5269 = vmatpush.bf16.msra.mxu0 %v3955
    %5270 = vmatpush.bf16.msra.mxu0 %v3931
    %5271 = vmatpush.bf16.msra.mxu0 %v3907
    %5272 = vmatpush.bf16.msra.mxu0 %v3883
    %5273 = vmatpush.bf16.msra.mxu0 %v3859
    %5274 = vmatmul.bf16.gmra.mxu0 %v202
    %v5275 = vpop.f32.mrf.mxu0
    %v5276 = vadd.f32 %v5263, %v5275
    %v5277 = vpop.f32.mrf.mxu0
    %5278 = vdwg.mxu0
    %5279 = vmatpush.bf16.msra.mxu0 %v3452
    %5280 = vmatpush.bf16.msra.mxu0 %v3428
    %5281 = vmatpush.bf16.msra.mxu0 %v3404
    %5282 = vmatpush.bf16.msra.mxu0 %v3380
    %5283 = vmatpush.bf16.msra.mxu0 %v3356
    %5284 = vmatpush.bf16.msra.mxu0 %v3332
    %5285 = vmatpush.bf16.msra.mxu0 %v3308
    %5286 = vmatpush.bf16.msra.mxu0 %v3284
    %5287 = vmatmul.bf16.gmra.mxu0 %v199
    %v5288 = vpop.f32.mrf.mxu0
    %v5289 = vadd.f32 0.0, %v5288
    %v5290 = vpop.f32.mrf.mxu0
    %5291 = vdwg.mxu0
    %5292 = vmatpush.bf16.msra.mxu0 %v3644
    %5293 = vmatpush.bf16.msra.mxu0 %v3620
    %5294 = vmatpush.bf16.msra.mxu0 %v3596
    %5295 = vmatpush.bf16.msra.mxu0 %v3572
    %5296 = vmatpush.bf16.msra.mxu0 %v3548
    %5297 = vmatpush.bf16.msra.mxu0 %v3524
    %5298 = vmatpush.bf16.msra.mxu0 %v3500
    %5299 = vmatpush.bf16.msra.mxu0 %v3476
    %5300 = vmatmul.bf16.gmra.mxu0 %v200
    %v5301 = vpop.f32.mrf.mxu0
    %v5302 = vadd.f32 %v5289, %v5301
    %v5303 = vpop.f32.mrf.mxu0
    %5304 = vdwg.mxu0
    %5305 = vmatpush.bf16.msra.mxu0 %v3836
    %5306 = vmatpush.bf16.msra.mxu0 %v3812
    %5307 = vmatpush.bf16.msra.mxu0 %v3788
    %5308 = vmatpush.bf16.msra.mxu0 %v3764
    %5309 = vmatpush.bf16.msra.mxu0 %v3740
    %5310 = vmatpush.bf16.msra.mxu0 %v3716
    %5311 = vmatpush.bf16.msra.mxu0 %v3692
    %5312 = vmatpush.bf16.msra.mxu0 %v3668
    %5313 = vmatmul.bf16.gmra.mxu0 %v201
    %v5314 = vpop.f32.mrf.mxu0
    %v5315 = vadd.f32 %v5302, %v5314
    %v5316 = vpop.f32.mrf.mxu0
    %5317 = vdwg.mxu0
    %5318 = vmatpush.bf16.msra.mxu0 %v4028
    %5319 = vmatpush.bf16.msra.mxu0 %v4004
    %5320 = vmatpush.bf16.msra.mxu0 %v3980
    %5321 = vmatpush.bf16.msra.mxu0 %v3956
    %5322 = vmatpush.bf16.msra.mxu0 %v3932
    %5323 = vmatpush.bf16.msra.mxu0 %v3908
    %5324 = vmatpush.bf16.msra.mxu0 %v3884
    %5325 = vmatpush.bf16.msra.mxu0 %v3860
    %5326 = vmatmul.bf16.gmra.mxu0 %v202
    %v5327 = vpop.f32.mrf.mxu0
    %v5328 = vadd.f32 %v5315, %v5327
    %v5329 = vpop.f32.mrf.mxu0
    %5330 = vdwg.mxu0
    %5331 = vmatpush.bf16.msra.mxu0 %v3453
    %5332 = vmatpush.bf16.msra.mxu0 %v3429
    %5333 = vmatpush.bf16.msra.mxu0 %v3405
    %5334 = vmatpush.bf16.msra.mxu0 %v3381
    %5335 = vmatpush.bf16.msra.mxu0 %v3357
    %5336 = vmatpush.bf16.msra.mxu0 %v3333
    %5337 = vmatpush.bf16.msra.mxu0 %v3309
    %5338 = vmatpush.bf16.msra.mxu0 %v3285
    %5339 = vmatmul.bf16.gmra.mxu0 %v199
    %v5340 = vpop.f32.mrf.mxu0
    %v5341 = vadd.f32 0.0, %v5340
    %v5342 = vpop.f32.mrf.mxu0
    %5343 = vdwg.mxu0
    %5344 = vmatpush.bf16.msra.mxu0 %v3645
    %5345 = vmatpush.bf16.msra.mxu0 %v3621
    %5346 = vmatpush.bf16.msra.mxu0 %v3597
    %5347 = vmatpush.bf16.msra.mxu0 %v3573
    %5348 = vmatpush.bf16.msra.mxu0 %v3549
    %5349 = vmatpush.bf16.msra.mxu0 %v3525
    %5350 = vmatpush.bf16.msra.mxu0 %v3501
    %5351 = vmatpush.bf16.msra.mxu0 %v3477
    %5352 = vmatmul.bf16.gmra.mxu0 %v200
    %v5353 = vpop.f32.mrf.mxu0
    %v5354 = vadd.f32 %v5341, %v5353
    %v5355 = vpop.f32.mrf.mxu0
    %5356 = vdwg.mxu0
    %5357 = vmatpush.bf16.msra.mxu0 %v3837
    %5358 = vmatpush.bf16.msra.mxu0 %v3813
    %5359 = vmatpush.bf16.msra.mxu0 %v3789
    %5360 = vmatpush.bf16.msra.mxu0 %v3765
    %5361 = vmatpush.bf16.msra.mxu0 %v3741
    %5362 = vmatpush.bf16.msra.mxu0 %v3717
    %5363 = vmatpush.bf16.msra.mxu0 %v3693
    %5364 = vmatpush.bf16.msra.mxu0 %v3669
    %5365 = vmatmul.bf16.gmra.mxu0 %v201
    %v5366 = vpop.f32.mrf.mxu0
    %v5367 = vadd.f32 %v5354, %v5366
    %v5368 = vpop.f32.mrf.mxu0
    %5369 = vdwg.mxu0
    %5370 = vmatpush.bf16.msra.mxu0 %v4029
    %5371 = vmatpush.bf16.msra.mxu0 %v4005
    %5372 = vmatpush.bf16.msra.mxu0 %v3981
    %5373 = vmatpush.bf16.msra.mxu0 %v3957
    %5374 = vmatpush.bf16.msra.mxu0 %v3933
    %5375 = vmatpush.bf16.msra.mxu0 %v3909
    %5376 = vmatpush.bf16.msra.mxu0 %v3885
    %5377 = vmatpush.bf16.msra.mxu0 %v3861
    %5378 = vmatmul.bf16.gmra.mxu0 %v202
    %v5379 = vpop.f32.mrf.mxu0
    %v5380 = vadd.f32 %v5367, %v5379
    %v5381 = vpop.f32.mrf.mxu0
    %5382 = vdwg.mxu0
    %5383 = vmatpush.bf16.msra.mxu0 %v3454
    %5384 = vmatpush.bf16.msra.mxu0 %v3430
    %5385 = vmatpush.bf16.msra.mxu0 %v3406
    %5386 = vmatpush.bf16.msra.mxu0 %v3382
    %5387 = vmatpush.bf16.msra.mxu0 %v3358
    %5388 = vmatpush.bf16.msra.mxu0 %v3334
    %5389 = vmatpush.bf16.msra.mxu0 %v3310
    %5390 = vmatpush.bf16.msra.mxu0 %v3286
    %5391 = vmatmul.bf16.gmra.mxu0 %v199
    %v5392 = vpop.f32.mrf.mxu0
    %v5393 = vadd.f32 0.0, %v5392
    %v5394 = vpop.f32.mrf.mxu0
    %5395 = vdwg.mxu0
    %5396 = vmatpush.bf16.msra.mxu0 %v3646
    %5397 = vmatpush.bf16.msra.mxu0 %v3622
    %5398 = vmatpush.bf16.msra.mxu0 %v3598
    %5399 = vmatpush.bf16.msra.mxu0 %v3574
    %5400 = vmatpush.bf16.msra.mxu0 %v3550
    %5401 = vmatpush.bf16.msra.mxu0 %v3526
    %5402 = vmatpush.bf16.msra.mxu0 %v3502
    %5403 = vmatpush.bf16.msra.mxu0 %v3478
    %5404 = vmatmul.bf16.gmra.mxu0 %v200
    %v5405 = vpop.f32.mrf.mxu0
    %v5406 = vadd.f32 %v5393, %v5405
    %v5407 = vpop.f32.mrf.mxu0
    %5408 = vdwg.mxu0
    %5409 = vmatpush.bf16.msra.mxu0 %v3838
    %5410 = vmatpush.bf16.msra.mxu0 %v3814
    %5411 = vmatpush.bf16.msra.mxu0 %v3790
    %5412 = vmatpush.bf16.msra.mxu0 %v3766
    %5413 = vmatpush.bf16.msra.mxu0 %v3742
    %5414 = vmatpush.bf16.msra.mxu0 %v3718
    %5415 = vmatpush.bf16.msra.mxu0 %v3694
    %5416 = vmatpush.bf16.msra.mxu0 %v3670
    %5417 = vmatmul.bf16.gmra.mxu0 %v201
    %v5418 = vpop.f32.mrf.mxu0
    %v5419 = vadd.f32 %v5406, %v5418
    %v5420 = vpop.f32.mrf.mxu0
    %5421 = vdwg.mxu0
    %5422 = vmatpush.bf16.msra.mxu0 %v4030
    %5423 = vmatpush.bf16.msra.mxu0 %v4006
    %5424 = vmatpush.bf16.msra.mxu0 %v3982
    %5425 = vmatpush.bf16.msra.mxu0 %v3958
    %5426 = vmatpush.bf16.msra.mxu0 %v3934
    %5427 = vmatpush.bf16.msra.mxu0 %v3910
    %5428 = vmatpush.bf16.msra.mxu0 %v3886
    %5429 = vmatpush.bf16.msra.mxu0 %v3862
    %5430 = vmatmul.bf16.gmra.mxu0 %v202
    %v5431 = vpop.f32.mrf.mxu0
    %v5432 = vadd.f32 %v5419, %v5431
    %v5433 = vpop.f32.mrf.mxu0
    %5434 = vdwg.mxu0
    %5435 = vmatpush.bf16.msra.mxu0 %v3455
    %5436 = vmatpush.bf16.msra.mxu0 %v3431
    %5437 = vmatpush.bf16.msra.mxu0 %v3407
    %5438 = vmatpush.bf16.msra.mxu0 %v3383
    %5439 = vmatpush.bf16.msra.mxu0 %v3359
    %5440 = vmatpush.bf16.msra.mxu0 %v3335
    %5441 = vmatpush.bf16.msra.mxu0 %v3311
    %5442 = vmatpush.bf16.msra.mxu0 %v3287
    %5443 = vmatmul.bf16.gmra.mxu0 %v199
    %v5444 = vpop.f32.mrf.mxu0
    %v5445 = vadd.f32 0.0, %v5444
    %v5446 = vpop.f32.mrf.mxu0
    %5447 = vdwg.mxu0
    %5448 = vmatpush.bf16.msra.mxu0 %v3647
    %5449 = vmatpush.bf16.msra.mxu0 %v3623
    %5450 = vmatpush.bf16.msra.mxu0 %v3599
    %5451 = vmatpush.bf16.msra.mxu0 %v3575
    %5452 = vmatpush.bf16.msra.mxu0 %v3551
    %5453 = vmatpush.bf16.msra.mxu0 %v3527
    %5454 = vmatpush.bf16.msra.mxu0 %v3503
    %5455 = vmatpush.bf16.msra.mxu0 %v3479
    %5456 = vmatmul.bf16.gmra.mxu0 %v200
    %v5457 = vpop.f32.mrf.mxu0
    %v5458 = vadd.f32 %v5445, %v5457
    %v5459 = vpop.f32.mrf.mxu0
    %5460 = vdwg.mxu0
    %5461 = vmatpush.bf16.msra.mxu0 %v3839
    %5462 = vmatpush.bf16.msra.mxu0 %v3815
    %5463 = vmatpush.bf16.msra.mxu0 %v3791
    %5464 = vmatpush.bf16.msra.mxu0 %v3767
    %5465 = vmatpush.bf16.msra.mxu0 %v3743
    %5466 = vmatpush.bf16.msra.mxu0 %v3719
    %5467 = vmatpush.bf16.msra.mxu0 %v3695
    %5468 = vmatpush.bf16.msra.mxu0 %v3671
    %5469 = vmatmul.bf16.gmra.mxu0 %v201
    %v5470 = vpop.f32.mrf.mxu0
    %v5471 = vadd.f32 %v5458, %v5470
    %v5472 = vpop.f32.mrf.mxu0
    %5473 = vdwg.mxu0
    %5474 = vmatpush.bf16.msra.mxu0 %v4031
    %5475 = vmatpush.bf16.msra.mxu0 %v4007
    %5476 = vmatpush.bf16.msra.mxu0 %v3983
    %5477 = vmatpush.bf16.msra.mxu0 %v3959
    %5478 = vmatpush.bf16.msra.mxu0 %v3935
    %5479 = vmatpush.bf16.msra.mxu0 %v3911
    %5480 = vmatpush.bf16.msra.mxu0 %v3887
    %5481 = vmatpush.bf16.msra.mxu0 %v3863
    %5482 = vmatmul.bf16.gmra.mxu0 %v202
    %v5483 = vpop.f32.mrf.mxu0
    %v5484 = vadd.f32 %v5471, %v5483
    %v5485 = vpop.f32.mrf.mxu0
    %5486 = vdwg.mxu0
    %5487 = vmatpush.bf16.msra.mxu0 %v3456
    %5488 = vmatpush.bf16.msra.mxu0 %v3432
    %5489 = vmatpush.bf16.msra.mxu0 %v3408
    %5490 = vmatpush.bf16.msra.mxu0 %v3384
    %5491 = vmatpush.bf16.msra.mxu0 %v3360
    %5492 = vmatpush.bf16.msra.mxu0 %v3336
    %5493 = vmatpush.bf16.msra.mxu0 %v3312
    %5494 = vmatpush.bf16.msra.mxu0 %v3288
    %5495 = vmatmul.bf16.gmra.mxu0 %v199
    %v5496 = vpop.f32.mrf.mxu0
    %v5497 = vadd.f32 0.0, %v5496
    %v5498 = vpop.f32.mrf.mxu0
    %5499 = vdwg.mxu0
    %5500 = vmatpush.bf16.msra.mxu0 %v3648
    %5501 = vmatpush.bf16.msra.mxu0 %v3624
    %5502 = vmatpush.bf16.msra.mxu0 %v3600
    %5503 = vmatpush.bf16.msra.mxu0 %v3576
    %5504 = vmatpush.bf16.msra.mxu0 %v3552
    %5505 = vmatpush.bf16.msra.mxu0 %v3528
    %5506 = vmatpush.bf16.msra.mxu0 %v3504
    %5507 = vmatpush.bf16.msra.mxu0 %v3480
    %5508 = vmatmul.bf16.gmra.mxu0 %v200
    %v5509 = vpop.f32.mrf.mxu0
    %v5510 = vadd.f32 %v5497, %v5509
    %v5511 = vpop.f32.mrf.mxu0
    %5512 = vdwg.mxu0
    %5513 = vmatpush.bf16.msra.mxu0 %v3840
    %5514 = vmatpush.bf16.msra.mxu0 %v3816
    %5515 = vmatpush.bf16.msra.mxu0 %v3792
    %5516 = vmatpush.bf16.msra.mxu0 %v3768
    %5517 = vmatpush.bf16.msra.mxu0 %v3744
    %5518 = vmatpush.bf16.msra.mxu0 %v3720
    %5519 = vmatpush.bf16.msra.mxu0 %v3696
    %5520 = vmatpush.bf16.msra.mxu0 %v3672
    %5521 = vmatmul.bf16.gmra.mxu0 %v201
    %v5522 = vpop.f32.mrf.mxu0
    %v5523 = vadd.f32 %v5510, %v5522
    %v5524 = vpop.f32.mrf.mxu0
    %5525 = vdwg.mxu0
    %5526 = vmatpush.bf16.msra.mxu0 %v4032
    %5527 = vmatpush.bf16.msra.mxu0 %v4008
    %5528 = vmatpush.bf16.msra.mxu0 %v3984
    %5529 = vmatpush.bf16.msra.mxu0 %v3960
    %5530 = vmatpush.bf16.msra.mxu0 %v3936
    %5531 = vmatpush.bf16.msra.mxu0 %v3912
    %5532 = vmatpush.bf16.msra.mxu0 %v3888
    %5533 = vmatpush.bf16.msra.mxu0 %v3864
    %5534 = vmatmul.bf16.gmra.mxu0 %v202
    %v5535 = vpop.f32.mrf.mxu0
    %v5536 = vadd.f32 %v5523, %v5535
    %v5537 = vpop.f32.mrf.mxu0
    %5538 = vdwg.mxu0
    %5539 = vmatpush.bf16.msra.mxu0 %v3457
    %5540 = vmatpush.bf16.msra.mxu0 %v3433
    %5541 = vmatpush.bf16.msra.mxu0 %v3409
    %5542 = vmatpush.bf16.msra.mxu0 %v3385
    %5543 = vmatpush.bf16.msra.mxu0 %v3361
    %5544 = vmatpush.bf16.msra.mxu0 %v3337
    %5545 = vmatpush.bf16.msra.mxu0 %v3313
    %5546 = vmatpush.bf16.msra.mxu0 %v3289
    %5547 = vmatmul.bf16.gmra.mxu0 %v199
    %v5548 = vpop.f32.mrf.mxu0
    %v5549 = vadd.f32 0.0, %v5548
    %v5550 = vpop.f32.mrf.mxu0
    %5551 = vdwg.mxu0
    %5552 = vmatpush.bf16.msra.mxu0 %v3649
    %5553 = vmatpush.bf16.msra.mxu0 %v3625
    %5554 = vmatpush.bf16.msra.mxu0 %v3601
    %5555 = vmatpush.bf16.msra.mxu0 %v3577
    %5556 = vmatpush.bf16.msra.mxu0 %v3553
    %5557 = vmatpush.bf16.msra.mxu0 %v3529
    %5558 = vmatpush.bf16.msra.mxu0 %v3505
    %5559 = vmatpush.bf16.msra.mxu0 %v3481
    %5560 = vmatmul.bf16.gmra.mxu0 %v200
    %v5561 = vpop.f32.mrf.mxu0
    %v5562 = vadd.f32 %v5549, %v5561
    %v5563 = vpop.f32.mrf.mxu0
    %5564 = vdwg.mxu0
    %5565 = vmatpush.bf16.msra.mxu0 %v3841
    %5566 = vmatpush.bf16.msra.mxu0 %v3817
    %5567 = vmatpush.bf16.msra.mxu0 %v3793
    %5568 = vmatpush.bf16.msra.mxu0 %v3769
    %5569 = vmatpush.bf16.msra.mxu0 %v3745
    %5570 = vmatpush.bf16.msra.mxu0 %v3721
    %5571 = vmatpush.bf16.msra.mxu0 %v3697
    %5572 = vmatpush.bf16.msra.mxu0 %v3673
    %5573 = vmatmul.bf16.gmra.mxu0 %v201
    %v5574 = vpop.f32.mrf.mxu0
    %v5575 = vadd.f32 %v5562, %v5574
    %v5576 = vpop.f32.mrf.mxu0
    %5577 = vdwg.mxu0
    %5578 = vmatpush.bf16.msra.mxu0 %v4033
    %5579 = vmatpush.bf16.msra.mxu0 %v4009
    %5580 = vmatpush.bf16.msra.mxu0 %v3985
    %5581 = vmatpush.bf16.msra.mxu0 %v3961
    %5582 = vmatpush.bf16.msra.mxu0 %v3937
    %5583 = vmatpush.bf16.msra.mxu0 %v3913
    %5584 = vmatpush.bf16.msra.mxu0 %v3889
    %5585 = vmatpush.bf16.msra.mxu0 %v3865
    %5586 = vmatmul.bf16.gmra.mxu0 %v202
    %v5587 = vpop.f32.mrf.mxu0
    %v5588 = vadd.f32 %v5575, %v5587
    %v5589 = vpop.f32.mrf.mxu0
    %5590 = vdwg.mxu0
    %5591 = vmatpush.bf16.msra.mxu0 %v3458
    %5592 = vmatpush.bf16.msra.mxu0 %v3434
    %5593 = vmatpush.bf16.msra.mxu0 %v3410
    %5594 = vmatpush.bf16.msra.mxu0 %v3386
    %5595 = vmatpush.bf16.msra.mxu0 %v3362
    %5596 = vmatpush.bf16.msra.mxu0 %v3338
    %5597 = vmatpush.bf16.msra.mxu0 %v3314
    %5598 = vmatpush.bf16.msra.mxu0 %v3290
    %5599 = vmatmul.bf16.gmra.mxu0 %v199
    %v5600 = vpop.f32.mrf.mxu0
    %v5601 = vadd.f32 0.0, %v5600
    %v5602 = vpop.f32.mrf.mxu0
    %5603 = vdwg.mxu0
    %5604 = vmatpush.bf16.msra.mxu0 %v3650
    %5605 = vmatpush.bf16.msra.mxu0 %v3626
    %5606 = vmatpush.bf16.msra.mxu0 %v3602
    %5607 = vmatpush.bf16.msra.mxu0 %v3578
    %5608 = vmatpush.bf16.msra.mxu0 %v3554
    %5609 = vmatpush.bf16.msra.mxu0 %v3530
    %5610 = vmatpush.bf16.msra.mxu0 %v3506
    %5611 = vmatpush.bf16.msra.mxu0 %v3482
    %5612 = vmatmul.bf16.gmra.mxu0 %v200
    %v5613 = vpop.f32.mrf.mxu0
    %v5614 = vadd.f32 %v5601, %v5613
    %v5615 = vpop.f32.mrf.mxu0
    %5616 = vdwg.mxu0
    %5617 = vmatpush.bf16.msra.mxu0 %v3842
    %5618 = vmatpush.bf16.msra.mxu0 %v3818
    %5619 = vmatpush.bf16.msra.mxu0 %v3794
    %5620 = vmatpush.bf16.msra.mxu0 %v3770
    %5621 = vmatpush.bf16.msra.mxu0 %v3746
    %5622 = vmatpush.bf16.msra.mxu0 %v3722
    %5623 = vmatpush.bf16.msra.mxu0 %v3698
    %5624 = vmatpush.bf16.msra.mxu0 %v3674
    %5625 = vmatmul.bf16.gmra.mxu0 %v201
    %v5626 = vpop.f32.mrf.mxu0
    %v5627 = vadd.f32 %v5614, %v5626
    %v5628 = vpop.f32.mrf.mxu0
    %5629 = vdwg.mxu0
    %5630 = vmatpush.bf16.msra.mxu0 %v4034
    %5631 = vmatpush.bf16.msra.mxu0 %v4010
    %5632 = vmatpush.bf16.msra.mxu0 %v3986
    %5633 = vmatpush.bf16.msra.mxu0 %v3962
    %5634 = vmatpush.bf16.msra.mxu0 %v3938
    %5635 = vmatpush.bf16.msra.mxu0 %v3914
    %5636 = vmatpush.bf16.msra.mxu0 %v3890
    %5637 = vmatpush.bf16.msra.mxu0 %v3866
    %5638 = vmatmul.bf16.gmra.mxu0 %v202
    %v5639 = vpop.f32.mrf.mxu0
    %v5640 = vadd.f32 %v5627, %v5639
    %v5641 = vpop.f32.mrf.mxu0
    %5642 = vdwg.mxu0
    %5643 = vmatpush.bf16.msra.mxu0 %v3459
    %5644 = vmatpush.bf16.msra.mxu0 %v3435
    %5645 = vmatpush.bf16.msra.mxu0 %v3411
    %5646 = vmatpush.bf16.msra.mxu0 %v3387
    %5647 = vmatpush.bf16.msra.mxu0 %v3363
    %5648 = vmatpush.bf16.msra.mxu0 %v3339
    %5649 = vmatpush.bf16.msra.mxu0 %v3315
    %5650 = vmatpush.bf16.msra.mxu0 %v3291
    %5651 = vmatmul.bf16.gmra.mxu0 %v199
    %v5652 = vpop.f32.mrf.mxu0
    %v5653 = vadd.f32 0.0, %v5652
    %v5654 = vpop.f32.mrf.mxu0
    %5655 = vdwg.mxu0
    %5656 = vmatpush.bf16.msra.mxu0 %v3651
    %5657 = vmatpush.bf16.msra.mxu0 %v3627
    %5658 = vmatpush.bf16.msra.mxu0 %v3603
    %5659 = vmatpush.bf16.msra.mxu0 %v3579
    %5660 = vmatpush.bf16.msra.mxu0 %v3555
    %5661 = vmatpush.bf16.msra.mxu0 %v3531
    %5662 = vmatpush.bf16.msra.mxu0 %v3507
    %5663 = vmatpush.bf16.msra.mxu0 %v3483
    %5664 = vmatmul.bf16.gmra.mxu0 %v200
    %v5665 = vpop.f32.mrf.mxu0
    %v5666 = vadd.f32 %v5653, %v5665
    %v5667 = vpop.f32.mrf.mxu0
    %5668 = vdwg.mxu0
    %5669 = vmatpush.bf16.msra.mxu0 %v3843
    %5670 = vmatpush.bf16.msra.mxu0 %v3819
    %5671 = vmatpush.bf16.msra.mxu0 %v3795
    %5672 = vmatpush.bf16.msra.mxu0 %v3771
    %5673 = vmatpush.bf16.msra.mxu0 %v3747
    %5674 = vmatpush.bf16.msra.mxu0 %v3723
    %5675 = vmatpush.bf16.msra.mxu0 %v3699
    %5676 = vmatpush.bf16.msra.mxu0 %v3675
    %5677 = vmatmul.bf16.gmra.mxu0 %v201
    %v5678 = vpop.f32.mrf.mxu0
    %v5679 = vadd.f32 %v5666, %v5678
    %v5680 = vpop.f32.mrf.mxu0
    %5681 = vdwg.mxu0
    %5682 = vmatpush.bf16.msra.mxu0 %v4035
    %5683 = vmatpush.bf16.msra.mxu0 %v4011
    %5684 = vmatpush.bf16.msra.mxu0 %v3987
    %5685 = vmatpush.bf16.msra.mxu0 %v3963
    %5686 = vmatpush.bf16.msra.mxu0 %v3939
    %5687 = vmatpush.bf16.msra.mxu0 %v3915
    %5688 = vmatpush.bf16.msra.mxu0 %v3891
    %5689 = vmatpush.bf16.msra.mxu0 %v3867
    %5690 = vmatmul.bf16.gmra.mxu0 %v202
    %v5691 = vpop.f32.mrf.mxu0
    %v5692 = vadd.f32 %v5679, %v5691
    %v5693 = vpop.f32.mrf.mxu0
    %5694 = vdwg.mxu0
    %5695 = vmatpush.bf16.msra.mxu0 %v3460
    %5696 = vmatpush.bf16.msra.mxu0 %v3436
    %5697 = vmatpush.bf16.msra.mxu0 %v3412
    %5698 = vmatpush.bf16.msra.mxu0 %v3388
    %5699 = vmatpush.bf16.msra.mxu0 %v3364
    %5700 = vmatpush.bf16.msra.mxu0 %v3340
    %5701 = vmatpush.bf16.msra.mxu0 %v3316
    %5702 = vmatpush.bf16.msra.mxu0 %v3292
    %5703 = vmatmul.bf16.gmra.mxu0 %v199
    %v5704 = vpop.f32.mrf.mxu0
    %v5705 = vadd.f32 0.0, %v5704
    %v5706 = vpop.f32.mrf.mxu0
    %5707 = vdwg.mxu0
    %5708 = vmatpush.bf16.msra.mxu0 %v3652
    %5709 = vmatpush.bf16.msra.mxu0 %v3628
    %5710 = vmatpush.bf16.msra.mxu0 %v3604
    %5711 = vmatpush.bf16.msra.mxu0 %v3580
    %5712 = vmatpush.bf16.msra.mxu0 %v3556
    %5713 = vmatpush.bf16.msra.mxu0 %v3532
    %5714 = vmatpush.bf16.msra.mxu0 %v3508
    %5715 = vmatpush.bf16.msra.mxu0 %v3484
    %5716 = vmatmul.bf16.gmra.mxu0 %v200
    %v5717 = vpop.f32.mrf.mxu0
    %v5718 = vadd.f32 %v5705, %v5717
    %v5719 = vpop.f32.mrf.mxu0
    %5720 = vdwg.mxu0
    %5721 = vmatpush.bf16.msra.mxu0 %v3844
    %5722 = vmatpush.bf16.msra.mxu0 %v3820
    %5723 = vmatpush.bf16.msra.mxu0 %v3796
    %5724 = vmatpush.bf16.msra.mxu0 %v3772
    %5725 = vmatpush.bf16.msra.mxu0 %v3748
    %5726 = vmatpush.bf16.msra.mxu0 %v3724
    %5727 = vmatpush.bf16.msra.mxu0 %v3700
    %5728 = vmatpush.bf16.msra.mxu0 %v3676
    %5729 = vmatmul.bf16.gmra.mxu0 %v201
    %v5730 = vpop.f32.mrf.mxu0
    %v5731 = vadd.f32 %v5718, %v5730
    %v5732 = vpop.f32.mrf.mxu0
    %5733 = vdwg.mxu0
    %5734 = vmatpush.bf16.msra.mxu0 %v4036
    %5735 = vmatpush.bf16.msra.mxu0 %v4012
    %5736 = vmatpush.bf16.msra.mxu0 %v3988
    %5737 = vmatpush.bf16.msra.mxu0 %v3964
    %5738 = vmatpush.bf16.msra.mxu0 %v3940
    %5739 = vmatpush.bf16.msra.mxu0 %v3916
    %5740 = vmatpush.bf16.msra.mxu0 %v3892
    %5741 = vmatpush.bf16.msra.mxu0 %v3868
    %5742 = vmatmul.bf16.gmra.mxu0 %v202
    %v5743 = vpop.f32.mrf.mxu0
    %v5744 = vadd.f32 %v5731, %v5743
    %v5745 = vpop.f32.mrf.mxu0
    %5746 = vdwg.mxu0
    %5747 = vmatpush.bf16.msra.mxu0 %v3461
    %5748 = vmatpush.bf16.msra.mxu0 %v3437
    %5749 = vmatpush.bf16.msra.mxu0 %v3413
    %5750 = vmatpush.bf16.msra.mxu0 %v3389
    %5751 = vmatpush.bf16.msra.mxu0 %v3365
    %5752 = vmatpush.bf16.msra.mxu0 %v3341
    %5753 = vmatpush.bf16.msra.mxu0 %v3317
    %5754 = vmatpush.bf16.msra.mxu0 %v3293
    %5755 = vmatmul.bf16.gmra.mxu0 %v199
    %v5756 = vpop.f32.mrf.mxu0
    %v5757 = vadd.f32 0.0, %v5756
    %v5758 = vpop.f32.mrf.mxu0
    %5759 = vdwg.mxu0
    %5760 = vmatpush.bf16.msra.mxu0 %v3653
    %5761 = vmatpush.bf16.msra.mxu0 %v3629
    %5762 = vmatpush.bf16.msra.mxu0 %v3605
    %5763 = vmatpush.bf16.msra.mxu0 %v3581
    %5764 = vmatpush.bf16.msra.mxu0 %v3557
    %5765 = vmatpush.bf16.msra.mxu0 %v3533
    %5766 = vmatpush.bf16.msra.mxu0 %v3509
    %5767 = vmatpush.bf16.msra.mxu0 %v3485
    %5768 = vmatmul.bf16.gmra.mxu0 %v200
    %v5769 = vpop.f32.mrf.mxu0
    %v5770 = vadd.f32 %v5757, %v5769
    %v5771 = vpop.f32.mrf.mxu0
    %5772 = vdwg.mxu0
    %5773 = vmatpush.bf16.msra.mxu0 %v3845
    %5774 = vmatpush.bf16.msra.mxu0 %v3821
    %5775 = vmatpush.bf16.msra.mxu0 %v3797
    %5776 = vmatpush.bf16.msra.mxu0 %v3773
    %5777 = vmatpush.bf16.msra.mxu0 %v3749
    %5778 = vmatpush.bf16.msra.mxu0 %v3725
    %5779 = vmatpush.bf16.msra.mxu0 %v3701
    %5780 = vmatpush.bf16.msra.mxu0 %v3677
    %5781 = vmatmul.bf16.gmra.mxu0 %v201
    %v5782 = vpop.f32.mrf.mxu0
    %v5783 = vadd.f32 %v5770, %v5782
    %v5784 = vpop.f32.mrf.mxu0
    %5785 = vdwg.mxu0
    %5786 = vmatpush.bf16.msra.mxu0 %v4037
    %5787 = vmatpush.bf16.msra.mxu0 %v4013
    %5788 = vmatpush.bf16.msra.mxu0 %v3989
    %5789 = vmatpush.bf16.msra.mxu0 %v3965
    %5790 = vmatpush.bf16.msra.mxu0 %v3941
    %5791 = vmatpush.bf16.msra.mxu0 %v3917
    %5792 = vmatpush.bf16.msra.mxu0 %v3893
    %5793 = vmatpush.bf16.msra.mxu0 %v3869
    %5794 = vmatmul.bf16.gmra.mxu0 %v202
    %v5795 = vpop.f32.mrf.mxu0
    %v5796 = vadd.f32 %v5783, %v5795
    %v5797 = vpop.f32.mrf.mxu0
    %5798 = vdwg.mxu0
    %5799 = vmatpush.bf16.msra.mxu0 %v3462
    %5800 = vmatpush.bf16.msra.mxu0 %v3438
    %5801 = vmatpush.bf16.msra.mxu0 %v3414
    %5802 = vmatpush.bf16.msra.mxu0 %v3390
    %5803 = vmatpush.bf16.msra.mxu0 %v3366
    %5804 = vmatpush.bf16.msra.mxu0 %v3342
    %5805 = vmatpush.bf16.msra.mxu0 %v3318
    %5806 = vmatpush.bf16.msra.mxu0 %v3294
    %5807 = vmatmul.bf16.gmra.mxu0 %v199
    %v5808 = vpop.f32.mrf.mxu0
    %v5809 = vadd.f32 0.0, %v5808
    %v5810 = vpop.f32.mrf.mxu0
    %5811 = vdwg.mxu0
    %5812 = vmatpush.bf16.msra.mxu0 %v3654
    %5813 = vmatpush.bf16.msra.mxu0 %v3630
    %5814 = vmatpush.bf16.msra.mxu0 %v3606
    %5815 = vmatpush.bf16.msra.mxu0 %v3582
    %5816 = vmatpush.bf16.msra.mxu0 %v3558
    %5817 = vmatpush.bf16.msra.mxu0 %v3534
    %5818 = vmatpush.bf16.msra.mxu0 %v3510
    %5819 = vmatpush.bf16.msra.mxu0 %v3486
    %5820 = vmatmul.bf16.gmra.mxu0 %v200
    %v5821 = vpop.f32.mrf.mxu0
    %v5822 = vadd.f32 %v5809, %v5821
    %v5823 = vpop.f32.mrf.mxu0
    %5824 = vdwg.mxu0
    %5825 = vmatpush.bf16.msra.mxu0 %v3846
    %5826 = vmatpush.bf16.msra.mxu0 %v3822
    %5827 = vmatpush.bf16.msra.mxu0 %v3798
    %5828 = vmatpush.bf16.msra.mxu0 %v3774
    %5829 = vmatpush.bf16.msra.mxu0 %v3750
    %5830 = vmatpush.bf16.msra.mxu0 %v3726
    %5831 = vmatpush.bf16.msra.mxu0 %v3702
    %5832 = vmatpush.bf16.msra.mxu0 %v3678
    %5833 = vmatmul.bf16.gmra.mxu0 %v201
    %v5834 = vpop.f32.mrf.mxu0
    %v5835 = vadd.f32 %v5822, %v5834
    %v5836 = vpop.f32.mrf.mxu0
    %5837 = vdwg.mxu0
    %5838 = vmatpush.bf16.msra.mxu0 %v4038
    %5839 = vmatpush.bf16.msra.mxu0 %v4014
    %5840 = vmatpush.bf16.msra.mxu0 %v3990
    %5841 = vmatpush.bf16.msra.mxu0 %v3966
    %5842 = vmatpush.bf16.msra.mxu0 %v3942
    %5843 = vmatpush.bf16.msra.mxu0 %v3918
    %5844 = vmatpush.bf16.msra.mxu0 %v3894
    %5845 = vmatpush.bf16.msra.mxu0 %v3870
    %5846 = vmatmul.bf16.gmra.mxu0 %v202
    %v5847 = vpop.f32.mrf.mxu0
    %v5848 = vadd.f32 %v5835, %v5847
    %v5849 = vpop.f32.mrf.mxu0
    %5850 = vdwg.mxu0
    %5851 = vmatpush.bf16.msra.mxu0 %v3463
    %5852 = vmatpush.bf16.msra.mxu0 %v3439
    %5853 = vmatpush.bf16.msra.mxu0 %v3415
    %5854 = vmatpush.bf16.msra.mxu0 %v3391
    %5855 = vmatpush.bf16.msra.mxu0 %v3367
    %5856 = vmatpush.bf16.msra.mxu0 %v3343
    %5857 = vmatpush.bf16.msra.mxu0 %v3319
    %5858 = vmatpush.bf16.msra.mxu0 %v3295
    %5859 = vmatmul.bf16.gmra.mxu0 %v199
    %v5860 = vpop.f32.mrf.mxu0
    %v5861 = vadd.f32 0.0, %v5860
    %v5862 = vpop.f32.mrf.mxu0
    %5863 = vdwg.mxu0
    %5864 = vmatpush.bf16.msra.mxu0 %v3655
    %5865 = vmatpush.bf16.msra.mxu0 %v3631
    %5866 = vmatpush.bf16.msra.mxu0 %v3607
    %5867 = vmatpush.bf16.msra.mxu0 %v3583
    %5868 = vmatpush.bf16.msra.mxu0 %v3559
    %5869 = vmatpush.bf16.msra.mxu0 %v3535
    %5870 = vmatpush.bf16.msra.mxu0 %v3511
    %5871 = vmatpush.bf16.msra.mxu0 %v3487
    %5872 = vmatmul.bf16.gmra.mxu0 %v200
    %v5873 = vpop.f32.mrf.mxu0
    %v5874 = vadd.f32 %v5861, %v5873
    %v5875 = vpop.f32.mrf.mxu0
    %5876 = vdwg.mxu0
    %5877 = vmatpush.bf16.msra.mxu0 %v3847
    %5878 = vmatpush.bf16.msra.mxu0 %v3823
    %5879 = vmatpush.bf16.msra.mxu0 %v3799
    %5880 = vmatpush.bf16.msra.mxu0 %v3775
    %5881 = vmatpush.bf16.msra.mxu0 %v3751
    %5882 = vmatpush.bf16.msra.mxu0 %v3727
    %5883 = vmatpush.bf16.msra.mxu0 %v3703
    %5884 = vmatpush.bf16.msra.mxu0 %v3679
    %5885 = vmatmul.bf16.gmra.mxu0 %v201
    %v5886 = vpop.f32.mrf.mxu0
    %v5887 = vadd.f32 %v5874, %v5886
    %v5888 = vpop.f32.mrf.mxu0
    %5889 = vdwg.mxu0
    %5890 = vmatpush.bf16.msra.mxu0 %v4039
    %5891 = vmatpush.bf16.msra.mxu0 %v4015
    %5892 = vmatpush.bf16.msra.mxu0 %v3991
    %5893 = vmatpush.bf16.msra.mxu0 %v3967
    %5894 = vmatpush.bf16.msra.mxu0 %v3943
    %5895 = vmatpush.bf16.msra.mxu0 %v3919
    %5896 = vmatpush.bf16.msra.mxu0 %v3895
    %5897 = vmatpush.bf16.msra.mxu0 %v3871
    %5898 = vmatmul.bf16.gmra.mxu0 %v202
    %v5899 = vpop.f32.mrf.mxu0
    %v5900 = vadd.f32 %v5887, %v5899
    %v5901 = vpop.f32.mrf.mxu0
    %5902 = vdwg.mxu0
    %5903 = vmatpush.bf16.msra.mxu0 %v3464
    %5904 = vmatpush.bf16.msra.mxu0 %v3440
    %5905 = vmatpush.bf16.msra.mxu0 %v3416
    %5906 = vmatpush.bf16.msra.mxu0 %v3392
    %5907 = vmatpush.bf16.msra.mxu0 %v3368
    %5908 = vmatpush.bf16.msra.mxu0 %v3344
    %5909 = vmatpush.bf16.msra.mxu0 %v3320
    %5910 = vmatpush.bf16.msra.mxu0 %v3296
    %5911 = vmatmul.bf16.gmra.mxu0 %v199
    %v5912 = vpop.f32.mrf.mxu0
    %v5913 = vadd.f32 0.0, %v5912
    %v5914 = vpop.f32.mrf.mxu0
    %5915 = vdwg.mxu0
    %5916 = vmatpush.bf16.msra.mxu0 %v3656
    %5917 = vmatpush.bf16.msra.mxu0 %v3632
    %5918 = vmatpush.bf16.msra.mxu0 %v3608
    %5919 = vmatpush.bf16.msra.mxu0 %v3584
    %5920 = vmatpush.bf16.msra.mxu0 %v3560
    %5921 = vmatpush.bf16.msra.mxu0 %v3536
    %5922 = vmatpush.bf16.msra.mxu0 %v3512
    %5923 = vmatpush.bf16.msra.mxu0 %v3488
    %5924 = vmatmul.bf16.gmra.mxu0 %v200
    %v5925 = vpop.f32.mrf.mxu0
    %v5926 = vadd.f32 %v5913, %v5925
    %v5927 = vpop.f32.mrf.mxu0
    %5928 = vdwg.mxu0
    %5929 = vmatpush.bf16.msra.mxu0 %v3848
    %5930 = vmatpush.bf16.msra.mxu0 %v3824
    %5931 = vmatpush.bf16.msra.mxu0 %v3800
    %5932 = vmatpush.bf16.msra.mxu0 %v3776
    %5933 = vmatpush.bf16.msra.mxu0 %v3752
    %5934 = vmatpush.bf16.msra.mxu0 %v3728
    %5935 = vmatpush.bf16.msra.mxu0 %v3704
    %5936 = vmatpush.bf16.msra.mxu0 %v3680
    %5937 = vmatmul.bf16.gmra.mxu0 %v201
    %v5938 = vpop.f32.mrf.mxu0
    %v5939 = vadd.f32 %v5926, %v5938
    %v5940 = vpop.f32.mrf.mxu0
    %5941 = vdwg.mxu0
    %5942 = vmatpush.bf16.msra.mxu0 %v4040
    %5943 = vmatpush.bf16.msra.mxu0 %v4016
    %5944 = vmatpush.bf16.msra.mxu0 %v3992
    %5945 = vmatpush.bf16.msra.mxu0 %v3968
    %5946 = vmatpush.bf16.msra.mxu0 %v3944
    %5947 = vmatpush.bf16.msra.mxu0 %v3920
    %5948 = vmatpush.bf16.msra.mxu0 %v3896
    %5949 = vmatpush.bf16.msra.mxu0 %v3872
    %5950 = vmatmul.bf16.gmra.mxu0 %v202
    %v5951 = vpop.f32.mrf.mxu0
    %v5952 = vadd.f32 %v5939, %v5951
    %v5953 = vpop.f32.mrf.mxu0
    %5954 = vdwg.mxu0
    %5955 = vmatpush.bf16.msra.mxu0 %v3465
    %5956 = vmatpush.bf16.msra.mxu0 %v3441
    %5957 = vmatpush.bf16.msra.mxu0 %v3417
    %5958 = vmatpush.bf16.msra.mxu0 %v3393
    %5959 = vmatpush.bf16.msra.mxu0 %v3369
    %5960 = vmatpush.bf16.msra.mxu0 %v3345
    %5961 = vmatpush.bf16.msra.mxu0 %v3321
    %5962 = vmatpush.bf16.msra.mxu0 %v3297
    %5963 = vmatmul.bf16.gmra.mxu0 %v199
    %v5964 = vpop.f32.mrf.mxu0
    %v5965 = vadd.f32 0.0, %v5964
    %v5966 = vpop.f32.mrf.mxu0
    %5967 = vdwg.mxu0
    %5968 = vmatpush.bf16.msra.mxu0 %v3657
    %5969 = vmatpush.bf16.msra.mxu0 %v3633
    %5970 = vmatpush.bf16.msra.mxu0 %v3609
    %5971 = vmatpush.bf16.msra.mxu0 %v3585
    %5972 = vmatpush.bf16.msra.mxu0 %v3561
    %5973 = vmatpush.bf16.msra.mxu0 %v3537
    %5974 = vmatpush.bf16.msra.mxu0 %v3513
    %5975 = vmatpush.bf16.msra.mxu0 %v3489
    %5976 = vmatmul.bf16.gmra.mxu0 %v200
    %v5977 = vpop.f32.mrf.mxu0
    %v5978 = vadd.f32 %v5965, %v5977
    %v5979 = vpop.f32.mrf.mxu0
    %5980 = vdwg.mxu0
    %5981 = vmatpush.bf16.msra.mxu0 %v3849
    %5982 = vmatpush.bf16.msra.mxu0 %v3825
    %5983 = vmatpush.bf16.msra.mxu0 %v3801
    %5984 = vmatpush.bf16.msra.mxu0 %v3777
    %5985 = vmatpush.bf16.msra.mxu0 %v3753
    %5986 = vmatpush.bf16.msra.mxu0 %v3729
    %5987 = vmatpush.bf16.msra.mxu0 %v3705
    %5988 = vmatpush.bf16.msra.mxu0 %v3681
    %5989 = vmatmul.bf16.gmra.mxu0 %v201
    %v5990 = vpop.f32.mrf.mxu0
    %v5991 = vadd.f32 %v5978, %v5990
    %v5992 = vpop.f32.mrf.mxu0
    %5993 = vdwg.mxu0
    %5994 = vmatpush.bf16.msra.mxu0 %v4041
    %5995 = vmatpush.bf16.msra.mxu0 %v4017
    %5996 = vmatpush.bf16.msra.mxu0 %v3993
    %5997 = vmatpush.bf16.msra.mxu0 %v3969
    %5998 = vmatpush.bf16.msra.mxu0 %v3945
    %5999 = vmatpush.bf16.msra.mxu0 %v3921
    %6000 = vmatpush.bf16.msra.mxu0 %v3897
    %6001 = vmatpush.bf16.msra.mxu0 %v3873
    %6002 = vmatmul.bf16.gmra.mxu0 %v202
    %v6003 = vpop.f32.mrf.mxu0
    %v6004 = vadd.f32 %v5991, %v6003
    %v6005 = vpop.f32.mrf.mxu0
    %6006 = vdwg.mxu0
    %6007 = vmatpush.bf16.msra.mxu0 %v3466
    %6008 = vmatpush.bf16.msra.mxu0 %v3442
    %6009 = vmatpush.bf16.msra.mxu0 %v3418
    %6010 = vmatpush.bf16.msra.mxu0 %v3394
    %6011 = vmatpush.bf16.msra.mxu0 %v3370
    %6012 = vmatpush.bf16.msra.mxu0 %v3346
    %6013 = vmatpush.bf16.msra.mxu0 %v3322
    %6014 = vmatpush.bf16.msra.mxu0 %v3298
    %6015 = vmatmul.bf16.gmra.mxu0 %v199
    %v6016 = vpop.f32.mrf.mxu0
    %v6017 = vadd.f32 0.0, %v6016
    %v6018 = vpop.f32.mrf.mxu0
    %6019 = vdwg.mxu0
    %6020 = vmatpush.bf16.msra.mxu0 %v3658
    %6021 = vmatpush.bf16.msra.mxu0 %v3634
    %6022 = vmatpush.bf16.msra.mxu0 %v3610
    %6023 = vmatpush.bf16.msra.mxu0 %v3586
    %6024 = vmatpush.bf16.msra.mxu0 %v3562
    %6025 = vmatpush.bf16.msra.mxu0 %v3538
    %6026 = vmatpush.bf16.msra.mxu0 %v3514
    %6027 = vmatpush.bf16.msra.mxu0 %v3490
    %6028 = vmatmul.bf16.gmra.mxu0 %v200
    %v6029 = vpop.f32.mrf.mxu0
    %v6030 = vadd.f32 %v6017, %v6029
    %v6031 = vpop.f32.mrf.mxu0
    %6032 = vdwg.mxu0
    %6033 = vmatpush.bf16.msra.mxu0 %v3850
    %6034 = vmatpush.bf16.msra.mxu0 %v3826
    %6035 = vmatpush.bf16.msra.mxu0 %v3802
    %6036 = vmatpush.bf16.msra.mxu0 %v3778
    %6037 = vmatpush.bf16.msra.mxu0 %v3754
    %6038 = vmatpush.bf16.msra.mxu0 %v3730
    %6039 = vmatpush.bf16.msra.mxu0 %v3706
    %6040 = vmatpush.bf16.msra.mxu0 %v3682
    %6041 = vmatmul.bf16.gmra.mxu0 %v201
    %v6042 = vpop.f32.mrf.mxu0
    %v6043 = vadd.f32 %v6030, %v6042
    %v6044 = vpop.f32.mrf.mxu0
    %6045 = vdwg.mxu0
    %6046 = vmatpush.bf16.msra.mxu0 %v4042
    %6047 = vmatpush.bf16.msra.mxu0 %v4018
    %6048 = vmatpush.bf16.msra.mxu0 %v3994
    %6049 = vmatpush.bf16.msra.mxu0 %v3970
    %6050 = vmatpush.bf16.msra.mxu0 %v3946
    %6051 = vmatpush.bf16.msra.mxu0 %v3922
    %6052 = vmatpush.bf16.msra.mxu0 %v3898
    %6053 = vmatpush.bf16.msra.mxu0 %v3874
    %6054 = vmatmul.bf16.gmra.mxu0 %v202
    %v6055 = vpop.f32.mrf.mxu0
    %v6056 = vadd.f32 %v6043, %v6055
    %v6057 = vpop.f32.mrf.mxu0
    %6058 = vdwg.mxu0
    %v6063 = vrot.slane %v4912, 7
    %v6064 = vrot.slane %v4964, 6
    %v6065 = vrot.slane %v5016, 5
    %v6066 = vsel %vm130, %v4860, %v6063
    %vm6067 = vcmask 1042434
    %v6068 = vsel %vm6067, %v6064, %v6065
    %vm6069 = vcmask 1041408
    %v6070 = vsel %vm6069, %v6066, %v6068
    %v6072 = vlaneseq
    %vm6073 = vcmp.ge.s32.totalorder %v6072, 0
    %vm6074 = vcmp.lt.s32.totalorder %v6072, 512
    %vm6075 = vmand %vm6073, %vm6074
    %6076 = vst.msk [vmem:[#allocation11] ss:$8 sm:$0xf] %vm6075, %v6070
    %6077 = vst.msk [vmem:[#allocation11] ss:$8 sm:$0x0] %vm6075, %v6070
    %v6082 = vrot.slane %v5120, 7
    %v6083 = vrot.slane %v5172, 6
    %v6084 = vrot.slane %v5224, 5
    %v6085 = vsel %vm130, %v5068, %v6082
    %v6086 = vsel %vm6067, %v6083, %v6084
    %v6087 = vsel %vm6069, %v6085, %v6086
    %s6089 = scalar_lea.vmem [#allocation11], 1
    %6090 = vst.msk [vmem:[%s6089] ss:$8 sm:$0xf] %vm6075, %v6087
    %6091 = vst.msk [vmem:[%s6089] ss:$8 sm:$0x0] %vm6075, %v6087
    %v6096 = vrot.slane %v5328, 7
    %v6097 = vrot.slane %v5380, 6
    %v6098 = vrot.slane %v5432, 5
    %v6099 = vsel %vm130, %v5276, %v6096
    %v6100 = vsel %vm6067, %v6097, %v6098
    %v6101 = vsel %vm6069, %v6099, %v6100
    %s6103 = scalar_lea.vmem [#allocation11], 2
    %6104 = vst.msk [vmem:[%s6103] ss:$8 sm:$0xf] %vm6075, %v6101
    %6105 = vst.msk [vmem:[%s6103] ss:$8 sm:$0x0] %vm6075, %v6101
    %v6110 = vrot.slane %v5536, 7
    %v6111 = vrot.slane %v5588, 6
    %v6112 = vrot.slane %v5640, 5
    %v6113 = vsel %vm130, %v5484, %v6110
    %v6114 = vsel %vm6067, %v6111, %v6112
    %v6115 = vsel %vm6069, %v6113, %v6114
    %s6117 = scalar_lea.vmem [#allocation11], 3
    %6118 = vst.msk [vmem:[%s6117] ss:$8 sm:$0xf] %vm6075, %v6115
    %6119 = vst.msk [vmem:[%s6117] ss:$8 sm:$0x0] %vm6075, %v6115
    %v6124 = vrot.slane %v5744, 7
    %v6125 = vrot.slane %v5796, 6
    %v6126 = vrot.slane %v5848, 5
    %v6127 = vsel %vm130, %v5692, %v6124
    %v6128 = vsel %vm6067, %v6125, %v6126
    %v6129 = vsel %vm6069, %v6127, %v6128
    %s6131 = scalar_lea.vmem [#allocation11], 4
    %6132 = vst.msk [vmem:[%s6131] ss:$8 sm:$0xf] %vm6075, %v6129
    %6133 = vst.msk [vmem:[%s6131] ss:$8 sm:$0x0] %vm6075, %v6129
    %v6138 = vrot.slane %v5952, 7
    %v6139 = vrot.slane %v6004, 6
    %v6140 = vrot.slane %v6056, 5
    %v6141 = vsel %vm130, %v5900, %v6138
    %v6142 = vsel %vm6067, %v6139, %v6140
    %v6143 = vsel %vm6069, %v6141, %v6142
    %s6145 = scalar_lea.vmem [#allocation11], 5
    %6146 = vst.msk [vmem:[%s6145] ss:$8 sm:$0xf] %vm6075, %v6143
    %6147 = vst.msk [vmem:[%s6145] ss:$8 sm:$0x0] %vm6075, %v6143
    %v6148 = vld [vmem:[#allocation11] sm:$0x3f]
    %v6149 = vld [vmem:[#allocation11 + $0x8] sm:$0x3f]
    %v6150 = vld [vmem:[#allocation11 + $0x10] sm:$0x3f]
    %v6151 = vld [vmem:[#allocation11 + $0x18] sm:$0x3f]
    %v6152 = vld [vmem:[#allocation10] sm:$0x3f]
    %v6153 = vld [vmem:[#allocation10 + $0x8] sm:$0x3f]
    %v6154 = vld [vmem:[#allocation10 + $0x10] sm:$0x3f]
    %v6155 = vld [vmem:[#allocation10 + $0x18] sm:$0x3f]
    %v6156 = vadd.f32 %v6148, %v6152
    %v6157 = vadd.f32 %v6149, %v6153
    %v6158 = vadd.f32 %v6150, %v6154
    %v6159 = vadd.f32 %v6151, %v6155
    %vm6160 = vcmask 1045504
    %v6161 = vsel %vm6160, %v6156, -inf
    %v6162 = vsel %vm6160, %v6157, -inf
    %v6163 = vsel %vm6160, %v6158, -inf
    %v6164 = vsel %vm6160, %v6159, -inf
    %v6165 = vmax.f32 %v6161, %v6162
    %v6166 = vmax.f32 %v6163, %v6164
    %v6167 = vmax.f32 %v6165, %v6166
    %6168 = vmax.xlane.f32.xlu0 %v6167
    %v6169 = vpop.xlane.xlu0 %6168
    %v6170 = vsub.f32 %v6156, %v6169
    %v6171 = vsub.f32 %v6157, %v6169
    %v6172 = vsub.f32 %v6158, %v6169
    %v6173 = vsub.f32 %v6159, %v6169
    %v6174 = vmul.f32 %v6170, 1.442695
    %v6175 = vpow.pop %v6174
    %v6176 = vmul.f32 %v6171, 1.442695
    %v6177 = vpow.pop %v6176
    %v6178 = vmul.f32 %v6172, 1.442695
    %v6179 = vpow.pop %v6178
    %v6180 = vmul.f32 %v6173, 1.442695
    %v6181 = vpow.pop %v6180
    %v6182 = vsel %vm6160, %v6175, 0.0
    %v6183 = vsel %vm6160, %v6177, 0.0
    %v6184 = vadd.f32 %v6182, %v6183
    %v6185 = vsel %vm6160, %v6179, 0.0
    %v6186 = vadd.f32 %v6184, %v6185
    %v6187 = vsel %vm6160, %v6181, 0.0
    %v6188 = vadd.f32 %v6186, %v6187
    %6189 = vadd.xlane.f32.xlu0 %v6188
    %v6190 = vpop.xlane.xlu0 %6189
    %v6191 = vrcp.pop %v6190
    %v6192 = vmul.f32 %v6190, %v6191
    %v6193 = vsub.f32 1.0, %v6192
    %v6194 = vmul.f32 %v6191, %v6193
    %v6195 = vadd.f32 %v6191, %v6194
    %vm6196 = vweird.f32 %v6190
    %vm6197 = vweird.f32 %v6191
    %vm6198 = vmor %vm6196, %vm6197
    %v6199 = vsel %vm6198, %v6191, %v6195
    %v6200 = vand.u32 2147483647, %v6190
    %vm6201 = vcmp.eq.f32.partialorder %v6200, 8.507059e+37
    %v6202 = vand.u32 %v6190, 2147483648
    %v6203 = vor.u32 1.1754944e-38, %v6202
    %v6204 = vsel %vm6201, %v6203, %v6199
    %v6205 = vmul.f32 %v6175, %v6204
    %v6206 = vmul.f32 %v6177, %v6204
    %v6207 = vmul.f32 %v6179, %v6204
    %v6208 = vmul.f32 %v6181, %v6204
    %6209 = vst [vmem:[#allocation11] sm:$0x3f] %v6205
    %6210 = vst [vmem:[#allocation11 + $0x8] sm:$0x3f] %v6206
    %6211 = vst [vmem:[#allocation11 + $0x10] sm:$0x3f] %v6207
    %6212 = vst [vmem:[#allocation11 + $0x18] sm:$0x3f] %v6208
    // Predicated region
    $region42: #{rf_discrete_forward.1} parent=1 // pred_check
      _
    $region43: #{rf_discrete_forward.1} parent=1 // pred_check_branch
      %6214 = sbr.rel (0) target = $region45
    $region44: #{rf_discrete_forward.1} parent=1 // pred_region
      %6216 = vsyncadd [#allocation4], 0
      %s6218 = sshll.u32 [#allocation11], 4
      %s6219 = int_to_ptr.vmem [resolvable:$true] %s6218
      %s6220 = sshll.u32 %s5, 4
      %s6221 = int_to_ptr.hbm [resolvable:$true] %s6220
      %6223 = dma.vmem_to_hbm [thread:$0]  %s6219, 512, %s6221, [#allocation4]
    $region45: #{rf_discrete_forward.1} parent=1 // pred_fallthru
      _
    // Predicated region
    $region46: #{rf_discrete_forward.1} parent=1 // pred_check
      _
    $region47: #{rf_discrete_forward.1} parent=1 // pred_check_branch
      %6225 = sbr.rel (0) target = $region49
    $region48: #{rf_discrete_forward.1} parent=1 // pred_region
      %6227 = dma.done [#allocation4], 512
    $region49: #{rf_discrete_forward.1} parent=1 // pred_fallthru
      _
    %6228 = vsyncpa [#allocation3], 1
    %6229 = vsyncpa [#allocation6], 1
    %6230 = vsyncpa [#allocation9], 1
    %6231 = vsyncpa [#allocation4], 1

</llo_original>
